<compile_context>
chip_gen: v7x
topology: tpu7x:2x2x1
jax: 0.10.0
libtpu: 0.0.40
codegen_flags: <defaults>
</compile_context>

<pallas_src>
import functools

import jax
import jax.numpy as jnp
from jax.experimental import pallas as pl
from jax.experimental.pallas import tpu as pltpu


def _textcnn_kernel(filter_sizes, num_filters,
                    emb_ref, wall_ref, bconv_ref, wl_ref, bl_ref, out_ref):
    NF = num_filters
    TB, L, E = emb_ref.shape
    R = TB * L

    emb2d = emb_ref[...].reshape(R, E)                        # (R, E) bf16
    bconv = bconv_ref[...]                                    # (1, n_f*NF) f32
    t_idx = jax.lax.broadcasted_iota(jnp.int32, (L, NF), 0)   # time index, hoisted

    feats = []
    off = 0
    for fi, k in enumerate(filter_sizes):
        T = L - k + 1
        # One MXU matmul per filter size (N = k*NF >= 2*NF lanes) so only a
        # (R, k*NF) f32 slab is live at a time (cuts peak VMEM ~2-3x vs the
        # fully consolidated projection, letting TILE_B be much larger).
        proj = jnp.dot(emb2d, wall_ref[:, off:off + k * NF],
                       preferred_element_type=jnp.float32)    # (R, k*NF) f32
        off += k * NF

        # scores[r] = sum_j proj[r + j, tap-j slab]: shift-add via sublane
        # rotation (XLU slot, hides under the MXU). Rows that wrap across
        # batch/sequence boundaries all have t >= L - j >= T and are masked
        # out below (safe only because masking happens AFTER ReLU >= 0).
        scores = proj[:, 0:NF]
        for j in range(1, k):
            scores = scores + pltpu.roll(proj[:, j * NF:(j + 1) * NF],
                                         shift=R - j, axis=0)

        scores = scores.reshape(TB, L, NF)
        bias_k = bconv[:, fi * NF:(fi + 1) * NF]              # (1, NF)
        scores = jnp.maximum(scores + bias_k[:, None, :], 0.0)  # ReLU(conv + b)
        scores = jnp.where((t_idx < T)[None, :, :], scores, 0.0)
        feats.append(jnp.max(scores, axis=1))                 # (TB, NF)

    # Concat pooled features, then ONE matmul against the 128-padded linear
    # weight (lane-dense output store; wrapper slices [:, :C] afterwards).
    feat = jnp.concatenate(feats, axis=-1).astype(wl_ref.dtype)   # (TB, n_f*NF)
    out_ref[...] = (jnp.dot(feat, wl_ref[...], preferred_element_type=jnp.float32)
                    + bl_ref[...])


def pack_params(params, filter_sizes=(2, 3, 4)):
    """One-time packing: bf16 table, packed conv taps, padded linear weights."""
    E = params['embedding'].shape[1]
    NF = params[f'conv{filter_sizes[0]}_w'].shape[-1]
    C = params['lin_b'].shape[-1]
    C_pad = ((C + 127) // 128) * 128
    # Slab for (filter k, tap j) lives at columns [off_k + j*NF, off_k + (j+1)*NF).
    w_all = jnp.concatenate(
        [jnp.transpose(params[f'conv{k}_w'], (1, 0, 2)).reshape(E, k * NF)
         for k in filter_sizes], axis=1).astype(jnp.bfloat16)
    return {
        'emb_table': params['embedding'].astype(jnp.bfloat16),  # pre-cast once
        'w_all': w_all,
        'b_conv': jnp.concatenate([params[f'conv{k}_b'] for k in filter_sizes],
                                  axis=1),
        'wl': jnp.pad(params['lin_w'], ((0, 0), (0, C_pad - C))).astype(jnp.bfloat16),
        'bl': jnp.pad(params['lin_b'], ((0, 0), (0, C_pad - C))),
    }


def _choose_tile_b(B, L, E, NF, filter_sizes, C_pad, act_budget_bytes):
    """Largest multiple-of-8 batch tile (<=128) fitting the activation budget,
    preferring >=4 grid steps (>=2 per TensorCore on v7x) when B allows."""
    kmax = max(filter_sizes)

    def act_bytes(tb):
        r = tb * L
        return (2 * tb * L * E * 2        # bf16 emb tile, double-buffered
                + r * kmax * NF * 4       # largest live per-filter f32 slab
                + 2 * r * NF * 4          # scores / shifted-slab temporaries
                + 2 * tb * C_pad * 4)     # f32 output tile, double-buffered

    cands = [tb for tb in range(8, min(B, 128) + 1, 8)
             if B % tb == 0 and act_bytes(tb) <= act_budget_bytes]
    if not cands:
        return B, act_bytes(B)            # tiny/odd batch: single step
    for min_steps in (4, 2, 1):
        ok = [tb for tb in cands if B // tb >= min_steps]
        if ok:
            tb = max(ok)
            return tb, act_bytes(tb)
    tb = max(cands)
    return tb, act_bytes(tb)


def textcnn_forward(input_ids, packed, *, filter_sizes=(2, 3, 4), num_classes=10):
    # Embedding gather stays in XLA (see module TODO); the table is already
    # bf16 so the gather moves half the bytes of the f32 version.
    emb = jnp.take(packed['emb_table'], input_ids, axis=0)     # (B, L, E) bf16
    B, L, E = emb.shape
    w_all, b_conv, wl, bl = packed['w_all'], packed['b_conv'], packed['wl'], packed['bl']
    n_f = len(filter_sizes)
    NF = b_conv.shape[1] // n_f
    C_pad = wl.shape[1]
    W_total = w_all.shape[1]

    # VMEM-budgeted batch tile (~24 MiB activations keeps total well under
    # v7x's 64 MiB physical VMEM even with resident weights + double buffers).
    ACT_BUDGET = 24 * 1024 * 1024
    TILE_B, act_bytes = _choose_tile_b(B, L, E, NF, filter_sizes, C_pad, ACT_BUDGET)
    grid = (B // TILE_B,)

    weight_bytes = (w_all.size * 2 + b_conv.size * 4 + wl.size * 2 + bl.size * 4)
    vmem_limit = int(min(56 * 1024 * 1024,
                         max(32 * 1024 * 1024,
                             2 * weight_bytes + act_bytes + 8 * 1024 * 1024)))

    kernel = functools.partial(_textcnn_kernel, tuple(filter_sizes), NF)
    flops = 2 * B * L * E * W_total + 2 * B * (NF * n_f) * C_pad
    bytes_accessed = (B * L * E * 2 + E * W_total * 2 + NF * n_f * C_pad * 2
                      + (NF * n_f + C_pad) * 4 + B * C_pad * 4)

    out = pl.pallas_call(
        kernel,
        out_shape=jax.ShapeDtypeStruct((B, C_pad), jnp.float32),
        grid=grid,
        in_specs=[
            pl.BlockSpec((TILE_B, L, E), lambda i: (i, 0, 0)),
            pl.BlockSpec(w_all.shape, lambda i: (0, 0)),
            pl.BlockSpec(b_conv.shape, lambda i: (0, 0)),
            pl.BlockSpec(wl.shape, lambda i: (0, 0)),
            pl.BlockSpec(bl.shape, lambda i: (0, 0)),
        ],
        out_specs=pl.BlockSpec((TILE_B, C_pad), lambda i: (i, 0)),
        compiler_params=pltpu.CompilerParams(
            dimension_semantics=("parallel",),
            vmem_limit_bytes=vmem_limit),
        cost_estimate=pl.CostEstimate(
            flops=flops, transcendentals=0, bytes_accessed=bytes_accessed),
    )(emb, w_all, b_conv, wl, bl)
    return out[:, :num_classes]


def textcnn_reference(input_ids, params, filter_sizes=(2, 3, 4)):
    # Pure f32 reference mirroring the PyTorch module semantics (eval mode).
    emb = jnp.take(params['embedding'], input_ids, axis=0)
    feats = []
    for k in filter_sizes:
        w = params[f'conv{k}_w']
        b = params[f'conv{k}_b']
        T = emb.shape[1] - k + 1
        s = jnp.zeros((emb.shape[0], T, w.shape[-1]), jnp.float32)
        for j in range(k):
            s = s + jnp.einsum('bte,ef->btf', emb[:, j:j + T, :], w[j])
        feats.append(jnp.max(jnp.maximum(s + b[None, :, :], 0.0), axis=1))
    feat = jnp.concatenate(feats, axis=-1)
    return feat @ params['lin_w'] + params['lin_b']


def init_params(key, vocab_size, embed, num_filters, filter_sizes, num_classes):
    keys = jax.random.split(key, 4 + 2 * len(filter_sizes))
    params = {}
    params['embedding'] = (
        jax.random.normal(keys[0], (vocab_size, embed), jnp.float32) * 0.02)
    for i, k in enumerate(filter_sizes):
        scale = 1.0 / float(k * embed) ** 0.5
        params[f'conv{k}_w'] = (
            jax.random.normal(keys[1 + 2 * i], (k, embed, num_filters),
                              jnp.float32) * scale)
        params[f'conv{k}_b'] = (
            jax.random.normal(keys[2 + 2 * i], (1, num_filters),
                              jnp.float32) * 0.01)
    fan_in = num_filters * len(filter_sizes)
    params['lin_w'] = (
        jax.random.normal(keys[-2], (fan_in, num_classes), jnp.float32)
        * (1.0 / float(fan_in) ** 0.5))
    params['lin_b'] = (
        jax.random.normal(keys[-1], (1, num_classes), jnp.float32) * 0.01)
    return params


if __name__ == "__main__":
    # Small shapes consistent with the module (embed/num_filters scaled down).
    # B=128 exercises the VMEM-budgeted tile selection (TILE_B=32, 4-step grid).
    VOCAB, EMBED, NUM_FILTERS, FILTER_SIZES, NUM_CLASSES = 512, 128, 128, (2, 3, 4), 10
    B, L = 128, 16

    key = jax.random.PRNGKey(0)
    pkey, dkey = jax.random.split(key)
    params = init_params(pkey, VOCAB, EMBED, NUM_FILTERS, FILTER_SIZES, NUM_CLASSES)
    input_ids = jax.random.randint(dkey, (B, L), 0, VOCAB, dtype=jnp.int32)

    packed = pack_params(params, FILTER_SIZES)      # one-time weight packing
    fwd = jax.jit(functools.partial(textcnn_forward,
                                    filter_sizes=FILTER_SIZES,
                                    num_classes=NUM_CLASSES))
    out = jax.block_until_ready(fwd(input_ids, packed))

    ref = textcnn_reference(input_ids, params, FILTER_SIZES)
    assert out.shape == (B, NUM_CLASSES)
    # bf16 MXU inputs with f32 accumulation -> compare against the f32 reference
    # with a bf16-appropriate tolerance.
    assert jnp.allclose(out, ref, atol=2e-2, rtol=2e-2), "kernel/reference mismatch"

    print("KERNEL_OK")
</pallas_src>

<mosaic_0001>
module attributes {stable_mosaic.version = 11 : i64} {
  func.func @_textcnn_kernel(%arg0: i32, %arg1: memref<32x16x128xbf16, #tpu.memory_space<vmem>>, %arg2: memref<128x1152xbf16, #tpu.memory_space<vmem>>, %arg3: memref<1x384xf32, #tpu.memory_space<vmem>>, %arg4: memref<384x128xbf16, #tpu.memory_space<vmem>>, %arg5: memref<1x128xf32, #tpu.memory_space<vmem>>, %arg6: memref<32x128xf32, #tpu.memory_space<vmem>>) attributes {dimension_semantics = [#tpu.dimension_semantics<parallel>], iteration_bounds = array<i64: 4>, scalar_prefetch = 0 : i64, scratch_operands = 0 : i64, tpu.core_type = #tpu.core_type<tc>, window_params = [{transform_indices = @transform_0, window_bounds = array<i64: 32, 16, 128>}, {pipeline_mode = #tpu.pipeline_mode<synchronous>, transform_indices = @transform_1, window_bounds = array<i64: 128, 1152>}, {pipeline_mode = #tpu.pipeline_mode<synchronous>, transform_indices = @transform_2, window_bounds = array<i64: 1, 384>}, {pipeline_mode = #tpu.pipeline_mode<synchronous>, transform_indices = @transform_3, window_bounds = array<i64: 384, 128>}, {pipeline_mode = #tpu.pipeline_mode<synchronous>, transform_indices = @transform_4, window_bounds = array<i64: 1, 128>}, {transform_indices = @transform_5, window_bounds = array<i64: 32, 128>}]} {
    %c0 = arith.constant 0 : index
    %c0_0 = arith.constant 0 : index
    %c0_1 = arith.constant 0 : index
    %0 = vector.load %arg1[%c0, %c0_0, %c0_1] : memref<32x16x128xbf16, #tpu.memory_space<vmem>>, vector<32x16x128xbf16>
    %1 = vector.shape_cast %0 : vector<32x16x128xbf16> to vector<512x128xbf16>
    %c0_2 = arith.constant 0 : index
    %c0_3 = arith.constant 0 : index
    %2 = vector.load %arg3[%c0_2, %c0_3] : memref<1x384xf32, #tpu.memory_space<vmem>>, vector<1x384xf32>
    %3 = tpu.iota {dimensions = array<i32: 0>} : vector<16x128xi32>
    %c0_4 = arith.constant 0 : index
    %c0_5 = arith.constant 0 : index
    %4 = vector.load %arg2[%c0_4, %c0_5] : memref<128x1152xbf16, #tpu.memory_space<vmem>>, vector<128x256xbf16>
    %cst = arith.constant dense<0.000000e+00> : vector<512x256xf32>
    %5 = tpu.matmul %1, %4, %cst {dimension_numbers = #tpu.dot_dimension_numbers<[1], [0], [0], [1], [0, 0, 1, 1], [], []>} : vector<512x128xbf16>, vector<128x256xbf16>, vector<512x256xf32> -> vector<512x256xf32>
    %6 = vector.extract_strided_slice %5 {offsets = [0, 0], sizes = [512, 128], strides = [1, 1]} : vector<512x256xf32> to vector<512x128xf32>
    %7 = vector.extract_strided_slice %5 {offsets = [0, 128], sizes = [512, 128], strides = [1, 1]} : vector<512x256xf32> to vector<512x128xf32>
    %c511_i32 = arith.constant 511 : i32
    %8 = tpu.dynamic_rotate %7 by %c511_i32 dim 0 : vector<512x128xf32>, i32 -> vector<512x128xf32>
    %9 = arith.addf %6, %8 : vector<512x128xf32>
    %10 = vector.shape_cast %9 : vector<512x128xf32> to vector<32x16x128xf32>
    %11 = vector.extract_strided_slice %2 {offsets = [0, 0], sizes = [1, 128], strides = [1, 1]} : vector<1x384xf32> to vector<1x128xf32>
    %12 = vector.shape_cast %11 : vector<1x128xf32> to vector<1x1x128xf32>
    %13 = vector.broadcast %12 : vector<1x1x128xf32> to vector<32x16x128xf32>
    %14 = arith.addf %10, %13 : vector<32x16x128xf32>
    %cst_6 = arith.constant 0.000000e+00 : f32
    %15 = vector.broadcast %cst_6 : f32 to vector<32x16x128xf32>
    %16 = arith.maximumf %14, %15 : vector<32x16x128xf32>
    %c15_i32 = arith.constant 15 : i32
    %17 = vector.broadcast %c15_i32 : i32 to vector<16x128xi32>
    %18 = arith.cmpi slt, %3, %17 : vector<16x128xi32>
    %19 = vector.shape_cast %18 : vector<16x128xi1> to vector<1x16x128xi1>
    %cst_7 = arith.constant 0.000000e+00 : f32
    %20 = vector.shape_cast %19 : vector<1x16x128xi1> to vector<1x16x128xi1>
    %21 = vector.broadcast %20 : vector<1x16x128xi1> to vector<32x16x128xi1>
    %22 = vector.broadcast %cst_7 : f32 to vector<32x16x128xf32>
    %23 = arith.select %21, %16, %22 : vector<32x16x128xi1>, vector<32x16x128xf32>
    %cst_8 = arith.constant dense<0xFF800000> : vector<32x128xf32>
    %24 = vector.multi_reduction <maximumf>, %23, %cst_8 [1] : vector<32x16x128xf32> to vector<32x128xf32>
    %c0_9 = arith.constant 0 : index
    %c256 = arith.constant 256 : index
    %25 = vector.load %arg2[%c0_9, %c256] : memref<128x1152xbf16, #tpu.memory_space<vmem>>, vector<128x384xbf16>
    %cst_10 = arith.constant dense<0.000000e+00> : vector<512x384xf32>
    %26 = tpu.matmul %1, %25, %cst_10 {dimension_numbers = #tpu.dot_dimension_numbers<[1], [0], [0], [1], [0, 0, 1, 1], [], []>} : vector<512x128xbf16>, vector<128x384xbf16>, vector<512x384xf32> -> vector<512x384xf32>
    %27 = vector.extract_strided_slice %26 {offsets = [0, 0], sizes = [512, 128], strides = [1, 1]} : vector<512x384xf32> to vector<512x128xf32>
    %28 = vector.extract_strided_slice %26 {offsets = [0, 128], sizes = [512, 128], strides = [1, 1]} : vector<512x384xf32> to vector<512x128xf32>
    %c511_i32_11 = arith.constant 511 : i32
    %29 = tpu.dynamic_rotate %28 by %c511_i32_11 dim 0 : vector<512x128xf32>, i32 -> vector<512x128xf32>
    %30 = arith.addf %27, %29 : vector<512x128xf32>
    %31 = vector.extract_strided_slice %26 {offsets = [0, 256], sizes = [512, 128], strides = [1, 1]} : vector<512x384xf32> to vector<512x128xf32>
    %c510_i32 = arith.constant 510 : i32
    %32 = tpu.dynamic_rotate %31 by %c510_i32 dim 0 : vector<512x128xf32>, i32 -> vector<512x128xf32>
    %33 = arith.addf %30, %32 : vector<512x128xf32>
    %34 = vector.shape_cast %33 : vector<512x128xf32> to vector<32x16x128xf32>
    %35 = vector.extract_strided_slice %2 {offsets = [0, 128], sizes = [1, 128], strides = [1, 1]} : vector<1x384xf32> to vector<1x128xf32>
    %36 = vector.shape_cast %35 : vector<1x128xf32> to vector<1x1x128xf32>
    %37 = vector.broadcast %36 : vector<1x1x128xf32> to vector<32x16x128xf32>
    %38 = arith.addf %34, %37 : vector<32x16x128xf32>
    %cst_12 = arith.constant 0.000000e+00 : f32
    %39 = vector.broadcast %cst_12 : f32 to vector<32x16x128xf32>
    %40 = arith.maximumf %38, %39 : vector<32x16x128xf32>
    %c14_i32 = arith.constant 14 : i32
    %41 = vector.broadcast %c14_i32 : i32 to vector<16x128xi32>
    %42 = arith.cmpi slt, %3, %41 : vector<16x128xi32>
    %43 = vector.shape_cast %42 : vector<16x128xi1> to vector<1x16x128xi1>
    %cst_13 = arith.constant 0.000000e+00 : f32
    %44 = vector.shape_cast %43 : vector<1x16x128xi1> to vector<1x16x128xi1>
    %45 = vector.broadcast %44 : vector<1x16x128xi1> to vector<32x16x128xi1>
    %46 = vector.broadcast %cst_13 : f32 to vector<32x16x128xf32>
    %47 = arith.select %45, %40, %46 : vector<32x16x128xi1>, vector<32x16x128xf32>
    %cst_14 = arith.constant dense<0xFF800000> : vector<32x128xf32>
    %48 = vector.multi_reduction <maximumf>, %47, %cst_14 [1] : vector<32x16x128xf32> to vector<32x128xf32>
    %c0_15 = arith.constant 0 : index
    %c640 = arith.constant 640 : index
    %49 = vector.load %arg2[%c0_15, %c640] : memref<128x1152xbf16, #tpu.memory_space<vmem>>, vector<128x512xbf16>
    %cst_16 = arith.constant dense<0.000000e+00> : vector<512x512xf32>
    %50 = tpu.matmul %1, %49, %cst_16 {dimension_numbers = #tpu.dot_dimension_numbers<[1], [0], [0], [1], [0, 0, 1, 1], [], []>} : vector<512x128xbf16>, vector<128x512xbf16>, vector<512x512xf32> -> vector<512x512xf32>
    %51 = vector.extract_strided_slice %50 {offsets = [0, 0], sizes = [512, 128], strides = [1, 1]} : vector<512x512xf32> to vector<512x128xf32>
    %52 = vector.extract_strided_slice %50 {offsets = [0, 128], sizes = [512, 128], strides = [1, 1]} : vector<512x512xf32> to vector<512x128xf32>
    %c511_i32_17 = arith.constant 511 : i32
    %53 = tpu.dynamic_rotate %52 by %c511_i32_17 dim 0 : vector<512x128xf32>, i32 -> vector<512x128xf32>
    %54 = arith.addf %51, %53 : vector<512x128xf32>
    %55 = vector.extract_strided_slice %50 {offsets = [0, 256], sizes = [512, 128], strides = [1, 1]} : vector<512x512xf32> to vector<512x128xf32>
    %c510_i32_18 = arith.constant 510 : i32
    %56 = tpu.dynamic_rotate %55 by %c510_i32_18 dim 0 : vector<512x128xf32>, i32 -> vector<512x128xf32>
    %57 = arith.addf %54, %56 : vector<512x128xf32>
    %58 = vector.extract_strided_slice %50 {offsets = [0, 384], sizes = [512, 128], strides = [1, 1]} : vector<512x512xf32> to vector<512x128xf32>
    %c509_i32 = arith.constant 509 : i32
    %59 = tpu.dynamic_rotate %58 by %c509_i32 dim 0 : vector<512x128xf32>, i32 -> vector<512x128xf32>
    %60 = arith.addf %57, %59 : vector<512x128xf32>
    %61 = vector.shape_cast %60 : vector<512x128xf32> to vector<32x16x128xf32>
    %62 = vector.extract_strided_slice %2 {offsets = [0, 256], sizes = [1, 128], strides = [1, 1]} : vector<1x384xf32> to vector<1x128xf32>
    %63 = vector.shape_cast %62 : vector<1x128xf32> to vector<1x1x128xf32>
    %64 = vector.broadcast %63 : vector<1x1x128xf32> to vector<32x16x128xf32>
    %65 = arith.addf %61, %64 : vector<32x16x128xf32>
    %cst_19 = arith.constant 0.000000e+00 : f32
    %66 = vector.broadcast %cst_19 : f32 to vector<32x16x128xf32>
    %67 = arith.maximumf %65, %66 : vector<32x16x128xf32>
    %c13_i32 = arith.constant 13 : i32
    %68 = vector.broadcast %c13_i32 : i32 to vector<16x128xi32>
    %69 = arith.cmpi slt, %3, %68 : vector<16x128xi32>
    %70 = vector.shape_cast %69 : vector<16x128xi1> to vector<1x16x128xi1>
    %cst_20 = arith.constant 0.000000e+00 : f32
    %71 = vector.shape_cast %70 : vector<1x16x128xi1> to vector<1x16x128xi1>
    %72 = vector.broadcast %71 : vector<1x16x128xi1> to vector<32x16x128xi1>
    %73 = vector.broadcast %cst_20 : f32 to vector<32x16x128xf32>
    %74 = arith.select %72, %67, %73 : vector<32x16x128xi1>, vector<32x16x128xf32>
    %cst_21 = arith.constant dense<0xFF800000> : vector<32x128xf32>
    %75 = vector.multi_reduction <maximumf>, %74, %cst_21 [1] : vector<32x16x128xf32> to vector<32x128xf32>
    %76 = tpu.concatenate %24, %48, %75 in 1 : vector<32x128xf32>, vector<32x128xf32>, vector<32x128xf32> -> vector<32x384xf32>
    %77 = arith.truncf %76 : vector<32x384xf32> to vector<32x384xbf16>
    %c0_22 = arith.constant 0 : index
    %c0_23 = arith.constant 0 : index
    %78 = vector.load %arg4[%c0_22, %c0_23] : memref<384x128xbf16, #tpu.memory_space<vmem>>, vector<384x128xbf16>
    %cst_24 = arith.constant dense<0.000000e+00> : vector<32x128xf32>
    %79 = tpu.matmul %77, %78, %cst_24 {dimension_numbers = #tpu.dot_dimension_numbers<[1], [0], [0], [1], [0, 0, 1, 1], [], []>} : vector<32x384xbf16>, vector<384x128xbf16>, vector<32x128xf32> -> vector<32x128xf32>
    %c0_25 = arith.constant 0 : index
    %c0_26 = arith.constant 0 : index
    %80 = vector.load %arg5[%c0_25, %c0_26] : memref<1x128xf32, #tpu.memory_space<vmem>>, vector<1x128xf32>
    %81 = vector.broadcast %80 : vector<1x128xf32> to vector<32x128xf32>
    %82 = arith.addf %79, %81 : vector<32x128xf32>
    %c0_27 = arith.constant 0 : index
    %c0_28 = arith.constant 0 : index
    %83 = vector.load %arg6[%c0_27, %c0_28] : memref<32x128xf32, #tpu.memory_space<vmem>>, vector<32x128xf32>
    tpu.vector_store %arg6[%c0_27, %c0_28], %82 {strides = array<i32>} : memref<32x128xf32, #tpu.memory_space<vmem>>, vector<32x128xf32>,
    return
  }
  func.func @transform_0(%arg0: i32) -> (i32, i32, i32) {
    %c0_i32 = arith.constant 0 : i32
    %c0_i32_0 = arith.constant 0 : i32
    %c0_i32_1 = arith.constant 0 : i32
    return %arg0, %c0_i32, %c0_i32_0 : i32, i32, i32
  }
  func.func @transform_1(%arg0: i32) -> (i32, i32) {
    %c0_i32 = arith.constant 0 : i32
    %c0_i32_0 = arith.constant 0 : i32
    %c0_i32_1 = arith.constant 0 : i32
    return %c0_i32, %c0_i32_0 : i32, i32
  }
  func.func @transform_2(%arg0: i32) -> (i32, i32) {
    %c0_i32 = arith.constant 0 : i32
    %c0_i32_0 = arith.constant 0 : i32
    %c0_i32_1 = arith.constant 0 : i32
    return %c0_i32, %c0_i32_0 : i32, i32
  }
  func.func @transform_3(%arg0: i32) -> (i32, i32) {
    %c0_i32 = arith.constant 0 : i32
    %c0_i32_0 = arith.constant 0 : i32
    %c0_i32_1 = arith.constant 0 : i32
    return %c0_i32, %c0_i32_0 : i32, i32
  }
  func.func @transform_4(%arg0: i32) -> (i32, i32) {
    %c0_i32 = arith.constant 0 : i32
    %c0_i32_0 = arith.constant 0 : i32
    %c0_i32_1 = arith.constant 0 : i32
    return %c0_i32, %c0_i32_0 : i32, i32
  }
  func.func @transform_5(%arg0: i32) -> (i32, i32) {
    %c0_i32 = arith.constant 0 : i32
    %c0_i32_0 = arith.constant 0 : i32
    return %arg0, %c0_i32 : i32, i32
  }
}

</mosaic_0001>

<llo_original>
// kernel: textcnn_forward.1
$region0: #{textcnn_forward.1}
  #allocation0 [shape = 'u32[]', space=smem, size = 0x4, offset = 0x4, fixed_abs, tag = 'smem constant byte address 0x4 - core index']
  #allocation1 [shape = 'u32[144,128]{1,0:T(1,128)}', space=vmem, size = 0x12000, scoped, tag = 'internal scratch']
  %s0 = inlined_call_operand.vmem [shape: bf16[128,16,128], index: 0, kind: input, shape index: {}]
  %s1 = inlined_call_operand.vmem [shape: bf16[128,1152], index: 1, kind: input, shape index: {}]
  %s2 = inlined_call_operand.vmem [shape: f32[1,384], index: 2, kind: input, shape index: {}]
  %s3 = inlined_call_operand.vmem [shape: bf16[384,128], index: 3, kind: input, shape index: {}]
  %s4 = inlined_call_operand.vmem [shape: f32[1,128], index: 4, kind: input, shape index: {}]
  %s5 = inlined_call_operand.vmem [shape: f32[128,128], index: 5, kind: output, shape index: {}]
  %s6 = sld [smem:[#allocation0]]
  $region53: #{textcnn_forward.1} parent=0
    _
  %s8 = ssub.s32 1, %s6
  %s9 = scalar_select 0, %s8, %s6
  loop: start=0, step=1, limit=6
  $region2: #{textcnn_forward.1} parent=0 // loop_pre_header
    _
  $region3: #{textcnn_forward.1} parent=0 // loop_header
    %s11 = sphi 0, %s15
    %p12 = scmp.ge.s32.totalorder %s11, 6
    %s21 = sphi 0, %s23
    %s24 = sphi 0, %s21
    %s25 = sphi 0, %s24
    %s41 = sphi 0, %s25
    %s45 = sphi 0, %s45
    %s47 = sphi 0, %s45
    %s48 = sphi 0, %s47
    %s62 = sphi 0, %s48
    %s66 = sphi 0, %s66
    %s68 = sphi 0, %s66
    %s69 = sphi 0, %s68
    %s83 = sphi 0, %s69
    %s87 = sphi 0, %s87
    %s89 = sphi 0, %s87
    %s90 = sphi 0, %s89
    %s104 = sphi 0, %s90
    %s108 = sphi 0, %s108
    %s110 = sphi 0, %s108
    %s111 = sphi 0, %s110
    %s125 = sphi 0, %s111
    %s131 = sphi 0, %s133
    %s134 = sphi 0, %s131
    %s135 = sphi 0, %s134
    %s151 = sphi 0, %s135
  $region4: #{textcnn_forward.1} parent=0 // loop_header_branch
    %14 = sbr.rel (%p12) target = $region8
  $region5: #{textcnn_forward.1} parent=0 // loop_body
    %s16 = ssub.s32 %s11, 1
    %s17 = ssub.s32 %s11, 2
    %s18 = sadd.s32 %s11, 1
    %s19 = ssub.s32 %s11, %s18
    %p20 = scmp.eq.s32.totalorder %s19, 0
    %s22 = sadd.s32 %s21, 1
    %s23 = scalar_select %p20, %s21, %s22
    %p26 = pneg %p20
    %p27 = scmp.eq.s32.totalorder %s11, 3
    %p28 = por %p26, %p27
    %p29 = scmp.ne.s32.totalorder %s21, %s24
    %p30 = scmp.eq.s32.totalorder %s11, 0
    %p31 = por %p29, %p30
    %p32 = scmp.ne.s32.totalorder %s21, %s24
    %p33 = scmp.eq.s32.totalorder %s16, 3
    %p34 = por %p32, %p33
    %p35 = scmp.ne.s32.totalorder %s24, %s25
    %p36 = scmp.eq.s32.totalorder %s16, 0
    %p37 = por %p35, %p36
    %p38 = scmp.ne.s32.totalorder %s24, %s25
    %p39 = scmp.eq.s32.totalorder %s17, 3
    %p40 = por %p38, %p39
    %p42 = scmp.ne.s32.totalorder %s25, %s41
    %p43 = scmp.eq.s32.totalorder %s17, 0
    %p44 = por %p42, %p43
    %s46 = sadd.s32 %s45, 1
    %p49 = scmp.eq.s32.totalorder %s11, 3
    %p50 = scmp.ne.s32.totalorder %s45, %s47
    %p51 = scmp.eq.s32.totalorder %s11, 0
    %p52 = por %p50, %p51
    %p53 = scmp.ne.s32.totalorder %s45, %s47
    %p54 = scmp.eq.s32.totalorder %s16, 3
    %p55 = por %p53, %p54
    %p56 = scmp.ne.s32.totalorder %s47, %s48
    %p57 = scmp.eq.s32.totalorder %s16, 0
    %p58 = por %p56, %p57
    %p59 = scmp.ne.s32.totalorder %s47, %s48
    %p60 = scmp.eq.s32.totalorder %s17, 3
    %p61 = por %p59, %p60
    %p63 = scmp.ne.s32.totalorder %s48, %s62
    %p64 = scmp.eq.s32.totalorder %s17, 0
    %p65 = por %p63, %p64
    %s67 = sadd.s32 %s66, 1
    %p70 = scmp.eq.s32.totalorder %s11, 3
    %p71 = scmp.ne.s32.totalorder %s66, %s68
    %p72 = scmp.eq.s32.totalorder %s11, 0
    %p73 = por %p71, %p72
    %p74 = scmp.ne.s32.totalorder %s66, %s68
    %p75 = scmp.eq.s32.totalorder %s16, 3
    %p76 = por %p74, %p75
    %p77 = scmp.ne.s32.totalorder %s68, %s69
    %p78 = scmp.eq.s32.totalorder %s16, 0
    %p79 = por %p77, %p78
    %p80 = scmp.ne.s32.totalorder %s68, %s69
    %p81 = scmp.eq.s32.totalorder %s17, 3
    %p82 = por %p80, %p81
    %p84 = scmp.ne.s32.totalorder %s69, %s83
    %p85 = scmp.eq.s32.totalorder %s17, 0
    %p86 = por %p84, %p85
    %s88 = sadd.s32 %s87, 1
    %p91 = scmp.eq.s32.totalorder %s11, 3
    %p92 = scmp.ne.s32.totalorder %s87, %s89
    %p93 = scmp.eq.s32.totalorder %s11, 0
    %p94 = por %p92, %p93
    %p95 = scmp.ne.s32.totalorder %s87, %s89
    %p96 = scmp.eq.s32.totalorder %s16, 3
    %p97 = por %p95, %p96
    %p98 = scmp.ne.s32.totalorder %s89, %s90
    %p99 = scmp.eq.s32.totalorder %s16, 0
    %p100 = por %p98, %p99
    %p101 = scmp.ne.s32.totalorder %s89, %s90
    %p102 = scmp.eq.s32.totalorder %s17, 3
    %p103 = por %p101, %p102
    %p105 = scmp.ne.s32.totalorder %s90, %s104
    %p106 = scmp.eq.s32.totalorder %s17, 0
    %p107 = por %p105, %p106
    %s109 = sadd.s32 %s108, 1
    %p112 = scmp.eq.s32.totalorder %s11, 3
    %p113 = scmp.ne.s32.totalorder %s108, %s110
    %p114 = scmp.eq.s32.totalorder %s11, 0
    %p115 = por %p113, %p114
    %p116 = scmp.ne.s32.totalorder %s108, %s110
    %p117 = scmp.eq.s32.totalorder %s16, 3
    %p118 = por %p116, %p117
    %p119 = scmp.ne.s32.totalorder %s110, %s111
    %p120 = scmp.eq.s32.totalorder %s16, 0
    %p121 = por %p119, %p120
    %p122 = scmp.ne.s32.totalorder %s110, %s111
    %p123 = scmp.eq.s32.totalorder %s17, 3
    %p124 = por %p122, %p123
    %p126 = scmp.ne.s32.totalorder %s111, %s125
    %p127 = scmp.eq.s32.totalorder %s17, 0
    %p128 = por %p126, %p127
    %s129 = ssub.s32 %s11, %s18
    %p130 = scmp.eq.s32.totalorder %s129, 0
    %s132 = sadd.s32 %s131, 1
    %s133 = scalar_select %p130, %s131, %s132
    %p136 = pneg %p130
    %p137 = scmp.eq.s32.totalorder %s11, 3
    %p138 = por %p136, %p137
    %p139 = scmp.ne.s32.totalorder %s131, %s134
    %p140 = scmp.eq.s32.totalorder %s11, 0
    %p141 = por %p139, %p140
    %p142 = scmp.ne.s32.totalorder %s131, %s134
    %p143 = scmp.eq.s32.totalorder %s16, 3
    %p144 = por %p142, %p143
    %p145 = scmp.ne.s32.totalorder %s134, %s135
    %p146 = scmp.eq.s32.totalorder %s16, 0
    %p147 = por %p145, %p146
    %p148 = scmp.ne.s32.totalorder %s134, %s135
    %p149 = scmp.eq.s32.totalorder %s17, 3
    %p150 = por %p148, %p149
    %p152 = scmp.ne.s32.totalorder %s135, %s151
    %p153 = scmp.eq.s32.totalorder %s17, 0
    %p154 = por %p152, %p153
    %p155 = scmp.le.s32.totalorder 1, %s11
    %p156 = scmp.lt.s32.totalorder %s11, 5
    %p157 = pnand %p155, %p156
    %p158 = pneg %p157
    // Predicated region
    $region9: #{textcnn_forward.1} parent=5 // pred_check
      _
    $region10: #{textcnn_forward.1} parent=5 // pred_check_branch
      %160 = sbr.rel (%p157) target = $region12
    $region11: #{textcnn_forward.1} parent=5 // pred_region
      %s161 = ssub.s32 %s11, 1
      // Predicated region
      $region13: #{textcnn_forward.1} parent=11 // pred_check
        %p162 = pneg %p58
      $region14: #{textcnn_forward.1} parent=11 // pred_check_branch
        %164 = sbr.rel (%p162) target = $region16
      $region15: #{textcnn_forward.1} parent=11 // pred_region
        _
      $region16: #{textcnn_forward.1} parent=11 // pred_fallthru
        _
      // Predicated region
      $region17: #{textcnn_forward.1} parent=11 // pred_check
        %p165 = pneg %p79
      $region18: #{textcnn_forward.1} parent=11 // pred_check_branch
        %167 = sbr.rel (%p165) target = $region20
      $region19: #{textcnn_forward.1} parent=11 // pred_region
        _
      $region20: #{textcnn_forward.1} parent=11 // pred_fallthru
        _
      // Predicated region
      $region21: #{textcnn_forward.1} parent=11 // pred_check
        %p168 = pneg %p100
      $region22: #{textcnn_forward.1} parent=11 // pred_check_branch
        %170 = sbr.rel (%p168) target = $region24
      $region23: #{textcnn_forward.1} parent=11 // pred_region
        _
      $region24: #{textcnn_forward.1} parent=11 // pred_fallthru
        _
      // Predicated region
      $region25: #{textcnn_forward.1} parent=11 // pred_check
        %p171 = pneg %p121
      $region26: #{textcnn_forward.1} parent=11 // pred_check_branch
        %173 = sbr.rel (%p171) target = $region28
      $region27: #{textcnn_forward.1} parent=11 // pred_region
        _
      $region28: #{textcnn_forward.1} parent=11 // pred_fallthru
        _
    $region12: #{textcnn_forward.1} parent=5 // pred_fallthru
      _
    %p174 = scmp.lt.s32.totalorder %s11, 4
    // Predicated region
    $region29: #{textcnn_forward.1} parent=5 // pred_check
      %p175 = pneg %p174
    $region30: #{textcnn_forward.1} parent=5 // pred_check_branch
      %177 = sbr.rel (%p175) target = $region32
    $region31: #{textcnn_forward.1} parent=5 // pred_region
      // Predicated region
      $region33: #{textcnn_forward.1} parent=31 // pred_check
        %p178 = pneg %p31
      $region34: #{textcnn_forward.1} parent=31 // pred_check_branch
        %180 = sbr.rel (%p178) target = $region36
      $region35: #{textcnn_forward.1} parent=31 // pred_region
        %s181 = smul.u32 32, %s11
        %p182 = scmp.lt.s32.totalorder %s181, 127
        %s183 = scalar_select %p182, %s181, 127
        %s184 = smul.addr %s183, 2
        %s185 = smul.addr %s184, 4
        %s186 = scalar_lea.vmem %s0, %s185
        %s187 = smul.u32 32, %s11
      $region36: #{textcnn_forward.1} parent=31 // pred_fallthru
        _
    $region32: #{textcnn_forward.1} parent=5 // pred_fallthru
      _
    %p188 = scmp.le.s32.totalorder 1, %s11
    %p189 = scmp.lt.s32.totalorder %s11, 5
    %p190 = pnand %p188, %p189
    %p191 = pneg %p190
    // Predicated region
    $region37: #{textcnn_forward.1} parent=5 // pred_check
      _
    $region38: #{textcnn_forward.1} parent=5 // pred_check_branch
      %193 = sbr.rel (%p190) target = $region40
    $region39: #{textcnn_forward.1} parent=5 // pred_region
      %s194 = ssub.s32 %s11, 1
      %s195 = smul.u32 32, %s16
      %p196 = scmp.lt.s32.totalorder %s195, 127
      %s197 = scalar_select %p196, %s195, 127
      %s198 = smul.addr %s197, 2
      %s199 = smul.addr %s198, 4
      %s200 = scalar_lea.vmem %s0, %s199
      %p201 = pneg %p37
      %p202 = pneg %p34
      %p203 = pneg %p58
      %p204 = pneg %p55
      %p205 = pneg %p79
      %p206 = pneg %p76
      %p207 = pneg %p100
      %p208 = pneg %p97
      %p209 = pneg %p121
      %p210 = pneg %p118
      %p211 = pneg %p147
      %p212 = pneg %p144
      %s213 = smul.u32 4, %s16
      %p214 = scmp.lt.s32.totalorder %s213, 15
      %s215 = scalar_select %p214, %s213, 15
      %s216 = smul.addr %s215, 8
      %s217 = scalar_lea.vmem %s5, %s216
      %s218 = smul.u32 32, %s16
      %p219 = scmp.lt.s32.totalorder %s218, 127
      %s220 = scalar_select %p219, %s218, 127
      %s221 = smul.addr %s220, 2
      %s222 = smul.addr %s221, 4
      %s223 = scalar_lea.vmem %s0, %s222
      %s224 = smul.u32 32, %s16
      %s225 = smul.u32 4, %s16
      %p226 = scmp.lt.s32.totalorder %s225, 15
      %s227 = scalar_select %p226, %s225, 15
      %s228 = smul.addr %s227, 8
      %s229 = scalar_lea.vmem %s5, %s228
      %s230 = smul.u32 4, %s16
      %v232 = vld [vmem:[%s223] sm:$0xf]
      %v233 = vld [vmem:[%s223 + $0x4] sm:$0xf]
      %v234 = vld [vmem:[%s223 + $0x8] sm:$0xf]
      %v235 = vld [vmem:[%s223 + $0xc] sm:$0xf]
      %v236 = vld [vmem:[%s223 + $0x10] sm:$0xf]
      %v237 = vld [vmem:[%s223 + $0x14] sm:$0xf]
      %v238 = vld [vmem:[%s223 + $0x18] sm:$0xf]
      %v239 = vld [vmem:[%s223 + $0x1c] sm:$0xf]
      %v240 = vld [vmem:[%s223 + $0x20] sm:$0xf]
      %v241 = vld [vmem:[%s223 + $0x24] sm:$0xf]
      %v242 = vld [vmem:[%s223 + $0x28] sm:$0xf]
      %v243 = vld [vmem:[%s223 + $0x2c] sm:$0xf]
      %v244 = vld [vmem:[%s223 + $0x30] sm:$0xf]
      %v245 = vld [vmem:[%s223 + $0x34] sm:$0xf]
      %v246 = vld [vmem:[%s223 + $0x38] sm:$0xf]
      %v247 = vld [vmem:[%s223 + $0x3c] sm:$0xf]
      %v248 = vld [vmem:[%s223 + $0x40] sm:$0xf]
      %v249 = vld [vmem:[%s223 + $0x44] sm:$0xf]
      %v250 = vld [vmem:[%s223 + $0x48] sm:$0xf]
      %v251 = vld [vmem:[%s223 + $0x4c] sm:$0xf]
      %v252 = vld [vmem:[%s223 + $0x50] sm:$0xf]
      %v253 = vld [vmem:[%s223 + $0x54] sm:$0xf]
      %v254 = vld [vmem:[%s223 + $0x58] sm:$0xf]
      %v255 = vld [vmem:[%s223 + $0x5c] sm:$0xf]
      %v256 = vld [vmem:[%s223 + $0x60] sm:$0xf]
      %v257 = vld [vmem:[%s223 + $0x64] sm:$0xf]
      %v258 = vld [vmem:[%s223 + $0x68] sm:$0xf]
      %v259 = vld [vmem:[%s223 + $0x6c] sm:$0xf]
      %v260 = vld [vmem:[%s223 + $0x70] sm:$0xf]
      %v261 = vld [vmem:[%s223 + $0x74] sm:$0xf]
      %v262 = vld [vmem:[%s223 + $0x78] sm:$0xf]
      %v263 = vld [vmem:[%s223 + $0x7c] sm:$0xf]
      %v264 = vld [vmem:[%s223 + $0x80] sm:$0xf]
      %v265 = vld [vmem:[%s223 + $0x84] sm:$0xf]
      %v266 = vld [vmem:[%s223 + $0x88] sm:$0xf]
      %v267 = vld [vmem:[%s223 + $0x8c] sm:$0xf]
      %v268 = vld [vmem:[%s223 + $0x90] sm:$0xf]
      %v269 = vld [vmem:[%s223 + $0x94] sm:$0xf]
      %v270 = vld [vmem:[%s223 + $0x98] sm:$0xf]
      %v271 = vld [vmem:[%s223 + $0x9c] sm:$0xf]
      %v272 = vld [vmem:[%s223 + $0xa0] sm:$0xf]
      %v273 = vld [vmem:[%s223 + $0xa4] sm:$0xf]
      %v274 = vld [vmem:[%s223 + $0xa8] sm:$0xf]
      %v275 = vld [vmem:[%s223 + $0xac] sm:$0xf]
      %v276 = vld [vmem:[%s223 + $0xb0] sm:$0xf]
      %v277 = vld [vmem:[%s223 + $0xb4] sm:$0xf]
      %v278 = vld [vmem:[%s223 + $0xb8] sm:$0xf]
      %v279 = vld [vmem:[%s223 + $0xbc] sm:$0xf]
      %v280 = vld [vmem:[%s223 + $0xc0] sm:$0xf]
      %v281 = vld [vmem:[%s223 + $0xc4] sm:$0xf]
      %v282 = vld [vmem:[%s223 + $0xc8] sm:$0xf]
      %v283 = vld [vmem:[%s223 + $0xcc] sm:$0xf]
      %v284 = vld [vmem:[%s223 + $0xd0] sm:$0xf]
      %v285 = vld [vmem:[%s223 + $0xd4] sm:$0xf]
      %v286 = vld [vmem:[%s223 + $0xd8] sm:$0xf]
      %v287 = vld [vmem:[%s223 + $0xdc] sm:$0xf]
      %v288 = vld [vmem:[%s223 + $0xe0] sm:$0xf]
      %v289 = vld [vmem:[%s223 + $0xe4] sm:$0xf]
      %v290 = vld [vmem:[%s223 + $0xe8] sm:$0xf]
      %v291 = vld [vmem:[%s223 + $0xec] sm:$0xf]
      %v292 = vld [vmem:[%s223 + $0xf0] sm:$0xf]
      %v293 = vld [vmem:[%s223 + $0xf4] sm:$0xf]
      %v294 = vld [vmem:[%s223 + $0xf8] sm:$0xf]
      %v295 = vld [vmem:[%s223 + $0xfc] sm:$0xf]
      %v296 = vld [vmem:[%s2] sm:$0x7]
      %v297 = vlaneseq
      %v298 = vshrl.u32 %v297, 7
      %v299 = vadd.s32 %v298, 8
      %v300 = vld [vmem:[%s1] sm:$0xff]
      %v301 = vld [vmem:[%s1 + $0x24] sm:$0xff]
      %v302 = vld [vmem:[%s1 + $0x48] sm:$0xff]
      %v303 = vld [vmem:[%s1 + $0x6c] sm:$0xff]
      %v304 = vld [vmem:[%s1 + $0x90] sm:$0xff]
      %v305 = vld [vmem:[%s1 + $0xb4] sm:$0xff]
      %v306 = vld [vmem:[%s1 + $0xd8] sm:$0xff]
      %v307 = vld [vmem:[%s1 + $0xfc] sm:$0xff]
      %v308 = vld [vmem:[%s1 + $0x120] sm:$0xff]
      %v309 = vld [vmem:[%s1 + $0x144] sm:$0xff]
      %v310 = vld [vmem:[%s1 + $0x168] sm:$0xff]
      %v311 = vld [vmem:[%s1 + $0x18c] sm:$0xff]
      %v312 = vld [vmem:[%s1 + $0x1b0] sm:$0xff]
      %v313 = vld [vmem:[%s1 + $0x1d4] sm:$0xff]
      %v314 = vld [vmem:[%s1 + $0x1f8] sm:$0xff]
      %v315 = vld [vmem:[%s1 + $0x21c] sm:$0xff]
      %v380 = vunpack.c.l.b16 %v232
      %v381 = vunpack.c.l.b16 %v233
      %v382 = vunpack.c.l.b16 %v234
      %v383 = vunpack.c.l.b16 %v235
      %v384 = vunpack.c.l.b16 %v236
      %v385 = vunpack.c.l.b16 %v237
      %v386 = vunpack.c.l.b16 %v238
      %v387 = vunpack.c.l.b16 %v239
      %v388 = vunpack.c.l.b16 %v240
      %v389 = vunpack.c.l.b16 %v241
      %v390 = vunpack.c.l.b16 %v242
      %v391 = vunpack.c.l.b16 %v243
      %v392 = vunpack.c.l.b16 %v244
      %v393 = vunpack.c.l.b16 %v245
      %v394 = vunpack.c.l.b16 %v246
      %v395 = vunpack.c.l.b16 %v247
      %v396 = vunpack.c.l.b16 %v248
      %v397 = vunpack.c.l.b16 %v249
      %v398 = vunpack.c.l.b16 %v250
      %v399 = vunpack.c.l.b16 %v251
      %v400 = vunpack.c.l.b16 %v252
      %v401 = vunpack.c.l.b16 %v253
      %v402 = vunpack.c.l.b16 %v254
      %v403 = vunpack.c.l.b16 %v255
      %v404 = vunpack.c.l.b16 %v256
      %v405 = vunpack.c.l.b16 %v257
      %v406 = vunpack.c.l.b16 %v258
      %v407 = vunpack.c.l.b16 %v259
      %v408 = vunpack.c.l.b16 %v260
      %v409 = vunpack.c.l.b16 %v261
      %v410 = vunpack.c.l.b16 %v262
      %v411 = vunpack.c.l.b16 %v263
      %v412 = vunpack.c.l.b16 %v264
      %v413 = vunpack.c.l.b16 %v265
      %v414 = vunpack.c.l.b16 %v266
      %v415 = vunpack.c.l.b16 %v267
      %v416 = vunpack.c.l.b16 %v268
      %v417 = vunpack.c.l.b16 %v269
      %v418 = vunpack.c.l.b16 %v270
      %v419 = vunpack.c.l.b16 %v271
      %v420 = vunpack.c.l.b16 %v272
      %v421 = vunpack.c.l.b16 %v273
      %v422 = vunpack.c.l.b16 %v274
      %v423 = vunpack.c.l.b16 %v275
      %v424 = vunpack.c.l.b16 %v276
      %v425 = vunpack.c.l.b16 %v277
      %v426 = vunpack.c.l.b16 %v278
      %v427 = vunpack.c.l.b16 %v279
      %v428 = vunpack.c.l.b16 %v280
      %v429 = vunpack.c.l.b16 %v281
      %v430 = vunpack.c.l.b16 %v282
      %v431 = vunpack.c.l.b16 %v283
      %v432 = vunpack.c.l.b16 %v284
      %v433 = vunpack.c.l.b16 %v285
      %v434 = vunpack.c.l.b16 %v286
      %v435 = vunpack.c.l.b16 %v287
      %v436 = vunpack.c.l.b16 %v288
      %v437 = vunpack.c.l.b16 %v289
      %v438 = vunpack.c.l.b16 %v290
      %v439 = vunpack.c.l.b16 %v291
      %v440 = vunpack.c.l.b16 %v292
      %v441 = vunpack.c.l.b16 %v293
      %v442 = vunpack.c.l.b16 %v294
      %v443 = vunpack.c.l.b16 %v295
      %v444 = vpack.c.b16 %v381, %v380
      %v445 = vpack.c.b16 %v383, %v382
      %v446 = vpack.c.b16 %v385, %v384
      %v447 = vpack.c.b16 %v387, %v386
      %v448 = vpack.c.b16 %v389, %v388
      %v449 = vpack.c.b16 %v391, %v390
      %v450 = vpack.c.b16 %v393, %v392
      %v451 = vpack.c.b16 %v395, %v394
      %v452 = vpack.c.b16 %v397, %v396
      %v453 = vpack.c.b16 %v399, %v398
      %v454 = vpack.c.b16 %v401, %v400
      %v455 = vpack.c.b16 %v403, %v402
      %v456 = vpack.c.b16 %v405, %v404
      %v457 = vpack.c.b16 %v407, %v406
      %v458 = vpack.c.b16 %v409, %v408
      %v459 = vpack.c.b16 %v411, %v410
      %v460 = vpack.c.b16 %v413, %v412
      %v461 = vpack.c.b16 %v415, %v414
      %v462 = vpack.c.b16 %v417, %v416
      %v463 = vpack.c.b16 %v419, %v418
      %v464 = vpack.c.b16 %v421, %v420
      %v465 = vpack.c.b16 %v423, %v422
      %v466 = vpack.c.b16 %v425, %v424
      %v467 = vpack.c.b16 %v427, %v426
      %v468 = vpack.c.b16 %v429, %v428
      %v469 = vpack.c.b16 %v431, %v430
      %v470 = vpack.c.b16 %v433, %v432
      %v471 = vpack.c.b16 %v435, %v434
      %v472 = vpack.c.b16 %v437, %v436
      %v473 = vpack.c.b16 %v439, %v438
      %v474 = vpack.c.b16 %v441, %v440
      %v475 = vpack.c.b16 %v443, %v442
      %v524 = vunpack.c.l.b16 %v300
      %v525 = vunpack.c.h.b16 %v300
      %v526 = vunpack.c.l.b16 %v301
      %v527 = vunpack.c.h.b16 %v301
      %v528 = vunpack.c.l.b16 %v302
      %v529 = vunpack.c.h.b16 %v302
      %v530 = vunpack.c.l.b16 %v303
      %v531 = vunpack.c.h.b16 %v303
      %v532 = vunpack.c.l.b16 %v304
      %v533 = vunpack.c.h.b16 %v304
      %v534 = vunpack.c.l.b16 %v305
      %v535 = vunpack.c.h.b16 %v305
      %v536 = vunpack.c.l.b16 %v306
      %v537 = vunpack.c.h.b16 %v306
      %v538 = vunpack.c.l.b16 %v307
      %v539 = vunpack.c.h.b16 %v307
      %v540 = vunpack.c.l.b16 %v308
      %v541 = vunpack.c.h.b16 %v308
      %v542 = vunpack.c.l.b16 %v309
      %v543 = vunpack.c.h.b16 %v309
      %v544 = vunpack.c.l.b16 %v310
      %v545 = vunpack.c.h.b16 %v310
      %v546 = vunpack.c.l.b16 %v311
      %v547 = vunpack.c.h.b16 %v311
      %v548 = vunpack.c.l.b16 %v312
      %v549 = vunpack.c.h.b16 %v312
      %v550 = vunpack.c.l.b16 %v313
      %v551 = vunpack.c.h.b16 %v313
      %v552 = vunpack.c.l.b16 %v314
      %v553 = vunpack.c.h.b16 %v314
      %v554 = vunpack.c.l.b16 %v315
      %v555 = vunpack.c.h.b16 %v315
      %v556 = vpack.c.b16 %v526, %v524
      %v557 = vpack.c.b16 %v527, %v525
      %v558 = vpack.c.b16 %v530, %v528
      %v559 = vpack.c.b16 %v531, %v529
      %v560 = vpack.c.b16 %v534, %v532
      %v561 = vpack.c.b16 %v535, %v533
      %v562 = vpack.c.b16 %v538, %v536
      %v563 = vpack.c.b16 %v539, %v537
      %v564 = vpack.c.b16 %v542, %v540
      %v565 = vpack.c.b16 %v543, %v541
      %v566 = vpack.c.b16 %v546, %v544
      %v567 = vpack.c.b16 %v547, %v545
      %v568 = vpack.c.b16 %v550, %v548
      %v569 = vpack.c.b16 %v551, %v549
      %v570 = vpack.c.b16 %v554, %v552
      %v571 = vpack.c.b16 %v555, %v553
      %588 = vmatprep.subr.bf16.mxu0 %v557
      %589 = vmatpush1.bf16.msra.mxu0 %v556
      %590 = vmatprep.subr.bf16.mxu0 %v559
      %591 = vmatpush1.bf16.msra.mxu0 %v558
      %592 = vmatprep.subr.bf16.mxu0 %v561
      %593 = vmatpush1.bf16.msra.mxu0 %v560
      %594 = vmatprep.subr.bf16.mxu0 %v563
      %595 = vmatpush1.bf16.msra.mxu0 %v562
      %596 = vmatprep.subr.bf16.mxu0 %v565
      %597 = vmatpush1.bf16.msra.mxu0 %v564
      %598 = vmatprep.subr.bf16.mxu0 %v567
      %599 = vmatpush1.bf16.msra.mxu0 %v566
      %600 = vmatprep.subr.bf16.mxu0 %v569
      %601 = vmatpush1.bf16.msra.mxu0 %v568
      %602 = vmatprep.subr.bf16.mxu0 %v571
      %603 = vmatpush1.bf16.msra.mxu0 %v570
      %604 = vmatprep.subr.bf16.mxu0 0
      %605 = vmatpush1.bf16.msra.mxu0 0
      %606 = vmatprep.subr.bf16.mxu0 0
      %607 = vmatpush1.bf16.msra.mxu0 0
      %608 = vmatprep.subr.bf16.mxu0 0
      %609 = vmatpush1.bf16.msra.mxu0 0
      %610 = vmatprep.subr.bf16.mxu0 0
      %611 = vmatpush1.bf16.msra.mxu0 0
      %612 = vmatprep.subr.bf16.mxu0 0
      %613 = vmatpush1.bf16.msra.mxu0 0
      %614 = vmatprep.subr.bf16.mxu0 0
      %615 = vmatpush1.bf16.msra.mxu0 0
      %616 = vmatprep.subr.bf16.mxu0 0
      %617 = vmatpush1.bf16.msra.mxu0 0
      %618 = vmatprep.subr.bf16.mxu0 0
      %619 = vmatpush1.bf16.msra.mxu0 0
      %620 = vmatprep.mubr.bf16.mxu0 0
      %621 = vmatmul.mubr.bf16.gmra.mrb[0].mxu0 %v444
      %v622 = vpop.f32.mrb[0].mxu0
      %v623 = vadd.f32 0.0, %v622
      %v624 = vpop.f32.mrb[0].mxu0
      %v625 = vadd.f32 0.0, %v624
      %v626 = vpop.f32.mrb[0].mxu0
      %v627 = vadd.f32 0.0, %v626
      %v628 = vpop.f32.mrb[0].mxu0
      %v629 = vadd.f32 0.0, %v628
      %630 = vmatprep.mubr.bf16.mxu0 0
      %631 = vmatmul.mubr.bf16.gmra.mrb[0].mxu0 %v445
      %v632 = vpop.f32.mrb[0].mxu0
      %v633 = vadd.f32 0.0, %v632
      %v634 = vpop.f32.mrb[0].mxu0
      %v635 = vadd.f32 0.0, %v634
      %v636 = vpop.f32.mrb[0].mxu0
      %v637 = vadd.f32 0.0, %v636
      %v638 = vpop.f32.mrb[0].mxu0
      %v639 = vadd.f32 0.0, %v638
      %640 = vmatprep.mubr.bf16.mxu0 0
      %641 = vmatmul.mubr.bf16.gmra.mrb[0].mxu0 %v446
      %v642 = vpop.f32.mrb[0].mxu0
      %v643 = vadd.f32 0.0, %v642
      %v644 = vpop.f32.mrb[0].mxu0
      %v645 = vadd.f32 0.0, %v644
      %v646 = vpop.f32.mrb[0].mxu0
      %v647 = vadd.f32 0.0, %v646
      %v648 = vpop.f32.mrb[0].mxu0
      %v649 = vadd.f32 0.0, %v648
      %650 = vmatprep.mubr.bf16.mxu0 0
      %651 = vmatmul.mubr.bf16.gmra.mrb[0].mxu0 %v447
      %v652 = vpop.f32.mrb[0].mxu0
      %v653 = vadd.f32 0.0, %v652
      %v654 = vpop.f32.mrb[0].mxu0
      %v655 = vadd.f32 0.0, %v654
      %v656 = vpop.f32.mrb[0].mxu0
      %v657 = vadd.f32 0.0, %v656
      %v658 = vpop.f32.mrb[0].mxu0
      %v659 = vadd.f32 0.0, %v658
      %660 = vmatprep.mubr.bf16.mxu0 0
      %661 = vmatmul.mubr.bf16.gmra.mrb[0].mxu0 %v448
      %v662 = vpop.f32.mrb[0].mxu0
      %v663 = vadd.f32 0.0, %v662
      %v664 = vpop.f32.mrb[0].mxu0
      %v665 = vadd.f32 0.0, %v664
      %v666 = vpop.f32.mrb[0].mxu0
      %v667 = vadd.f32 0.0, %v666
      %v668 = vpop.f32.mrb[0].mxu0
      %v669 = vadd.f32 0.0, %v668
      %670 = vmatprep.mubr.bf16.mxu0 0
      %671 = vmatmul.mubr.bf16.gmra.mrb[0].mxu0 %v449
      %v672 = vpop.f32.mrb[0].mxu0
      %v673 = vadd.f32 0.0, %v672
      %v674 = vpop.f32.mrb[0].mxu0
      %v675 = vadd.f32 0.0, %v674
      %v676 = vpop.f32.mrb[0].mxu0
      %v677 = vadd.f32 0.0, %v676
      %v678 = vpop.f32.mrb[0].mxu0
      %v679 = vadd.f32 0.0, %v678
      %680 = vmatprep.mubr.bf16.mxu0 0
      %681 = vmatmul.mubr.bf16.gmra.mrb[0].mxu0 %v450
      %v682 = vpop.f32.mrb[0].mxu0
      %v683 = vadd.f32 0.0, %v682
      %v684 = vpop.f32.mrb[0].mxu0
      %v685 = vadd.f32 0.0, %v684
      %v686 = vpop.f32.mrb[0].mxu0
      %v687 = vadd.f32 0.0, %v686
      %v688 = vpop.f32.mrb[0].mxu0
      %v689 = vadd.f32 0.0, %v688
      %690 = vmatprep.mubr.bf16.mxu0 0
      %691 = vmatmul.mubr.bf16.gmra.mrb[0].mxu0 %v451
      %v692 = vpop.f32.mrb[0].mxu0
      %v693 = vadd.f32 0.0, %v692
      %v694 = vpop.f32.mrb[0].mxu0
      %v695 = vadd.f32 0.0, %v694
      %v696 = vpop.f32.mrb[0].mxu0
      %v697 = vadd.f32 0.0, %v696
      %v698 = vpop.f32.mrb[0].mxu0
      %v699 = vadd.f32 0.0, %v698
      %700 = vmatprep.mubr.bf16.mxu0 0
      %701 = vmatmul.mubr.bf16.gmra.mrb[0].mxu0 %v452
      %v702 = vpop.f32.mrb[0].mxu0
      %v703 = vadd.f32 0.0, %v702
      %v704 = vpop.f32.mrb[0].mxu0
      %v705 = vadd.f32 0.0, %v704
      %v706 = vpop.f32.mrb[0].mxu0
      %v707 = vadd.f32 0.0, %v706
      %v708 = vpop.f32.mrb[0].mxu0
      %v709 = vadd.f32 0.0, %v708
      %710 = vmatprep.mubr.bf16.mxu0 0
      %711 = vmatmul.mubr.bf16.gmra.mrb[0].mxu0 %v453
      %v712 = vpop.f32.mrb[0].mxu0
      %v713 = vadd.f32 0.0, %v712
      %v714 = vpop.f32.mrb[0].mxu0
      %v715 = vadd.f32 0.0, %v714
      %v716 = vpop.f32.mrb[0].mxu0
      %v717 = vadd.f32 0.0, %v716
      %v718 = vpop.f32.mrb[0].mxu0
      %v719 = vadd.f32 0.0, %v718
      %720 = vmatprep.mubr.bf16.mxu0 0
      %721 = vmatmul.mubr.bf16.gmra.mrb[0].mxu0 %v454
      %v722 = vpop.f32.mrb[0].mxu0
      %v723 = vadd.f32 0.0, %v722
      %v724 = vpop.f32.mrb[0].mxu0
      %v725 = vadd.f32 0.0, %v724
      %v726 = vpop.f32.mrb[0].mxu0
      %v727 = vadd.f32 0.0, %v726
      %v728 = vpop.f32.mrb[0].mxu0
      %v729 = vadd.f32 0.0, %v728
      %730 = vmatprep.mubr.bf16.mxu0 0
      %731 = vmatmul.mubr.bf16.gmra.mrb[0].mxu0 %v455
      %v732 = vpop.f32.mrb[0].mxu0
      %v733 = vadd.f32 0.0, %v732
      %v734 = vpop.f32.mrb[0].mxu0
      %v735 = vadd.f32 0.0, %v734
      %v736 = vpop.f32.mrb[0].mxu0
      %v737 = vadd.f32 0.0, %v736
      %v738 = vpop.f32.mrb[0].mxu0
      %v739 = vadd.f32 0.0, %v738
      %740 = vmatprep.mubr.bf16.mxu0 0
      %741 = vmatmul.mubr.bf16.gmra.mrb[0].mxu0 %v456
      %v742 = vpop.f32.mrb[0].mxu0
      %v743 = vadd.f32 0.0, %v742
      %v744 = vpop.f32.mrb[0].mxu0
      %v745 = vadd.f32 0.0, %v744
      %v746 = vpop.f32.mrb[0].mxu0
      %v747 = vadd.f32 0.0, %v746
      %v748 = vpop.f32.mrb[0].mxu0
      %v749 = vadd.f32 0.0, %v748
      %750 = vmatprep.mubr.bf16.mxu0 0
      %751 = vmatmul.mubr.bf16.gmra.mrb[0].mxu0 %v457
      %v752 = vpop.f32.mrb[0].mxu0
      %v753 = vadd.f32 0.0, %v752
      %v754 = vpop.f32.mrb[0].mxu0
      %v755 = vadd.f32 0.0, %v754
      %v756 = vpop.f32.mrb[0].mxu0
      %v757 = vadd.f32 0.0, %v756
      %v758 = vpop.f32.mrb[0].mxu0
      %v759 = vadd.f32 0.0, %v758
      %760 = vmatprep.mubr.bf16.mxu0 0
      %761 = vmatmul.mubr.bf16.gmra.mrb[0].mxu0 %v458
      %v762 = vpop.f32.mrb[0].mxu0
      %v763 = vadd.f32 0.0, %v762
      %v764 = vpop.f32.mrb[0].mxu0
      %v765 = vadd.f32 0.0, %v764
      %v766 = vpop.f32.mrb[0].mxu0
      %v767 = vadd.f32 0.0, %v766
      %v768 = vpop.f32.mrb[0].mxu0
      %v769 = vadd.f32 0.0, %v768
      %770 = vmatprep.mubr.bf16.mxu0 0
      %771 = vmatmul.mubr.bf16.gmra.mrb[0].mxu0 %v459
      %v772 = vpop.f32.mrb[0].mxu0
      %v773 = vadd.f32 0.0, %v772
      %v774 = vpop.f32.mrb[0].mxu0
      %v775 = vadd.f32 0.0, %v774
      %v776 = vpop.f32.mrb[0].mxu0
      %v777 = vadd.f32 0.0, %v776
      %v778 = vpop.f32.mrb[0].mxu0
      %v779 = vadd.f32 0.0, %v778
      %780 = vmatprep.mubr.bf16.mxu0 0
      %781 = vmatmul.mubr.bf16.gmra.mrb[0].mxu0 %v460
      %v782 = vpop.f32.mrb[0].mxu0
      %v783 = vadd.f32 0.0, %v782
      %v784 = vpop.f32.mrb[0].mxu0
      %v785 = vadd.f32 0.0, %v784
      %v786 = vpop.f32.mrb[0].mxu0
      %v787 = vadd.f32 0.0, %v786
      %v788 = vpop.f32.mrb[0].mxu0
      %v789 = vadd.f32 0.0, %v788
      %790 = vmatprep.mubr.bf16.mxu0 0
      %791 = vmatmul.mubr.bf16.gmra.mrb[0].mxu0 %v461
      %v792 = vpop.f32.mrb[0].mxu0
      %v793 = vadd.f32 0.0, %v792
      %v794 = vpop.f32.mrb[0].mxu0
      %v795 = vadd.f32 0.0, %v794
      %v796 = vpop.f32.mrb[0].mxu0
      %v797 = vadd.f32 0.0, %v796
      %v798 = vpop.f32.mrb[0].mxu0
      %v799 = vadd.f32 0.0, %v798
      %800 = vmatprep.mubr.bf16.mxu0 0
      %801 = vmatmul.mubr.bf16.gmra.mrb[0].mxu0 %v462
      %v802 = vpop.f32.mrb[0].mxu0
      %v803 = vadd.f32 0.0, %v802
      %v804 = vpop.f32.mrb[0].mxu0
      %v805 = vadd.f32 0.0, %v804
      %v806 = vpop.f32.mrb[0].mxu0
      %v807 = vadd.f32 0.0, %v806
      %v808 = vpop.f32.mrb[0].mxu0
      %v809 = vadd.f32 0.0, %v808
      %810 = vmatprep.mubr.bf16.mxu0 0
      %811 = vmatmul.mubr.bf16.gmra.mrb[0].mxu0 %v463
      %v812 = vpop.f32.mrb[0].mxu0
      %v813 = vadd.f32 0.0, %v812
      %v814 = vpop.f32.mrb[0].mxu0
      %v815 = vadd.f32 0.0, %v814
      %v816 = vpop.f32.mrb[0].mxu0
      %v817 = vadd.f32 0.0, %v816
      %v818 = vpop.f32.mrb[0].mxu0
      %v819 = vadd.f32 0.0, %v818
      %820 = vmatprep.mubr.bf16.mxu0 0
      %821 = vmatmul.mubr.bf16.gmra.mrb[0].mxu0 %v464
      %v822 = vpop.f32.mrb[0].mxu0
      %v823 = vadd.f32 0.0, %v822
      %v824 = vpop.f32.mrb[0].mxu0
      %v825 = vadd.f32 0.0, %v824
      %v826 = vpop.f32.mrb[0].mxu0
      %v827 = vadd.f32 0.0, %v826
      %v828 = vpop.f32.mrb[0].mxu0
      %v829 = vadd.f32 0.0, %v828
      %830 = vmatprep.mubr.bf16.mxu0 0
      %831 = vmatmul.mubr.bf16.gmra.mrb[0].mxu0 %v465
      %v832 = vpop.f32.mrb[0].mxu0
      %v833 = vadd.f32 0.0, %v832
      %v834 = vpop.f32.mrb[0].mxu0
      %v835 = vadd.f32 0.0, %v834
      %v836 = vpop.f32.mrb[0].mxu0
      %v837 = vadd.f32 0.0, %v836
      %v838 = vpop.f32.mrb[0].mxu0
      %v839 = vadd.f32 0.0, %v838
      %840 = vmatprep.mubr.bf16.mxu0 0
      %841 = vmatmul.mubr.bf16.gmra.mrb[0].mxu0 %v466
      %v842 = vpop.f32.mrb[0].mxu0
      %v843 = vadd.f32 0.0, %v842
      %v844 = vpop.f32.mrb[0].mxu0
      %v845 = vadd.f32 0.0, %v844
      %v846 = vpop.f32.mrb[0].mxu0
      %v847 = vadd.f32 0.0, %v846
      %v848 = vpop.f32.mrb[0].mxu0
      %v849 = vadd.f32 0.0, %v848
      %850 = vmatprep.mubr.bf16.mxu0 0
      %851 = vmatmul.mubr.bf16.gmra.mrb[0].mxu0 %v467
      %v852 = vpop.f32.mrb[0].mxu0
      %v853 = vadd.f32 0.0, %v852
      %v854 = vpop.f32.mrb[0].mxu0
      %v855 = vadd.f32 0.0, %v854
      %v856 = vpop.f32.mrb[0].mxu0
      %v857 = vadd.f32 0.0, %v856
      %v858 = vpop.f32.mrb[0].mxu0
      %v859 = vadd.f32 0.0, %v858
      %860 = vmatprep.mubr.bf16.mxu0 0
      %861 = vmatmul.mubr.bf16.gmra.mrb[0].mxu0 %v468
      %v862 = vpop.f32.mrb[0].mxu0
      %v863 = vadd.f32 0.0, %v862
      %v864 = vpop.f32.mrb[0].mxu0
      %v865 = vadd.f32 0.0, %v864
      %v866 = vpop.f32.mrb[0].mxu0
      %v867 = vadd.f32 0.0, %v866
      %v868 = vpop.f32.mrb[0].mxu0
      %v869 = vadd.f32 0.0, %v868
      %870 = vmatprep.mubr.bf16.mxu0 0
      %871 = vmatmul.mubr.bf16.gmra.mrb[0].mxu0 %v469
      %v872 = vpop.f32.mrb[0].mxu0
      %v873 = vadd.f32 0.0, %v872
      %v874 = vpop.f32.mrb[0].mxu0
      %v875 = vadd.f32 0.0, %v874
      %v876 = vpop.f32.mrb[0].mxu0
      %v877 = vadd.f32 0.0, %v876
      %v878 = vpop.f32.mrb[0].mxu0
      %v879 = vadd.f32 0.0, %v878
      %880 = vmatprep.mubr.bf16.mxu0 0
      %881 = vmatmul.mubr.bf16.gmra.mrb[0].mxu0 %v470
      %v882 = vpop.f32.mrb[0].mxu0
      %v883 = vadd.f32 0.0, %v882
      %v884 = vpop.f32.mrb[0].mxu0
      %v885 = vadd.f32 0.0, %v884
      %v886 = vpop.f32.mrb[0].mxu0
      %v887 = vadd.f32 0.0, %v886
      %v888 = vpop.f32.mrb[0].mxu0
      %v889 = vadd.f32 0.0, %v888
      %890 = vmatprep.mubr.bf16.mxu0 0
      %891 = vmatmul.mubr.bf16.gmra.mrb[0].mxu0 %v471
      %v892 = vpop.f32.mrb[0].mxu0
      %v893 = vadd.f32 0.0, %v892
      %v894 = vpop.f32.mrb[0].mxu0
      %v895 = vadd.f32 0.0, %v894
      %v896 = vpop.f32.mrb[0].mxu0
      %v897 = vadd.f32 0.0, %v896
      %v898 = vpop.f32.mrb[0].mxu0
      %v899 = vadd.f32 0.0, %v898
      %900 = vmatprep.mubr.bf16.mxu0 0
      %901 = vmatmul.mubr.bf16.gmra.mrb[0].mxu0 %v472
      %v902 = vpop.f32.mrb[0].mxu0
      %v903 = vadd.f32 0.0, %v902
      %v904 = vpop.f32.mrb[0].mxu0
      %v905 = vadd.f32 0.0, %v904
      %v906 = vpop.f32.mrb[0].mxu0
      %v907 = vadd.f32 0.0, %v906
      %v908 = vpop.f32.mrb[0].mxu0
      %v909 = vadd.f32 0.0, %v908
      %910 = vmatprep.mubr.bf16.mxu0 0
      %911 = vmatmul.mubr.bf16.gmra.mrb[0].mxu0 %v473
      %v912 = vpop.f32.mrb[0].mxu0
      %v913 = vadd.f32 0.0, %v912
      %v914 = vpop.f32.mrb[0].mxu0
      %v915 = vadd.f32 0.0, %v914
      %v916 = vpop.f32.mrb[0].mxu0
      %v917 = vadd.f32 0.0, %v916
      %v918 = vpop.f32.mrb[0].mxu0
      %v919 = vadd.f32 0.0, %v918
      %920 = vmatprep.mubr.bf16.mxu0 0
      %921 = vmatmul.mubr.bf16.gmra.mrb[0].mxu0 %v474
      %v922 = vpop.f32.mrb[0].mxu0
      %v923 = vadd.f32 0.0, %v922
      %v924 = vpop.f32.mrb[0].mxu0
      %v925 = vadd.f32 0.0, %v924
      %v926 = vpop.f32.mrb[0].mxu0
      %v927 = vadd.f32 0.0, %v926
      %v928 = vpop.f32.mrb[0].mxu0
      %v929 = vadd.f32 0.0, %v928
      %930 = vmatprep.mubr.bf16.mxu0 0
      %931 = vmatmul.mubr.bf16.gmra.mrb[0].mxu0 %v475
      %v932 = vpop.f32.mrb[0].mxu0
      %v933 = vadd.f32 0.0, %v932
      %v934 = vpop.f32.mrb[0].mxu0
      %v935 = vadd.f32 0.0, %v934
      %v936 = vpop.f32.mrb[0].mxu0
      %v937 = vadd.f32 0.0, %v936
      %v938 = vpop.f32.mrb[0].mxu0
      %v939 = vadd.f32 0.0, %v938
      %940 = vdwg.mxu0
      %v941 = vrot.slane %v625, 1
      %v942 = vrot.slane %v629, 1
      %v943 = vrot.slane %v635, 1
      %v944 = vrot.slane %v639, 1
      %v945 = vrot.slane %v645, 1
      %v946 = vrot.slane %v649, 1
      %v947 = vrot.slane %v655, 1
      %v948 = vrot.slane %v659, 1
      %v949 = vrot.slane %v665, 1
      %v950 = vrot.slane %v669, 1
      %v951 = vrot.slane %v675, 1
      %v952 = vrot.slane %v679, 1
      %v953 = vrot.slane %v685, 1
      %v954 = vrot.slane %v689, 1
      %v955 = vrot.slane %v695, 1
      %v956 = vrot.slane %v699, 1
      %v957 = vrot.slane %v705, 1
      %v958 = vrot.slane %v709, 1
      %v959 = vrot.slane %v715, 1
      %v960 = vrot.slane %v719, 1
      %v961 = vrot.slane %v725, 1
      %v962 = vrot.slane %v729, 1
      %v963 = vrot.slane %v735, 1
      %v964 = vrot.slane %v739, 1
      %v965 = vrot.slane %v745, 1
      %v966 = vrot.slane %v749, 1
      %v967 = vrot.slane %v755, 1
      %v968 = vrot.slane %v759, 1
      %v969 = vrot.slane %v765, 1
      %v970 = vrot.slane %v769, 1
      %v971 = vrot.slane %v775, 1
      %v972 = vrot.slane %v779, 1
      %v973 = vrot.slane %v785, 1
      %v974 = vrot.slane %v789, 1
      %v975 = vrot.slane %v795, 1
      %v976 = vrot.slane %v799, 1
      %v977 = vrot.slane %v805, 1
      %v978 = vrot.slane %v809, 1
      %v979 = vrot.slane %v815, 1
      %v980 = vrot.slane %v819, 1
      %v981 = vrot.slane %v825, 1
      %v982 = vrot.slane %v829, 1
      %v983 = vrot.slane %v835, 1
      %v984 = vrot.slane %v839, 1
      %v985 = vrot.slane %v845, 1
      %v986 = vrot.slane %v849, 1
      %v987 = vrot.slane %v855, 1
      %v988 = vrot.slane %v859, 1
      %v989 = vrot.slane %v865, 1
      %v990 = vrot.slane %v869, 1
      %v991 = vrot.slane %v875, 1
      %v992 = vrot.slane %v879, 1
      %v993 = vrot.slane %v885, 1
      %v994 = vrot.slane %v889, 1
      %v995 = vrot.slane %v895, 1
      %v996 = vrot.slane %v899, 1
      %v997 = vrot.slane %v905, 1
      %v998 = vrot.slane %v909, 1
      %v999 = vrot.slane %v915, 1
      %v1000 = vrot.slane %v919, 1
      %v1001 = vrot.slane %v925, 1
      %v1002 = vrot.slane %v929, 1
      %v1003 = vrot.slane %v935, 1
      %v1004 = vrot.slane %v939, 1
      %vm1005 = vcmp.lt.s32.totalorder %v298, 7
      %v1006 = vsel %vm1005, %v1003, %v1004
      %v1007 = vsel %vm1005, %v1002, %v1003
      %v1008 = vsel %vm1005, %v1001, %v1002
      %v1009 = vsel %vm1005, %v1000, %v1001
      %v1010 = vsel %vm1005, %v999, %v1000
      %v1011 = vsel %vm1005, %v998, %v999
      %v1012 = vsel %vm1005, %v997, %v998
      %v1013 = vsel %vm1005, %v996, %v997
      %v1014 = vsel %vm1005, %v995, %v996
      %v1015 = vsel %vm1005, %v994, %v995
      %v1016 = vsel %vm1005, %v993, %v994
      %v1017 = vsel %vm1005, %v992, %v993
      %v1018 = vsel %vm1005, %v991, %v992
      %v1019 = vsel %vm1005, %v990, %v991
      %v1020 = vsel %vm1005, %v989, %v990
      %v1021 = vsel %vm1005, %v988, %v989
      %v1022 = vsel %vm1005, %v987, %v988
      %v1023 = vsel %vm1005, %v986, %v987
      %v1024 = vsel %vm1005, %v985, %v986
      %v1025 = vsel %vm1005, %v984, %v985
      %v1026 = vsel %vm1005, %v983, %v984
      %v1027 = vsel %vm1005, %v982, %v983
      %v1028 = vsel %vm1005, %v981, %v982
      %v1029 = vsel %vm1005, %v980, %v981
      %v1030 = vsel %vm1005, %v979, %v980
      %v1031 = vsel %vm1005, %v978, %v979
      %v1032 = vsel %vm1005, %v977, %v978
      %v1033 = vsel %vm1005, %v976, %v977
      %v1034 = vsel %vm1005, %v975, %v976
      %v1035 = vsel %vm1005, %v974, %v975
      %v1036 = vsel %vm1005, %v973, %v974
      %v1037 = vsel %vm1005, %v972, %v973
      %v1038 = vsel %vm1005, %v971, %v972
      %v1039 = vsel %vm1005, %v970, %v971
      %v1040 = vsel %vm1005, %v969, %v970
      %v1041 = vsel %vm1005, %v968, %v969
      %v1042 = vsel %vm1005, %v967, %v968
      %v1043 = vsel %vm1005, %v966, %v967
      %v1044 = vsel %vm1005, %v965, %v966
      %v1045 = vsel %vm1005, %v964, %v965
      %v1046 = vsel %vm1005, %v963, %v964
      %v1047 = vsel %vm1005, %v962, %v963
      %v1048 = vsel %vm1005, %v961, %v962
      %v1049 = vsel %vm1005, %v960, %v961
      %v1050 = vsel %vm1005, %v959, %v960
      %v1051 = vsel %vm1005, %v958, %v959
      %v1052 = vsel %vm1005, %v957, %v958
      %v1053 = vsel %vm1005, %v956, %v957
      %v1054 = vsel %vm1005, %v955, %v956
      %v1055 = vsel %vm1005, %v954, %v955
      %v1056 = vsel %vm1005, %v953, %v954
      %v1057 = vsel %vm1005, %v952, %v953
      %v1058 = vsel %vm1005, %v951, %v952
      %v1059 = vsel %vm1005, %v950, %v951
      %v1060 = vsel %vm1005, %v949, %v950
      %v1061 = vsel %vm1005, %v948, %v949
      %v1062 = vsel %vm1005, %v947, %v948
      %v1063 = vsel %vm1005, %v946, %v947
      %v1064 = vsel %vm1005, %v945, %v946
      %v1065 = vsel %vm1005, %v944, %v945
      %v1066 = vsel %vm1005, %v943, %v944
      %v1067 = vsel %vm1005, %v942, %v943
      %v1068 = vsel %vm1005, %v941, %v942
      %v1069 = vsel %vm1005, %v1004, %v941
      %v1070 = vadd.f32 %v623, %v1068
      %v1071 = vadd.f32 %v627, %v1067
      %v1072 = vadd.f32 %v633, %v1066
      %v1073 = vadd.f32 %v637, %v1065
      %v1074 = vadd.f32 %v643, %v1064
      %v1075 = vadd.f32 %v647, %v1063
      %v1076 = vadd.f32 %v653, %v1062
      %v1077 = vadd.f32 %v657, %v1061
      %v1078 = vadd.f32 %v663, %v1060
      %v1079 = vadd.f32 %v667, %v1059
      %v1080 = vadd.f32 %v673, %v1058
      %v1081 = vadd.f32 %v677, %v1057
      %v1082 = vadd.f32 %v683, %v1056
      %v1083 = vadd.f32 %v687, %v1055
      %v1084 = vadd.f32 %v693, %v1054
      %v1085 = vadd.f32 %v697, %v1053
      %v1086 = vadd.f32 %v703, %v1052
      %v1087 = vadd.f32 %v707, %v1051
      %v1088 = vadd.f32 %v713, %v1050
      %v1089 = vadd.f32 %v717, %v1049
      %v1090 = vadd.f32 %v723, %v1048
      %v1091 = vadd.f32 %v727, %v1047
      %v1092 = vadd.f32 %v733, %v1046
      %v1093 = vadd.f32 %v737, %v1045
      %v1094 = vadd.f32 %v743, %v1044
      %v1095 = vadd.f32 %v747, %v1043
      %v1096 = vadd.f32 %v753, %v1042
      %v1097 = vadd.f32 %v757, %v1041
      %v1098 = vadd.f32 %v763, %v1040
      %v1099 = vadd.f32 %v767, %v1039
      %v1100 = vadd.f32 %v773, %v1038
      %v1101 = vadd.f32 %v777, %v1037
      %v1102 = vadd.f32 %v783, %v1036
      %v1103 = vadd.f32 %v787, %v1035
      %v1104 = vadd.f32 %v793, %v1034
      %v1105 = vadd.f32 %v797, %v1033
      %v1106 = vadd.f32 %v803, %v1032
      %v1107 = vadd.f32 %v807, %v1031
      %v1108 = vadd.f32 %v813, %v1030
      %v1109 = vadd.f32 %v817, %v1029
      %v1110 = vadd.f32 %v823, %v1028
      %v1111 = vadd.f32 %v827, %v1027
      %v1112 = vadd.f32 %v833, %v1026
      %v1113 = vadd.f32 %v837, %v1025
      %v1114 = vadd.f32 %v843, %v1024
      %v1115 = vadd.f32 %v847, %v1023
      %v1116 = vadd.f32 %v853, %v1022
      %v1117 = vadd.f32 %v857, %v1021
      %v1118 = vadd.f32 %v863, %v1020
      %v1119 = vadd.f32 %v867, %v1019
      %v1120 = vadd.f32 %v873, %v1018
      %v1121 = vadd.f32 %v877, %v1017
      %v1122 = vadd.f32 %v883, %v1016
      %v1123 = vadd.f32 %v887, %v1015
      %v1124 = vadd.f32 %v893, %v1014
      %v1125 = vadd.f32 %v897, %v1013
      %v1126 = vadd.f32 %v903, %v1012
      %v1127 = vadd.f32 %v907, %v1011
      %v1128 = vadd.f32 %v913, %v1010
      %v1129 = vadd.f32 %v917, %v1009
      %v1130 = vadd.f32 %v923, %v1008
      %v1131 = vadd.f32 %v927, %v1007
      %v1132 = vadd.f32 %v933, %v1006
      %v1133 = vadd.f32 %v937, %v1069
      %v1135 = vlaneseq
      %v1136 = vshrl.u32 %v1135, 7
      %v1137 = vsub.s32 0, %v1136
      %v1138 = vrot.slane %v296, %v1137
      %v1140 = vadd.f32 %v1070, %v1138
      %v1141 = vadd.f32 %v1071, %v1138
      %v1142 = vadd.f32 %v1072, %v1138
      %v1143 = vadd.f32 %v1073, %v1138
      %v1144 = vadd.f32 %v1074, %v1138
      %v1145 = vadd.f32 %v1075, %v1138
      %v1146 = vadd.f32 %v1076, %v1138
      %v1147 = vadd.f32 %v1077, %v1138
      %v1148 = vadd.f32 %v1078, %v1138
      %v1149 = vadd.f32 %v1079, %v1138
      %v1150 = vadd.f32 %v1080, %v1138
      %v1151 = vadd.f32 %v1081, %v1138
      %v1152 = vadd.f32 %v1082, %v1138
      %v1153 = vadd.f32 %v1083, %v1138
      %v1154 = vadd.f32 %v1084, %v1138
      %v1155 = vadd.f32 %v1085, %v1138
      %v1156 = vadd.f32 %v1086, %v1138
      %v1157 = vadd.f32 %v1087, %v1138
      %v1158 = vadd.f32 %v1088, %v1138
      %v1159 = vadd.f32 %v1089, %v1138
      %v1160 = vadd.f32 %v1090, %v1138
      %v1161 = vadd.f32 %v1091, %v1138
      %v1162 = vadd.f32 %v1092, %v1138
      %v1163 = vadd.f32 %v1093, %v1138
      %v1164 = vadd.f32 %v1094, %v1138
      %v1165 = vadd.f32 %v1095, %v1138
      %v1166 = vadd.f32 %v1096, %v1138
      %v1167 = vadd.f32 %v1097, %v1138
      %v1168 = vadd.f32 %v1098, %v1138
      %v1169 = vadd.f32 %v1099, %v1138
      %v1170 = vadd.f32 %v1100, %v1138
      %v1171 = vadd.f32 %v1101, %v1138
      %v1172 = vadd.f32 %v1102, %v1138
      %v1173 = vadd.f32 %v1103, %v1138
      %v1174 = vadd.f32 %v1104, %v1138
      %v1175 = vadd.f32 %v1105, %v1138
      %v1176 = vadd.f32 %v1106, %v1138
      %v1177 = vadd.f32 %v1107, %v1138
      %v1178 = vadd.f32 %v1108, %v1138
      %v1179 = vadd.f32 %v1109, %v1138
      %v1180 = vadd.f32 %v1110, %v1138
      %v1181 = vadd.f32 %v1111, %v1138
      %v1182 = vadd.f32 %v1112, %v1138
      %v1183 = vadd.f32 %v1113, %v1138
      %v1184 = vadd.f32 %v1114, %v1138
      %v1185 = vadd.f32 %v1115, %v1138
      %v1186 = vadd.f32 %v1116, %v1138
      %v1187 = vadd.f32 %v1117, %v1138
      %v1188 = vadd.f32 %v1118, %v1138
      %v1189 = vadd.f32 %v1119, %v1138
      %v1190 = vadd.f32 %v1120, %v1138
      %v1191 = vadd.f32 %v1121, %v1138
      %v1192 = vadd.f32 %v1122, %v1138
      %v1193 = vadd.f32 %v1123, %v1138
      %v1194 = vadd.f32 %v1124, %v1138
      %v1195 = vadd.f32 %v1125, %v1138
      %v1196 = vadd.f32 %v1126, %v1138
      %v1197 = vadd.f32 %v1127, %v1138
      %v1198 = vadd.f32 %v1128, %v1138
      %v1199 = vadd.f32 %v1129, %v1138
      %v1200 = vadd.f32 %v1130, %v1138
      %v1201 = vadd.f32 %v1131, %v1138
      %v1202 = vadd.f32 %v1132, %v1138
      %v1203 = vadd.f32 %v1133, %v1138
      %v1204 = vmax.f32 %v1140, 0.0
      %v1205 = vmax.f32 %v1141, 0.0
      %v1206 = vmax.f32 %v1142, 0.0
      %v1207 = vmax.f32 %v1143, 0.0
      %v1208 = vmax.f32 %v1144, 0.0
      %v1209 = vmax.f32 %v1145, 0.0
      %v1210 = vmax.f32 %v1146, 0.0
      %v1211 = vmax.f32 %v1147, 0.0
      %v1212 = vmax.f32 %v1148, 0.0
      %v1213 = vmax.f32 %v1149, 0.0
      %v1214 = vmax.f32 %v1150, 0.0
      %v1215 = vmax.f32 %v1151, 0.0
      %v1216 = vmax.f32 %v1152, 0.0
      %v1217 = vmax.f32 %v1153, 0.0
      %v1218 = vmax.f32 %v1154, 0.0
      %v1219 = vmax.f32 %v1155, 0.0
      %v1220 = vmax.f32 %v1156, 0.0
      %v1221 = vmax.f32 %v1157, 0.0
      %v1222 = vmax.f32 %v1158, 0.0
      %v1223 = vmax.f32 %v1159, 0.0
      %v1224 = vmax.f32 %v1160, 0.0
      %v1225 = vmax.f32 %v1161, 0.0
      %v1226 = vmax.f32 %v1162, 0.0
      %v1227 = vmax.f32 %v1163, 0.0
      %v1228 = vmax.f32 %v1164, 0.0
      %v1229 = vmax.f32 %v1165, 0.0
      %v1230 = vmax.f32 %v1166, 0.0
      %v1231 = vmax.f32 %v1167, 0.0
      %v1232 = vmax.f32 %v1168, 0.0
      %v1233 = vmax.f32 %v1169, 0.0
      %v1234 = vmax.f32 %v1170, 0.0
      %v1235 = vmax.f32 %v1171, 0.0
      %v1236 = vmax.f32 %v1172, 0.0
      %v1237 = vmax.f32 %v1173, 0.0
      %v1238 = vmax.f32 %v1174, 0.0
      %v1239 = vmax.f32 %v1175, 0.0
      %v1240 = vmax.f32 %v1176, 0.0
      %v1241 = vmax.f32 %v1177, 0.0
      %v1242 = vmax.f32 %v1178, 0.0
      %v1243 = vmax.f32 %v1179, 0.0
      %v1244 = vmax.f32 %v1180, 0.0
      %v1245 = vmax.f32 %v1181, 0.0
      %v1246 = vmax.f32 %v1182, 0.0
      %v1247 = vmax.f32 %v1183, 0.0
      %v1248 = vmax.f32 %v1184, 0.0
      %v1249 = vmax.f32 %v1185, 0.0
      %v1250 = vmax.f32 %v1186, 0.0
      %v1251 = vmax.f32 %v1187, 0.0
      %v1252 = vmax.f32 %v1188, 0.0
      %v1253 = vmax.f32 %v1189, 0.0
      %v1254 = vmax.f32 %v1190, 0.0
      %v1255 = vmax.f32 %v1191, 0.0
      %v1256 = vmax.f32 %v1192, 0.0
      %v1257 = vmax.f32 %v1193, 0.0
      %v1258 = vmax.f32 %v1194, 0.0
      %v1259 = vmax.f32 %v1195, 0.0
      %v1260 = vmax.f32 %v1196, 0.0
      %v1261 = vmax.f32 %v1197, 0.0
      %v1262 = vmax.f32 %v1198, 0.0
      %v1263 = vmax.f32 %v1199, 0.0
      %v1264 = vmax.f32 %v1200, 0.0
      %v1265 = vmax.f32 %v1201, 0.0
      %v1266 = vmax.f32 %v1202, 0.0
      %v1267 = vmax.f32 %v1203, 0.0
      %vm1268 = vcmp.lt.s32.totalorder %v298, 15
      %vm1269 = vcmp.lt.s32.totalorder %v299, 15
      %v1270 = vsel %vm1268, 1, 0
      %v1271 = vsel %vm1269, 1, 0
      %vm1272 = vcmp.eq.s32.totalorder %v1270, 1
      %vm1273 = vcmp.eq.s32.totalorder %v1271, 1
      %v1274 = vsel %vm1272, %v1204, 0.0
      %v1275 = vsel %vm1273, %v1205, 0.0
      %v1276 = vsel %vm1272, %v1206, 0.0
      %v1277 = vsel %vm1273, %v1207, 0.0
      %v1278 = vsel %vm1272, %v1208, 0.0
      %v1279 = vsel %vm1273, %v1209, 0.0
      %v1280 = vsel %vm1272, %v1210, 0.0
      %v1281 = vsel %vm1273, %v1211, 0.0
      %v1282 = vsel %vm1272, %v1212, 0.0
      %v1283 = vsel %vm1273, %v1213, 0.0
      %v1284 = vsel %vm1272, %v1214, 0.0
      %v1285 = vsel %vm1273, %v1215, 0.0
      %v1286 = vsel %vm1272, %v1216, 0.0
      %v1287 = vsel %vm1273, %v1217, 0.0
      %v1288 = vsel %vm1272, %v1218, 0.0
      %v1289 = vsel %vm1273, %v1219, 0.0
      %v1290 = vsel %vm1272, %v1220, 0.0
      %v1291 = vsel %vm1273, %v1221, 0.0
      %v1292 = vsel %vm1272, %v1222, 0.0
      %v1293 = vsel %vm1273, %v1223, 0.0
      %v1294 = vsel %vm1272, %v1224, 0.0
      %v1295 = vsel %vm1273, %v1225, 0.0
      %v1296 = vsel %vm1272, %v1226, 0.0
      %v1297 = vsel %vm1273, %v1227, 0.0
      %v1298 = vsel %vm1272, %v1228, 0.0
      %v1299 = vsel %vm1273, %v1229, 0.0
      %v1300 = vsel %vm1272, %v1230, 0.0
      %v1301 = vsel %vm1273, %v1231, 0.0
      %v1302 = vsel %vm1272, %v1232, 0.0
      %v1303 = vsel %vm1273, %v1233, 0.0
      %v1304 = vsel %vm1272, %v1234, 0.0
      %v1305 = vsel %vm1273, %v1235, 0.0
      %v1306 = vsel %vm1272, %v1236, 0.0
      %v1307 = vsel %vm1273, %v1237, 0.0
      %v1308 = vsel %vm1272, %v1238, 0.0
      %v1309 = vsel %vm1273, %v1239, 0.0
      %v1310 = vsel %vm1272, %v1240, 0.0
      %v1311 = vsel %vm1273, %v1241, 0.0
      %v1312 = vsel %vm1272, %v1242, 0.0
      %v1313 = vsel %vm1273, %v1243, 0.0
      %v1314 = vsel %vm1272, %v1244, 0.0
      %v1315 = vsel %vm1273, %v1245, 0.0
      %v1316 = vsel %vm1272, %v1246, 0.0
      %v1317 = vsel %vm1273, %v1247, 0.0
      %v1318 = vsel %vm1272, %v1248, 0.0
      %v1319 = vsel %vm1273, %v1249, 0.0
      %v1320 = vsel %vm1272, %v1250, 0.0
      %v1321 = vsel %vm1273, %v1251, 0.0
      %v1322 = vsel %vm1272, %v1252, 0.0
      %v1323 = vsel %vm1273, %v1253, 0.0
      %v1324 = vsel %vm1272, %v1254, 0.0
      %v1325 = vsel %vm1273, %v1255, 0.0
      %v1326 = vsel %vm1272, %v1256, 0.0
      %v1327 = vsel %vm1273, %v1257, 0.0
      %v1328 = vsel %vm1272, %v1258, 0.0
      %v1329 = vsel %vm1273, %v1259, 0.0
      %v1330 = vsel %vm1272, %v1260, 0.0
      %v1331 = vsel %vm1273, %v1261, 0.0
      %v1332 = vsel %vm1272, %v1262, 0.0
      %v1333 = vsel %vm1273, %v1263, 0.0
      %v1334 = vsel %vm1272, %v1264, 0.0
      %v1335 = vsel %vm1273, %v1265, 0.0
      %v1336 = vsel %vm1272, %v1266, 0.0
      %v1337 = vsel %vm1273, %v1267, 0.0
      %v1338 = vmax.f32 %v1274, %v1275
      %v1339 = vrot.slane %v1338, 4
      %v1340 = vmax.f32 %v1338, %v1339
      %v1341 = vrot.slane %v1340, 2
      %v1342 = vmax.f32 %v1340, %v1341
      %v1343 = vrot.slane %v1342, 1
      %v1344 = vmax.f32 %v1342, %v1343
      %v1345 = vmax.f32 %v1276, %v1277
      %v1346 = vrot.slane %v1345, 4
      %v1347 = vmax.f32 %v1345, %v1346
      %v1348 = vrot.slane %v1347, 2
      %v1349 = vmax.f32 %v1347, %v1348
      %v1350 = vrot.slane %v1349, 1
      %v1351 = vmax.f32 %v1349, %v1350
      %v1352 = vmax.f32 %v1278, %v1279
      %v1353 = vrot.slane %v1352, 4
      %v1354 = vmax.f32 %v1352, %v1353
      %v1355 = vrot.slane %v1354, 2
      %v1356 = vmax.f32 %v1354, %v1355
      %v1357 = vrot.slane %v1356, 1
      %v1358 = vmax.f32 %v1356, %v1357
      %v1359 = vmax.f32 %v1280, %v1281
      %v1360 = vrot.slane %v1359, 4
      %v1361 = vmax.f32 %v1359, %v1360
      %v1362 = vrot.slane %v1361, 2
      %v1363 = vmax.f32 %v1361, %v1362
      %v1364 = vrot.slane %v1363, 1
      %v1365 = vmax.f32 %v1363, %v1364
      %v1366 = vmax.f32 %v1282, %v1283
      %v1367 = vrot.slane %v1366, 4
      %v1368 = vmax.f32 %v1366, %v1367
      %v1369 = vrot.slane %v1368, 2
      %v1370 = vmax.f32 %v1368, %v1369
      %v1371 = vrot.slane %v1370, 1
      %v1372 = vmax.f32 %v1370, %v1371
      %v1373 = vmax.f32 %v1284, %v1285
      %v1374 = vrot.slane %v1373, 4
      %v1375 = vmax.f32 %v1373, %v1374
      %v1376 = vrot.slane %v1375, 2
      %v1377 = vmax.f32 %v1375, %v1376
      %v1378 = vrot.slane %v1377, 1
      %v1379 = vmax.f32 %v1377, %v1378
      %v1380 = vmax.f32 %v1286, %v1287
      %v1381 = vrot.slane %v1380, 4
      %v1382 = vmax.f32 %v1380, %v1381
      %v1383 = vrot.slane %v1382, 2
      %v1384 = vmax.f32 %v1382, %v1383
      %v1385 = vrot.slane %v1384, 1
      %v1386 = vmax.f32 %v1384, %v1385
      %v1387 = vmax.f32 %v1288, %v1289
      %v1388 = vrot.slane %v1387, 4
      %v1389 = vmax.f32 %v1387, %v1388
      %v1390 = vrot.slane %v1389, 2
      %v1391 = vmax.f32 %v1389, %v1390
      %v1392 = vrot.slane %v1391, 1
      %v1393 = vmax.f32 %v1391, %v1392
      %v1394 = vmax.f32 %v1290, %v1291
      %v1395 = vrot.slane %v1394, 4
      %v1396 = vmax.f32 %v1394, %v1395
      %v1397 = vrot.slane %v1396, 2
      %v1398 = vmax.f32 %v1396, %v1397
      %v1399 = vrot.slane %v1398, 1
      %v1400 = vmax.f32 %v1398, %v1399
      %v1401 = vmax.f32 %v1292, %v1293
      %v1402 = vrot.slane %v1401, 4
      %v1403 = vmax.f32 %v1401, %v1402
      %v1404 = vrot.slane %v1403, 2
      %v1405 = vmax.f32 %v1403, %v1404
      %v1406 = vrot.slane %v1405, 1
      %v1407 = vmax.f32 %v1405, %v1406
      %v1408 = vmax.f32 %v1294, %v1295
      %v1409 = vrot.slane %v1408, 4
      %v1410 = vmax.f32 %v1408, %v1409
      %v1411 = vrot.slane %v1410, 2
      %v1412 = vmax.f32 %v1410, %v1411
      %v1413 = vrot.slane %v1412, 1
      %v1414 = vmax.f32 %v1412, %v1413
      %v1415 = vmax.f32 %v1296, %v1297
      %v1416 = vrot.slane %v1415, 4
      %v1417 = vmax.f32 %v1415, %v1416
      %v1418 = vrot.slane %v1417, 2
      %v1419 = vmax.f32 %v1417, %v1418
      %v1420 = vrot.slane %v1419, 1
      %v1421 = vmax.f32 %v1419, %v1420
      %v1422 = vmax.f32 %v1298, %v1299
      %v1423 = vrot.slane %v1422, 4
      %v1424 = vmax.f32 %v1422, %v1423
      %v1425 = vrot.slane %v1424, 2
      %v1426 = vmax.f32 %v1424, %v1425
      %v1427 = vrot.slane %v1426, 1
      %v1428 = vmax.f32 %v1426, %v1427
      %v1429 = vmax.f32 %v1300, %v1301
      %v1430 = vrot.slane %v1429, 4
      %v1431 = vmax.f32 %v1429, %v1430
      %v1432 = vrot.slane %v1431, 2
      %v1433 = vmax.f32 %v1431, %v1432
      %v1434 = vrot.slane %v1433, 1
      %v1435 = vmax.f32 %v1433, %v1434
      %v1436 = vmax.f32 %v1302, %v1303
      %v1437 = vrot.slane %v1436, 4
      %v1438 = vmax.f32 %v1436, %v1437
      %v1439 = vrot.slane %v1438, 2
      %v1440 = vmax.f32 %v1438, %v1439
      %v1441 = vrot.slane %v1440, 1
      %v1442 = vmax.f32 %v1440, %v1441
      %v1443 = vmax.f32 %v1304, %v1305
      %v1444 = vrot.slane %v1443, 4
      %v1445 = vmax.f32 %v1443, %v1444
      %v1446 = vrot.slane %v1445, 2
      %v1447 = vmax.f32 %v1445, %v1446
      %v1448 = vrot.slane %v1447, 1
      %v1449 = vmax.f32 %v1447, %v1448
      %v1450 = vmax.f32 %v1306, %v1307
      %v1451 = vrot.slane %v1450, 4
      %v1452 = vmax.f32 %v1450, %v1451
      %v1453 = vrot.slane %v1452, 2
      %v1454 = vmax.f32 %v1452, %v1453
      %v1455 = vrot.slane %v1454, 1
      %v1456 = vmax.f32 %v1454, %v1455
      %v1457 = vmax.f32 %v1308, %v1309
      %v1458 = vrot.slane %v1457, 4
      %v1459 = vmax.f32 %v1457, %v1458
      %v1460 = vrot.slane %v1459, 2
      %v1461 = vmax.f32 %v1459, %v1460
      %v1462 = vrot.slane %v1461, 1
      %v1463 = vmax.f32 %v1461, %v1462
      %v1464 = vmax.f32 %v1310, %v1311
      %v1465 = vrot.slane %v1464, 4
      %v1466 = vmax.f32 %v1464, %v1465
      %v1467 = vrot.slane %v1466, 2
      %v1468 = vmax.f32 %v1466, %v1467
      %v1469 = vrot.slane %v1468, 1
      %v1470 = vmax.f32 %v1468, %v1469
      %v1471 = vmax.f32 %v1312, %v1313
      %v1472 = vrot.slane %v1471, 4
      %v1473 = vmax.f32 %v1471, %v1472
      %v1474 = vrot.slane %v1473, 2
      %v1475 = vmax.f32 %v1473, %v1474
      %v1476 = vrot.slane %v1475, 1
      %v1477 = vmax.f32 %v1475, %v1476
      %v1478 = vmax.f32 %v1314, %v1315
      %v1479 = vrot.slane %v1478, 4
      %v1480 = vmax.f32 %v1478, %v1479
      %v1481 = vrot.slane %v1480, 2
      %v1482 = vmax.f32 %v1480, %v1481
      %v1483 = vrot.slane %v1482, 1
      %v1484 = vmax.f32 %v1482, %v1483
      %v1485 = vmax.f32 %v1316, %v1317
      %v1486 = vrot.slane %v1485, 4
      %v1487 = vmax.f32 %v1485, %v1486
      %v1488 = vrot.slane %v1487, 2
      %v1489 = vmax.f32 %v1487, %v1488
      %v1490 = vrot.slane %v1489, 1
      %v1491 = vmax.f32 %v1489, %v1490
      %v1492 = vmax.f32 %v1318, %v1319
      %v1493 = vrot.slane %v1492, 4
      %v1494 = vmax.f32 %v1492, %v1493
      %v1495 = vrot.slane %v1494, 2
      %v1496 = vmax.f32 %v1494, %v1495
      %v1497 = vrot.slane %v1496, 1
      %v1498 = vmax.f32 %v1496, %v1497
      %v1499 = vmax.f32 %v1320, %v1321
      %v1500 = vrot.slane %v1499, 4
      %v1501 = vmax.f32 %v1499, %v1500
      %v1502 = vrot.slane %v1501, 2
      %v1503 = vmax.f32 %v1501, %v1502
      %v1504 = vrot.slane %v1503, 1
      %v1505 = vmax.f32 %v1503, %v1504
      %v1506 = vmax.f32 %v1322, %v1323
      %v1507 = vrot.slane %v1506, 4
      %v1508 = vmax.f32 %v1506, %v1507
      %v1509 = vrot.slane %v1508, 2
      %v1510 = vmax.f32 %v1508, %v1509
      %v1511 = vrot.slane %v1510, 1
      %v1512 = vmax.f32 %v1510, %v1511
      %v1513 = vmax.f32 %v1324, %v1325
      %v1514 = vrot.slane %v1513, 4
      %v1515 = vmax.f32 %v1513, %v1514
      %v1516 = vrot.slane %v1515, 2
      %v1517 = vmax.f32 %v1515, %v1516
      %v1518 = vrot.slane %v1517, 1
      %v1519 = vmax.f32 %v1517, %v1518
      %v1520 = vmax.f32 %v1326, %v1327
      %v1521 = vrot.slane %v1520, 4
      %v1522 = vmax.f32 %v1520, %v1521
      %v1523 = vrot.slane %v1522, 2
      %v1524 = vmax.f32 %v1522, %v1523
      %v1525 = vrot.slane %v1524, 1
      %v1526 = vmax.f32 %v1524, %v1525
      %v1527 = vmax.f32 %v1328, %v1329
      %v1528 = vrot.slane %v1527, 4
      %v1529 = vmax.f32 %v1527, %v1528
      %v1530 = vrot.slane %v1529, 2
      %v1531 = vmax.f32 %v1529, %v1530
      %v1532 = vrot.slane %v1531, 1
      %v1533 = vmax.f32 %v1531, %v1532
      %v1534 = vmax.f32 %v1330, %v1331
      %v1535 = vrot.slane %v1534, 4
      %v1536 = vmax.f32 %v1534, %v1535
      %v1537 = vrot.slane %v1536, 2
      %v1538 = vmax.f32 %v1536, %v1537
      %v1539 = vrot.slane %v1538, 1
      %v1540 = vmax.f32 %v1538, %v1539
      %v1541 = vmax.f32 %v1332, %v1333
      %v1542 = vrot.slane %v1541, 4
      %v1543 = vmax.f32 %v1541, %v1542
      %v1544 = vrot.slane %v1543, 2
      %v1545 = vmax.f32 %v1543, %v1544
      %v1546 = vrot.slane %v1545, 1
      %v1547 = vmax.f32 %v1545, %v1546
      %v1548 = vmax.f32 %v1334, %v1335
      %v1549 = vrot.slane %v1548, 4
      %v1550 = vmax.f32 %v1548, %v1549
      %v1551 = vrot.slane %v1550, 2
      %v1552 = vmax.f32 %v1550, %v1551
      %v1553 = vrot.slane %v1552, 1
      %v1554 = vmax.f32 %v1552, %v1553
      %v1555 = vmax.f32 %v1336, %v1337
      %v1556 = vrot.slane %v1555, 4
      %v1557 = vmax.f32 %v1555, %v1556
      %v1558 = vrot.slane %v1557, 2
      %v1559 = vmax.f32 %v1557, %v1558
      %v1560 = vrot.slane %v1559, 1
      %v1561 = vmax.f32 %v1559, %v1560
      %v1562 = vld [vmem:[%s1 + $0x8] sm:$0xff]
      %v1563 = vld [vmem:[%s1 + $0x10] sm:$0xf]
      %v1564 = vld [vmem:[%s1 + $0x2c] sm:$0xff]
      %v1565 = vld [vmem:[%s1 + $0x34] sm:$0xf]
      %v1566 = vld [vmem:[%s1 + $0x50] sm:$0xff]
      %v1567 = vld [vmem:[%s1 + $0x58] sm:$0xf]
      %v1568 = vld [vmem:[%s1 + $0x74] sm:$0xff]
      %v1569 = vld [vmem:[%s1 + $0x7c] sm:$0xf]
      %v1570 = vld [vmem:[%s1 + $0x98] sm:$0xff]
      %v1571 = vld [vmem:[%s1 + $0xa0] sm:$0xf]
      %v1572 = vld [vmem:[%s1 + $0xbc] sm:$0xff]
      %v1573 = vld [vmem:[%s1 + $0xc4] sm:$0xf]
      %v1574 = vld [vmem:[%s1 + $0xe0] sm:$0xff]
      %v1575 = vld [vmem:[%s1 + $0xe8] sm:$0xf]
      %v1576 = vld [vmem:[%s1 + $0x104] sm:$0xff]
      %v1577 = vld [vmem:[%s1 + $0x10c] sm:$0xf]
      %v1578 = vld [vmem:[%s1 + $0x128] sm:$0xff]
      %v1579 = vld [vmem:[%s1 + $0x130] sm:$0xf]
      %v1580 = vld [vmem:[%s1 + $0x14c] sm:$0xff]
      %v1581 = vld [vmem:[%s1 + $0x154] sm:$0xf]
      %v1582 = vld [vmem:[%s1 + $0x170] sm:$0xff]
      %v1583 = vld [vmem:[%s1 + $0x178] sm:$0xf]
      %v1584 = vld [vmem:[%s1 + $0x194] sm:$0xff]
      %v1585 = vld [vmem:[%s1 + $0x19c] sm:$0xf]
      %v1586 = vld [vmem:[%s1 + $0x1b8] sm:$0xff]
      %v1587 = vld [vmem:[%s1 + $0x1c0] sm:$0xf]
      %v1588 = vld [vmem:[%s1 + $0x1dc] sm:$0xff]
      %v1589 = vld [vmem:[%s1 + $0x1e4] sm:$0xf]
      %v1590 = vld [vmem:[%s1 + $0x200] sm:$0xff]
      %v1591 = vld [vmem:[%s1 + $0x208] sm:$0xf]
      %v1592 = vld [vmem:[%s1 + $0x224] sm:$0xff]
      %v1593 = vld [vmem:[%s1 + $0x22c] sm:$0xf]
      %v1626 = vunpack.c.l.b16 %v1562
      %v1627 = vunpack.c.h.b16 %v1562
      %v1628 = vunpack.c.l.b16 %v1563
      %v1629 = vunpack.c.l.b16 %v1564
      %v1630 = vunpack.c.h.b16 %v1564
      %v1631 = vunpack.c.l.b16 %v1565
      %v1632 = vunpack.c.l.b16 %v1566
      %v1633 = vunpack.c.h.b16 %v1566
      %v1634 = vunpack.c.l.b16 %v1567
      %v1635 = vunpack.c.l.b16 %v1568
      %v1636 = vunpack.c.h.b16 %v1568
      %v1637 = vunpack.c.l.b16 %v1569
      %v1638 = vunpack.c.l.b16 %v1570
      %v1639 = vunpack.c.h.b16 %v1570
      %v1640 = vunpack.c.l.b16 %v1571
      %v1641 = vunpack.c.l.b16 %v1572
      %v1642 = vunpack.c.h.b16 %v1572
      %v1643 = vunpack.c.l.b16 %v1573
      %v1644 = vunpack.c.l.b16 %v1574
      %v1645 = vunpack.c.h.b16 %v1574
      %v1646 = vunpack.c.l.b16 %v1575
      %v1647 = vunpack.c.l.b16 %v1576
      %v1648 = vunpack.c.h.b16 %v1576
      %v1649 = vunpack.c.l.b16 %v1577
      %v1650 = vunpack.c.l.b16 %v1578
      %v1651 = vunpack.c.h.b16 %v1578
      %v1652 = vunpack.c.l.b16 %v1579
      %v1653 = vunpack.c.l.b16 %v1580
      %v1654 = vunpack.c.h.b16 %v1580
      %v1655 = vunpack.c.l.b16 %v1581
      %v1656 = vunpack.c.l.b16 %v1582
      %v1657 = vunpack.c.h.b16 %v1582
      %v1658 = vunpack.c.l.b16 %v1583
      %v1659 = vunpack.c.l.b16 %v1584
      %v1660 = vunpack.c.h.b16 %v1584
      %v1661 = vunpack.c.l.b16 %v1585
      %v1662 = vunpack.c.l.b16 %v1586
      %v1663 = vunpack.c.h.b16 %v1586
      %v1664 = vunpack.c.l.b16 %v1587
      %v1665 = vunpack.c.l.b16 %v1588
      %v1666 = vunpack.c.h.b16 %v1588
      %v1667 = vunpack.c.l.b16 %v1589
      %v1668 = vunpack.c.l.b16 %v1590
      %v1669 = vunpack.c.h.b16 %v1590
      %v1670 = vunpack.c.l.b16 %v1591
      %v1671 = vunpack.c.l.b16 %v1592
      %v1672 = vunpack.c.h.b16 %v1592
      %v1673 = vunpack.c.l.b16 %v1593
      %v1674 = vpack.c.b16 %v1629, %v1626
      %v1675 = vpack.c.b16 %v1630, %v1627
      %v1676 = vpack.c.b16 %v1631, %v1628
      %v1677 = vpack.c.b16 %v1635, %v1632
      %v1678 = vpack.c.b16 %v1636, %v1633
      %v1679 = vpack.c.b16 %v1637, %v1634
      %v1680 = vpack.c.b16 %v1641, %v1638
      %v1681 = vpack.c.b16 %v1642, %v1639
      %v1682 = vpack.c.b16 %v1643, %v1640
      %v1683 = vpack.c.b16 %v1647, %v1644
      %v1684 = vpack.c.b16 %v1648, %v1645
      %v1685 = vpack.c.b16 %v1649, %v1646
      %v1686 = vpack.c.b16 %v1653, %v1650
      %v1687 = vpack.c.b16 %v1654, %v1651
      %v1688 = vpack.c.b16 %v1655, %v1652
      %v1689 = vpack.c.b16 %v1659, %v1656
      %v1690 = vpack.c.b16 %v1660, %v1657
      %v1691 = vpack.c.b16 %v1661, %v1658
      %v1692 = vpack.c.b16 %v1665, %v1662
      %v1693 = vpack.c.b16 %v1666, %v1663
      %v1694 = vpack.c.b16 %v1667, %v1664
      %v1695 = vpack.c.b16 %v1671, %v1668
      %v1696 = vpack.c.b16 %v1672, %v1669
      %v1697 = vpack.c.b16 %v1673, %v1670
      %1722 = vmatprep.subr.bf16.mxu0 %v1675
      %1723 = vmatpush1.bf16.msra.mxu0 %v1674
      %1724 = vmatprep.subr.bf16.mxu0 %v1678
      %1725 = vmatpush1.bf16.msra.mxu0 %v1677
      %1726 = vmatprep.subr.bf16.mxu0 %v1681
      %1727 = vmatpush1.bf16.msra.mxu0 %v1680
      %1728 = vmatprep.subr.bf16.mxu0 %v1684
      %1729 = vmatpush1.bf16.msra.mxu0 %v1683
      %1730 = vmatprep.subr.bf16.mxu0 %v1687
      %1731 = vmatpush1.bf16.msra.mxu0 %v1686
      %1732 = vmatprep.subr.bf16.mxu0 %v1690
      %1733 = vmatpush1.bf16.msra.mxu0 %v1689
      %1734 = vmatprep.subr.bf16.mxu0 %v1693
      %1735 = vmatpush1.bf16.msra.mxu0 %v1692
      %1736 = vmatprep.subr.bf16.mxu0 %v1696
      %1737 = vmatpush1.bf16.msra.mxu0 %v1695
      %1738 = vmatprep.subr.bf16.mxu0 0
      %1739 = vmatpush1.bf16.msra.mxu0 0
      %1740 = vmatprep.subr.bf16.mxu0 0
      %1741 = vmatpush1.bf16.msra.mxu0 0
      %1742 = vmatprep.subr.bf16.mxu0 0
      %1743 = vmatpush1.bf16.msra.mxu0 0
      %1744 = vmatprep.subr.bf16.mxu0 0
      %1745 = vmatpush1.bf16.msra.mxu0 0
      %1746 = vmatprep.subr.bf16.mxu0 0
      %1747 = vmatpush1.bf16.msra.mxu0 0
      %1748 = vmatprep.subr.bf16.mxu0 0
      %1749 = vmatpush1.bf16.msra.mxu0 0
      %1750 = vmatprep.subr.bf16.mxu0 0
      %1751 = vmatpush1.bf16.msra.mxu0 0
      %1752 = vmatprep.subr.bf16.mxu0 0
      %1753 = vmatpush1.bf16.msra.mxu0 0
      %1754 = vmatprep.mubr.bf16.mxu0 0
      %1755 = vmatmul.mubr.bf16.gmra.mrb[0].mxu0 %v444
      %v1756 = vpop.f32.mrb[0].mxu0
      %v1757 = vadd.f32 0.0, %v1756
      %v1758 = vpop.f32.mrb[0].mxu0
      %v1759 = vadd.f32 0.0, %v1758
      %v1760 = vpop.f32.mrb[0].mxu0
      %v1761 = vadd.f32 0.0, %v1760
      %v1762 = vpop.f32.mrb[0].mxu0
      %v1763 = vadd.f32 0.0, %v1762
      %1764 = vmatprep.mubr.bf16.mxu0 0
      %1765 = vmatmul.mubr.bf16.gmra.mrb[0].mxu0 %v445
      %v1766 = vpop.f32.mrb[0].mxu0
      %v1767 = vadd.f32 0.0, %v1766
      %v1768 = vpop.f32.mrb[0].mxu0
      %v1769 = vadd.f32 0.0, %v1768
      %v1770 = vpop.f32.mrb[0].mxu0
      %v1771 = vadd.f32 0.0, %v1770
      %v1772 = vpop.f32.mrb[0].mxu0
      %v1773 = vadd.f32 0.0, %v1772
      %1774 = vmatprep.mubr.bf16.mxu0 0
      %1775 = vmatmul.mubr.bf16.gmra.mrb[0].mxu0 %v446
      %v1776 = vpop.f32.mrb[0].mxu0
      %v1777 = vadd.f32 0.0, %v1776
      %v1778 = vpop.f32.mrb[0].mxu0
      %v1779 = vadd.f32 0.0, %v1778
      %v1780 = vpop.f32.mrb[0].mxu0
      %v1781 = vadd.f32 0.0, %v1780
      %v1782 = vpop.f32.mrb[0].mxu0
      %v1783 = vadd.f32 0.0, %v1782
      %1784 = vmatprep.mubr.bf16.mxu0 0
      %1785 = vmatmul.mubr.bf16.gmra.mrb[0].mxu0 %v447
      %v1786 = vpop.f32.mrb[0].mxu0
      %v1787 = vadd.f32 0.0, %v1786
      %v1788 = vpop.f32.mrb[0].mxu0
      %v1789 = vadd.f32 0.0, %v1788
      %v1790 = vpop.f32.mrb[0].mxu0
      %v1791 = vadd.f32 0.0, %v1790
      %v1792 = vpop.f32.mrb[0].mxu0
      %v1793 = vadd.f32 0.0, %v1792
      %1794 = vmatprep.mubr.bf16.mxu0 0
      %1795 = vmatmul.mubr.bf16.gmra.mrb[0].mxu0 %v448
      %v1796 = vpop.f32.mrb[0].mxu0
      %v1797 = vadd.f32 0.0, %v1796
      %v1798 = vpop.f32.mrb[0].mxu0
      %v1799 = vadd.f32 0.0, %v1798
      %v1800 = vpop.f32.mrb[0].mxu0
      %v1801 = vadd.f32 0.0, %v1800
      %v1802 = vpop.f32.mrb[0].mxu0
      %v1803 = vadd.f32 0.0, %v1802
      %1804 = vmatprep.mubr.bf16.mxu0 0
      %1805 = vmatmul.mubr.bf16.gmra.mrb[0].mxu0 %v449
      %v1806 = vpop.f32.mrb[0].mxu0
      %v1807 = vadd.f32 0.0, %v1806
      %v1808 = vpop.f32.mrb[0].mxu0
      %v1809 = vadd.f32 0.0, %v1808
      %v1810 = vpop.f32.mrb[0].mxu0
      %v1811 = vadd.f32 0.0, %v1810
      %v1812 = vpop.f32.mrb[0].mxu0
      %v1813 = vadd.f32 0.0, %v1812
      %1814 = vmatprep.mubr.bf16.mxu0 0
      %1815 = vmatmul.mubr.bf16.gmra.mrb[0].mxu0 %v450
      %v1816 = vpop.f32.mrb[0].mxu0
      %v1817 = vadd.f32 0.0, %v1816
      %v1818 = vpop.f32.mrb[0].mxu0
      %v1819 = vadd.f32 0.0, %v1818
      %v1820 = vpop.f32.mrb[0].mxu0
      %v1821 = vadd.f32 0.0, %v1820
      %v1822 = vpop.f32.mrb[0].mxu0
      %v1823 = vadd.f32 0.0, %v1822
      %1824 = vmatprep.mubr.bf16.mxu0 0
      %1825 = vmatmul.mubr.bf16.gmra.mrb[0].mxu0 %v451
      %v1826 = vpop.f32.mrb[0].mxu0
      %v1827 = vadd.f32 0.0, %v1826
      %v1828 = vpop.f32.mrb[0].mxu0
      %v1829 = vadd.f32 0.0, %v1828
      %v1830 = vpop.f32.mrb[0].mxu0
      %v1831 = vadd.f32 0.0, %v1830
      %v1832 = vpop.f32.mrb[0].mxu0
      %v1833 = vadd.f32 0.0, %v1832
      %1834 = vmatprep.mubr.bf16.mxu0 0
      %1835 = vmatmul.mubr.bf16.gmra.mrb[0].mxu0 %v452
      %v1836 = vpop.f32.mrb[0].mxu0
      %v1837 = vadd.f32 0.0, %v1836
      %v1838 = vpop.f32.mrb[0].mxu0
      %v1839 = vadd.f32 0.0, %v1838
      %v1840 = vpop.f32.mrb[0].mxu0
      %v1841 = vadd.f32 0.0, %v1840
      %v1842 = vpop.f32.mrb[0].mxu0
      %v1843 = vadd.f32 0.0, %v1842
      %1844 = vmatprep.mubr.bf16.mxu0 0
      %1845 = vmatmul.mubr.bf16.gmra.mrb[0].mxu0 %v453
      %v1846 = vpop.f32.mrb[0].mxu0
      %v1847 = vadd.f32 0.0, %v1846
      %v1848 = vpop.f32.mrb[0].mxu0
      %v1849 = vadd.f32 0.0, %v1848
      %v1850 = vpop.f32.mrb[0].mxu0
      %v1851 = vadd.f32 0.0, %v1850
      %v1852 = vpop.f32.mrb[0].mxu0
      %v1853 = vadd.f32 0.0, %v1852
      %1854 = vmatprep.mubr.bf16.mxu0 0
      %1855 = vmatmul.mubr.bf16.gmra.mrb[0].mxu0 %v454
      %v1856 = vpop.f32.mrb[0].mxu0
      %v1857 = vadd.f32 0.0, %v1856
      %v1858 = vpop.f32.mrb[0].mxu0
      %v1859 = vadd.f32 0.0, %v1858
      %v1860 = vpop.f32.mrb[0].mxu0
      %v1861 = vadd.f32 0.0, %v1860
      %v1862 = vpop.f32.mrb[0].mxu0
      %v1863 = vadd.f32 0.0, %v1862
      %1864 = vmatprep.mubr.bf16.mxu0 0
      %1865 = vmatmul.mubr.bf16.gmra.mrb[0].mxu0 %v455
      %v1866 = vpop.f32.mrb[0].mxu0
      %v1867 = vadd.f32 0.0, %v1866
      %v1868 = vpop.f32.mrb[0].mxu0
      %v1869 = vadd.f32 0.0, %v1868
      %v1870 = vpop.f32.mrb[0].mxu0
      %v1871 = vadd.f32 0.0, %v1870
      %v1872 = vpop.f32.mrb[0].mxu0
      %v1873 = vadd.f32 0.0, %v1872
      %1874 = vmatprep.mubr.bf16.mxu0 0
      %1875 = vmatmul.mubr.bf16.gmra.mrb[0].mxu0 %v456
      %v1876 = vpop.f32.mrb[0].mxu0
      %v1877 = vadd.f32 0.0, %v1876
      %v1878 = vpop.f32.mrb[0].mxu0
      %v1879 = vadd.f32 0.0, %v1878
      %v1880 = vpop.f32.mrb[0].mxu0
      %v1881 = vadd.f32 0.0, %v1880
      %v1882 = vpop.f32.mrb[0].mxu0
      %v1883 = vadd.f32 0.0, %v1882
      %1884 = vmatprep.mubr.bf16.mxu0 0
      %1885 = vmatmul.mubr.bf16.gmra.mrb[0].mxu0 %v457
      %v1886 = vpop.f32.mrb[0].mxu0
      %v1887 = vadd.f32 0.0, %v1886
      %v1888 = vpop.f32.mrb[0].mxu0
      %v1889 = vadd.f32 0.0, %v1888
      %v1890 = vpop.f32.mrb[0].mxu0
      %v1891 = vadd.f32 0.0, %v1890
      %v1892 = vpop.f32.mrb[0].mxu0
      %v1893 = vadd.f32 0.0, %v1892
      %1894 = vmatprep.mubr.bf16.mxu0 0
      %1895 = vmatmul.mubr.bf16.gmra.mrb[0].mxu0 %v458
      %v1896 = vpop.f32.mrb[0].mxu0
      %v1897 = vadd.f32 0.0, %v1896
      %v1898 = vpop.f32.mrb[0].mxu0
      %v1899 = vadd.f32 0.0, %v1898
      %v1900 = vpop.f32.mrb[0].mxu0
      %v1901 = vadd.f32 0.0, %v1900
      %v1902 = vpop.f32.mrb[0].mxu0
      %v1903 = vadd.f32 0.0, %v1902
      %1904 = vmatprep.mubr.bf16.mxu0 0
      %1905 = vmatmul.mubr.bf16.gmra.mrb[0].mxu0 %v459
      %v1906 = vpop.f32.mrb[0].mxu0
      %v1907 = vadd.f32 0.0, %v1906
      %v1908 = vpop.f32.mrb[0].mxu0
      %v1909 = vadd.f32 0.0, %v1908
      %v1910 = vpop.f32.mrb[0].mxu0
      %v1911 = vadd.f32 0.0, %v1910
      %v1912 = vpop.f32.mrb[0].mxu0
      %v1913 = vadd.f32 0.0, %v1912
      %1914 = vmatprep.mubr.bf16.mxu0 0
      %1915 = vmatmul.mubr.bf16.gmra.mrb[0].mxu0 %v460
      %v1916 = vpop.f32.mrb[0].mxu0
      %v1917 = vadd.f32 0.0, %v1916
      %v1918 = vpop.f32.mrb[0].mxu0
      %v1919 = vadd.f32 0.0, %v1918
      %v1920 = vpop.f32.mrb[0].mxu0
      %v1921 = vadd.f32 0.0, %v1920
      %v1922 = vpop.f32.mrb[0].mxu0
      %v1923 = vadd.f32 0.0, %v1922
      %1924 = vmatprep.mubr.bf16.mxu0 0
      %1925 = vmatmul.mubr.bf16.gmra.mrb[0].mxu0 %v461
      %v1926 = vpop.f32.mrb[0].mxu0
      %v1927 = vadd.f32 0.0, %v1926
      %v1928 = vpop.f32.mrb[0].mxu0
      %v1929 = vadd.f32 0.0, %v1928
      %v1930 = vpop.f32.mrb[0].mxu0
      %v1931 = vadd.f32 0.0, %v1930
      %v1932 = vpop.f32.mrb[0].mxu0
      %v1933 = vadd.f32 0.0, %v1932
      %1934 = vmatprep.mubr.bf16.mxu0 0
      %1935 = vmatmul.mubr.bf16.gmra.mrb[0].mxu0 %v462
      %v1936 = vpop.f32.mrb[0].mxu0
      %v1937 = vadd.f32 0.0, %v1936
      %v1938 = vpop.f32.mrb[0].mxu0
      %v1939 = vadd.f32 0.0, %v1938
      %v1940 = vpop.f32.mrb[0].mxu0
      %v1941 = vadd.f32 0.0, %v1940
      %v1942 = vpop.f32.mrb[0].mxu0
      %v1943 = vadd.f32 0.0, %v1942
      %1944 = vmatprep.mubr.bf16.mxu0 0
      %1945 = vmatmul.mubr.bf16.gmra.mrb[0].mxu0 %v463
      %v1946 = vpop.f32.mrb[0].mxu0
      %v1947 = vadd.f32 0.0, %v1946
      %v1948 = vpop.f32.mrb[0].mxu0
      %v1949 = vadd.f32 0.0, %v1948
      %v1950 = vpop.f32.mrb[0].mxu0
      %v1951 = vadd.f32 0.0, %v1950
      %v1952 = vpop.f32.mrb[0].mxu0
      %v1953 = vadd.f32 0.0, %v1952
      %1954 = vmatprep.mubr.bf16.mxu0 0
      %1955 = vmatmul.mubr.bf16.gmra.mrb[0].mxu0 %v464
      %v1956 = vpop.f32.mrb[0].mxu0
      %v1957 = vadd.f32 0.0, %v1956
      %v1958 = vpop.f32.mrb[0].mxu0
      %v1959 = vadd.f32 0.0, %v1958
      %v1960 = vpop.f32.mrb[0].mxu0
      %v1961 = vadd.f32 0.0, %v1960
      %v1962 = vpop.f32.mrb[0].mxu0
      %v1963 = vadd.f32 0.0, %v1962
      %1964 = vmatprep.mubr.bf16.mxu0 0
      %1965 = vmatmul.mubr.bf16.gmra.mrb[0].mxu0 %v465
      %v1966 = vpop.f32.mrb[0].mxu0
      %v1967 = vadd.f32 0.0, %v1966
      %v1968 = vpop.f32.mrb[0].mxu0
      %v1969 = vadd.f32 0.0, %v1968
      %v1970 = vpop.f32.mrb[0].mxu0
      %v1971 = vadd.f32 0.0, %v1970
      %v1972 = vpop.f32.mrb[0].mxu0
      %v1973 = vadd.f32 0.0, %v1972
      %1974 = vmatprep.mubr.bf16.mxu0 0
      %1975 = vmatmul.mubr.bf16.gmra.mrb[0].mxu0 %v466
      %v1976 = vpop.f32.mrb[0].mxu0
      %v1977 = vadd.f32 0.0, %v1976
      %v1978 = vpop.f32.mrb[0].mxu0
      %v1979 = vadd.f32 0.0, %v1978
      %v1980 = vpop.f32.mrb[0].mxu0
      %v1981 = vadd.f32 0.0, %v1980
      %v1982 = vpop.f32.mrb[0].mxu0
      %v1983 = vadd.f32 0.0, %v1982
      %1984 = vmatprep.mubr.bf16.mxu0 0
      %1985 = vmatmul.mubr.bf16.gmra.mrb[0].mxu0 %v467
      %v1986 = vpop.f32.mrb[0].mxu0
      %v1987 = vadd.f32 0.0, %v1986
      %v1988 = vpop.f32.mrb[0].mxu0
      %v1989 = vadd.f32 0.0, %v1988
      %v1990 = vpop.f32.mrb[0].mxu0
      %v1991 = vadd.f32 0.0, %v1990
      %v1992 = vpop.f32.mrb[0].mxu0
      %v1993 = vadd.f32 0.0, %v1992
      %1994 = vmatprep.mubr.bf16.mxu0 0
      %1995 = vmatmul.mubr.bf16.gmra.mrb[0].mxu0 %v468
      %v1996 = vpop.f32.mrb[0].mxu0
      %v1997 = vadd.f32 0.0, %v1996
      %v1998 = vpop.f32.mrb[0].mxu0
      %v1999 = vadd.f32 0.0, %v1998
      %v2000 = vpop.f32.mrb[0].mxu0
      %v2001 = vadd.f32 0.0, %v2000
      %v2002 = vpop.f32.mrb[0].mxu0
      %v2003 = vadd.f32 0.0, %v2002
      %2004 = vmatprep.mubr.bf16.mxu0 0
      %2005 = vmatmul.mubr.bf16.gmra.mrb[0].mxu0 %v469
      %v2006 = vpop.f32.mrb[0].mxu0
      %v2007 = vadd.f32 0.0, %v2006
      %v2008 = vpop.f32.mrb[0].mxu0
      %v2009 = vadd.f32 0.0, %v2008
      %v2010 = vpop.f32.mrb[0].mxu0
      %v2011 = vadd.f32 0.0, %v2010
      %v2012 = vpop.f32.mrb[0].mxu0
      %v2013 = vadd.f32 0.0, %v2012
      %2014 = vmatprep.mubr.bf16.mxu0 0
      %2015 = vmatmul.mubr.bf16.gmra.mrb[0].mxu0 %v470
      %v2016 = vpop.f32.mrb[0].mxu0
      %v2017 = vadd.f32 0.0, %v2016
      %v2018 = vpop.f32.mrb[0].mxu0
      %v2019 = vadd.f32 0.0, %v2018
      %v2020 = vpop.f32.mrb[0].mxu0
      %v2021 = vadd.f32 0.0, %v2020
      %v2022 = vpop.f32.mrb[0].mxu0
      %v2023 = vadd.f32 0.0, %v2022
      %2024 = vmatprep.mubr.bf16.mxu0 0
      %2025 = vmatmul.mubr.bf16.gmra.mrb[0].mxu0 %v471
      %v2026 = vpop.f32.mrb[0].mxu0
      %v2027 = vadd.f32 0.0, %v2026
      %v2028 = vpop.f32.mrb[0].mxu0
      %v2029 = vadd.f32 0.0, %v2028
      %v2030 = vpop.f32.mrb[0].mxu0
      %v2031 = vadd.f32 0.0, %v2030
      %v2032 = vpop.f32.mrb[0].mxu0
      %v2033 = vadd.f32 0.0, %v2032
      %2034 = vmatprep.mubr.bf16.mxu0 0
      %2035 = vmatmul.mubr.bf16.gmra.mrb[0].mxu0 %v472
      %v2036 = vpop.f32.mrb[0].mxu0
      %v2037 = vadd.f32 0.0, %v2036
      %v2038 = vpop.f32.mrb[0].mxu0
      %v2039 = vadd.f32 0.0, %v2038
      %v2040 = vpop.f32.mrb[0].mxu0
      %v2041 = vadd.f32 0.0, %v2040
      %v2042 = vpop.f32.mrb[0].mxu0
      %v2043 = vadd.f32 0.0, %v2042
      %2044 = vmatprep.mubr.bf16.mxu0 0
      %2045 = vmatmul.mubr.bf16.gmra.mrb[0].mxu0 %v473
      %v2046 = vpop.f32.mrb[0].mxu0
      %v2047 = vadd.f32 0.0, %v2046
      %v2048 = vpop.f32.mrb[0].mxu0
      %v2049 = vadd.f32 0.0, %v2048
      %v2050 = vpop.f32.mrb[0].mxu0
      %v2051 = vadd.f32 0.0, %v2050
      %v2052 = vpop.f32.mrb[0].mxu0
      %v2053 = vadd.f32 0.0, %v2052
      %2054 = vmatprep.mubr.bf16.mxu0 0
      %2055 = vmatmul.mubr.bf16.gmra.mrb[0].mxu0 %v474
      %v2056 = vpop.f32.mrb[0].mxu0
      %v2057 = vadd.f32 0.0, %v2056
      %v2058 = vpop.f32.mrb[0].mxu0
      %v2059 = vadd.f32 0.0, %v2058
      %v2060 = vpop.f32.mrb[0].mxu0
      %v2061 = vadd.f32 0.0, %v2060
      %v2062 = vpop.f32.mrb[0].mxu0
      %v2063 = vadd.f32 0.0, %v2062
      %2064 = vmatprep.mubr.bf16.mxu0 0
      %2065 = vmatmul.mubr.bf16.gmra.mrb[0].mxu0 %v475
      %v2066 = vpop.f32.mrb[0].mxu0
      %v2067 = vadd.f32 0.0, %v2066
      %v2068 = vpop.f32.mrb[0].mxu0
      %v2069 = vadd.f32 0.0, %v2068
      %v2070 = vpop.f32.mrb[0].mxu0
      %v2071 = vadd.f32 0.0, %v2070
      %v2072 = vpop.f32.mrb[0].mxu0
      %v2073 = vadd.f32 0.0, %v2072
      %2074 = vdwg.mxu0
      %2075 = vmatprep.subr.bf16.mxu0 0
      %2076 = vmatpush1.bf16.msra.mxu0 %v1676
      %2077 = vmatprep.subr.bf16.mxu0 0
      %2078 = vmatpush1.bf16.msra.mxu0 %v1679
      %2079 = vmatprep.subr.bf16.mxu0 0
      %2080 = vmatpush1.bf16.msra.mxu0 %v1682
      %2081 = vmatprep.subr.bf16.mxu0 0
      %2082 = vmatpush1.bf16.msra.mxu0 %v1685
      %2083 = vmatprep.subr.bf16.mxu0 0
      %2084 = vmatpush1.bf16.msra.mxu0 %v1688
      %2085 = vmatprep.subr.bf16.mxu0 0
      %2086 = vmatpush1.bf16.msra.mxu0 %v1691
      %2087 = vmatprep.subr.bf16.mxu0 0
      %2088 = vmatpush1.bf16.msra.mxu0 %v1694
      %2089 = vmatprep.subr.bf16.mxu0 0
      %2090 = vmatpush1.bf16.msra.mxu0 %v1697
      %2091 = vmatprep.subr.bf16.mxu0 0
      %2092 = vmatpush1.bf16.msra.mxu0 0
      %2093 = vmatprep.subr.bf16.mxu0 0
      %2094 = vmatpush1.bf16.msra.mxu0 0
      %2095 = vmatprep.subr.bf16.mxu0 0
      %2096 = vmatpush1.bf16.msra.mxu0 0
      %2097 = vmatprep.subr.bf16.mxu0 0
      %2098 = vmatpush1.bf16.msra.mxu0 0
      %2099 = vmatprep.subr.bf16.mxu0 0
      %2100 = vmatpush1.bf16.msra.mxu0 0
      %2101 = vmatprep.subr.bf16.mxu0 0
      %2102 = vmatpush1.bf16.msra.mxu0 0
      %2103 = vmatprep.subr.bf16.mxu0 0
      %2104 = vmatpush1.bf16.msra.mxu0 0
      %2105 = vmatprep.subr.bf16.mxu0 0
      %2106 = vmatpush1.bf16.msra.mxu0 0
      %2107 = vmatprep.mubr.bf16.mxu0 0
      %2108 = vmatmul.mubr.bf16.gmra.mrb[0].mxu0 %v444
      %v2109 = vpop.f32.mrb[0].mxu0
      %v2110 = vadd.f32 0.0, %v2109
      %v2111 = vpop.f32.mrb[0].mxu0
      %v2112 = vpop.f32.mrb[0].mxu0
      %v2113 = vadd.f32 0.0, %v2112
      %v2114 = vpop.f32.mrb[0].mxu0
      %2115 = vmatprep.mubr.bf16.mxu0 0
      %2116 = vmatmul.mubr.bf16.gmra.mrb[0].mxu0 %v445
      %v2117 = vpop.f32.mrb[0].mxu0
      %v2118 = vadd.f32 0.0, %v2117
      %v2119 = vpop.f32.mrb[0].mxu0
      %v2120 = vpop.f32.mrb[0].mxu0
      %v2121 = vadd.f32 0.0, %v2120
      %v2122 = vpop.f32.mrb[0].mxu0
      %2123 = vmatprep.mubr.bf16.mxu0 0
      %2124 = vmatmul.mubr.bf16.gmra.mrb[0].mxu0 %v446
      %v2125 = vpop.f32.mrb[0].mxu0
      %v2126 = vadd.f32 0.0, %v2125
      %v2127 = vpop.f32.mrb[0].mxu0
      %v2128 = vpop.f32.mrb[0].mxu0
      %v2129 = vadd.f32 0.0, %v2128
      %v2130 = vpop.f32.mrb[0].mxu0
      %2131 = vmatprep.mubr.bf16.mxu0 0
      %2132 = vmatmul.mubr.bf16.gmra.mrb[0].mxu0 %v447
      %v2133 = vpop.f32.mrb[0].mxu0
      %v2134 = vadd.f32 0.0, %v2133
      %v2135 = vpop.f32.mrb[0].mxu0
      %v2136 = vpop.f32.mrb[0].mxu0
      %v2137 = vadd.f32 0.0, %v2136
      %v2138 = vpop.f32.mrb[0].mxu0
      %2139 = vmatprep.mubr.bf16.mxu0 0
      %2140 = vmatmul.mubr.bf16.gmra.mrb[0].mxu0 %v448
      %v2141 = vpop.f32.mrb[0].mxu0
      %v2142 = vadd.f32 0.0, %v2141
      %v2143 = vpop.f32.mrb[0].mxu0
      %v2144 = vpop.f32.mrb[0].mxu0
      %v2145 = vadd.f32 0.0, %v2144
      %v2146 = vpop.f32.mrb[0].mxu0
      %2147 = vmatprep.mubr.bf16.mxu0 0
      %2148 = vmatmul.mubr.bf16.gmra.mrb[0].mxu0 %v449
      %v2149 = vpop.f32.mrb[0].mxu0
      %v2150 = vadd.f32 0.0, %v2149
      %v2151 = vpop.f32.mrb[0].mxu0
      %v2152 = vpop.f32.mrb[0].mxu0
      %v2153 = vadd.f32 0.0, %v2152
      %v2154 = vpop.f32.mrb[0].mxu0
      %2155 = vmatprep.mubr.bf16.mxu0 0
      %2156 = vmatmul.mubr.bf16.gmra.mrb[0].mxu0 %v450
      %v2157 = vpop.f32.mrb[0].mxu0
      %v2158 = vadd.f32 0.0, %v2157
      %v2159 = vpop.f32.mrb[0].mxu0
      %v2160 = vpop.f32.mrb[0].mxu0
      %v2161 = vadd.f32 0.0, %v2160
      %v2162 = vpop.f32.mrb[0].mxu0
      %2163 = vmatprep.mubr.bf16.mxu0 0
      %2164 = vmatmul.mubr.bf16.gmra.mrb[0].mxu0 %v451
      %v2165 = vpop.f32.mrb[0].mxu0
      %v2166 = vadd.f32 0.0, %v2165
      %v2167 = vpop.f32.mrb[0].mxu0
      %v2168 = vpop.f32.mrb[0].mxu0
      %v2169 = vadd.f32 0.0, %v2168
      %v2170 = vpop.f32.mrb[0].mxu0
      %2171 = vmatprep.mubr.bf16.mxu0 0
      %2172 = vmatmul.mubr.bf16.gmra.mrb[0].mxu0 %v452
      %v2173 = vpop.f32.mrb[0].mxu0
      %v2174 = vadd.f32 0.0, %v2173
      %v2175 = vpop.f32.mrb[0].mxu0
      %v2176 = vpop.f32.mrb[0].mxu0
      %v2177 = vadd.f32 0.0, %v2176
      %v2178 = vpop.f32.mrb[0].mxu0
      %2179 = vmatprep.mubr.bf16.mxu0 0
      %2180 = vmatmul.mubr.bf16.gmra.mrb[0].mxu0 %v453
      %v2181 = vpop.f32.mrb[0].mxu0
      %v2182 = vadd.f32 0.0, %v2181
      %v2183 = vpop.f32.mrb[0].mxu0
      %v2184 = vpop.f32.mrb[0].mxu0
      %v2185 = vadd.f32 0.0, %v2184
      %v2186 = vpop.f32.mrb[0].mxu0
      %2187 = vmatprep.mubr.bf16.mxu0 0
      %2188 = vmatmul.mubr.bf16.gmra.mrb[0].mxu0 %v454
      %v2189 = vpop.f32.mrb[0].mxu0
      %v2190 = vadd.f32 0.0, %v2189
      %v2191 = vpop.f32.mrb[0].mxu0
      %v2192 = vpop.f32.mrb[0].mxu0
      %v2193 = vadd.f32 0.0, %v2192
      %v2194 = vpop.f32.mrb[0].mxu0
      %2195 = vmatprep.mubr.bf16.mxu0 0
      %2196 = vmatmul.mubr.bf16.gmra.mrb[0].mxu0 %v455
      %v2197 = vpop.f32.mrb[0].mxu0
      %v2198 = vadd.f32 0.0, %v2197
      %v2199 = vpop.f32.mrb[0].mxu0
      %v2200 = vpop.f32.mrb[0].mxu0
      %v2201 = vadd.f32 0.0, %v2200
      %v2202 = vpop.f32.mrb[0].mxu0
      %2203 = vmatprep.mubr.bf16.mxu0 0
      %2204 = vmatmul.mubr.bf16.gmra.mrb[0].mxu0 %v456
      %v2205 = vpop.f32.mrb[0].mxu0
      %v2206 = vadd.f32 0.0, %v2205
      %v2207 = vpop.f32.mrb[0].mxu0
      %v2208 = vpop.f32.mrb[0].mxu0
      %v2209 = vadd.f32 0.0, %v2208
      %v2210 = vpop.f32.mrb[0].mxu0
      %2211 = vmatprep.mubr.bf16.mxu0 0
      %2212 = vmatmul.mubr.bf16.gmra.mrb[0].mxu0 %v457
      %v2213 = vpop.f32.mrb[0].mxu0
      %v2214 = vadd.f32 0.0, %v2213
      %v2215 = vpop.f32.mrb[0].mxu0
      %v2216 = vpop.f32.mrb[0].mxu0
      %v2217 = vadd.f32 0.0, %v2216
      %v2218 = vpop.f32.mrb[0].mxu0
      %2219 = vmatprep.mubr.bf16.mxu0 0
      %2220 = vmatmul.mubr.bf16.gmra.mrb[0].mxu0 %v458
      %v2221 = vpop.f32.mrb[0].mxu0
      %v2222 = vadd.f32 0.0, %v2221
      %v2223 = vpop.f32.mrb[0].mxu0
      %v2224 = vpop.f32.mrb[0].mxu0
      %v2225 = vadd.f32 0.0, %v2224
      %v2226 = vpop.f32.mrb[0].mxu0
      %2227 = vmatprep.mubr.bf16.mxu0 0
      %2228 = vmatmul.mubr.bf16.gmra.mrb[0].mxu0 %v459
      %v2229 = vpop.f32.mrb[0].mxu0
      %v2230 = vadd.f32 0.0, %v2229
      %v2231 = vpop.f32.mrb[0].mxu0
      %v2232 = vpop.f32.mrb[0].mxu0
      %v2233 = vadd.f32 0.0, %v2232
      %v2234 = vpop.f32.mrb[0].mxu0
      %2235 = vmatprep.mubr.bf16.mxu0 0
      %2236 = vmatmul.mubr.bf16.gmra.mrb[0].mxu0 %v460
      %v2237 = vpop.f32.mrb[0].mxu0
      %v2238 = vadd.f32 0.0, %v2237
      %v2239 = vpop.f32.mrb[0].mxu0
      %v2240 = vpop.f32.mrb[0].mxu0
      %v2241 = vadd.f32 0.0, %v2240
      %v2242 = vpop.f32.mrb[0].mxu0
      %2243 = vmatprep.mubr.bf16.mxu0 0
      %2244 = vmatmul.mubr.bf16.gmra.mrb[0].mxu0 %v461
      %v2245 = vpop.f32.mrb[0].mxu0
      %v2246 = vadd.f32 0.0, %v2245
      %v2247 = vpop.f32.mrb[0].mxu0
      %v2248 = vpop.f32.mrb[0].mxu0
      %v2249 = vadd.f32 0.0, %v2248
      %v2250 = vpop.f32.mrb[0].mxu0
      %2251 = vmatprep.mubr.bf16.mxu0 0
      %2252 = vmatmul.mubr.bf16.gmra.mrb[0].mxu0 %v462
      %v2253 = vpop.f32.mrb[0].mxu0
      %v2254 = vadd.f32 0.0, %v2253
      %v2255 = vpop.f32.mrb[0].mxu0
      %v2256 = vpop.f32.mrb[0].mxu0
      %v2257 = vadd.f32 0.0, %v2256
      %v2258 = vpop.f32.mrb[0].mxu0
      %2259 = vmatprep.mubr.bf16.mxu0 0
      %2260 = vmatmul.mubr.bf16.gmra.mrb[0].mxu0 %v463
      %v2261 = vpop.f32.mrb[0].mxu0
      %v2262 = vadd.f32 0.0, %v2261
      %v2263 = vpop.f32.mrb[0].mxu0
      %v2264 = vpop.f32.mrb[0].mxu0
      %v2265 = vadd.f32 0.0, %v2264
      %v2266 = vpop.f32.mrb[0].mxu0
      %2267 = vmatprep.mubr.bf16.mxu0 0
      %2268 = vmatmul.mubr.bf16.gmra.mrb[0].mxu0 %v464
      %v2269 = vpop.f32.mrb[0].mxu0
      %v2270 = vadd.f32 0.0, %v2269
      %v2271 = vpop.f32.mrb[0].mxu0
      %v2272 = vpop.f32.mrb[0].mxu0
      %v2273 = vadd.f32 0.0, %v2272
      %v2274 = vpop.f32.mrb[0].mxu0
      %2275 = vmatprep.mubr.bf16.mxu0 0
      %2276 = vmatmul.mubr.bf16.gmra.mrb[0].mxu0 %v465
      %v2277 = vpop.f32.mrb[0].mxu0
      %v2278 = vadd.f32 0.0, %v2277
      %v2279 = vpop.f32.mrb[0].mxu0
      %v2280 = vpop.f32.mrb[0].mxu0
      %v2281 = vadd.f32 0.0, %v2280
      %v2282 = vpop.f32.mrb[0].mxu0
      %2283 = vmatprep.mubr.bf16.mxu0 0
      %2284 = vmatmul.mubr.bf16.gmra.mrb[0].mxu0 %v466
      %v2285 = vpop.f32.mrb[0].mxu0
      %v2286 = vadd.f32 0.0, %v2285
      %v2287 = vpop.f32.mrb[0].mxu0
      %v2288 = vpop.f32.mrb[0].mxu0
      %v2289 = vadd.f32 0.0, %v2288
      %v2290 = vpop.f32.mrb[0].mxu0
      %2291 = vmatprep.mubr.bf16.mxu0 0
      %2292 = vmatmul.mubr.bf16.gmra.mrb[0].mxu0 %v467
      %v2293 = vpop.f32.mrb[0].mxu0
      %v2294 = vadd.f32 0.0, %v2293
      %v2295 = vpop.f32.mrb[0].mxu0
      %v2296 = vpop.f32.mrb[0].mxu0
      %v2297 = vadd.f32 0.0, %v2296
      %v2298 = vpop.f32.mrb[0].mxu0
      %2299 = vmatprep.mubr.bf16.mxu0 0
      %2300 = vmatmul.mubr.bf16.gmra.mrb[0].mxu0 %v468
      %v2301 = vpop.f32.mrb[0].mxu0
      %v2302 = vadd.f32 0.0, %v2301
      %v2303 = vpop.f32.mrb[0].mxu0
      %v2304 = vpop.f32.mrb[0].mxu0
      %v2305 = vadd.f32 0.0, %v2304
      %v2306 = vpop.f32.mrb[0].mxu0
      %2307 = vmatprep.mubr.bf16.mxu0 0
      %2308 = vmatmul.mubr.bf16.gmra.mrb[0].mxu0 %v469
      %v2309 = vpop.f32.mrb[0].mxu0
      %v2310 = vadd.f32 0.0, %v2309
      %v2311 = vpop.f32.mrb[0].mxu0
      %v2312 = vpop.f32.mrb[0].mxu0
      %v2313 = vadd.f32 0.0, %v2312
      %v2314 = vpop.f32.mrb[0].mxu0
      %2315 = vmatprep.mubr.bf16.mxu0 0
      %2316 = vmatmul.mubr.bf16.gmra.mrb[0].mxu0 %v470
      %v2317 = vpop.f32.mrb[0].mxu0
      %v2318 = vadd.f32 0.0, %v2317
      %v2319 = vpop.f32.mrb[0].mxu0
      %v2320 = vpop.f32.mrb[0].mxu0
      %v2321 = vadd.f32 0.0, %v2320
      %v2322 = vpop.f32.mrb[0].mxu0
      %2323 = vmatprep.mubr.bf16.mxu0 0
      %2324 = vmatmul.mubr.bf16.gmra.mrb[0].mxu0 %v471
      %v2325 = vpop.f32.mrb[0].mxu0
      %v2326 = vadd.f32 0.0, %v2325
      %v2327 = vpop.f32.mrb[0].mxu0
      %v2328 = vpop.f32.mrb[0].mxu0
      %v2329 = vadd.f32 0.0, %v2328
      %v2330 = vpop.f32.mrb[0].mxu0
      %2331 = vmatprep.mubr.bf16.mxu0 0
      %2332 = vmatmul.mubr.bf16.gmra.mrb[0].mxu0 %v472
      %v2333 = vpop.f32.mrb[0].mxu0
      %v2334 = vadd.f32 0.0, %v2333
      %v2335 = vpop.f32.mrb[0].mxu0
      %v2336 = vpop.f32.mrb[0].mxu0
      %v2337 = vadd.f32 0.0, %v2336
      %v2338 = vpop.f32.mrb[0].mxu0
      %2339 = vmatprep.mubr.bf16.mxu0 0
      %2340 = vmatmul.mubr.bf16.gmra.mrb[0].mxu0 %v473
      %v2341 = vpop.f32.mrb[0].mxu0
      %v2342 = vadd.f32 0.0, %v2341
      %v2343 = vpop.f32.mrb[0].mxu0
      %v2344 = vpop.f32.mrb[0].mxu0
      %v2345 = vadd.f32 0.0, %v2344
      %v2346 = vpop.f32.mrb[0].mxu0
      %2347 = vmatprep.mubr.bf16.mxu0 0
      %2348 = vmatmul.mubr.bf16.gmra.mrb[0].mxu0 %v474
      %v2349 = vpop.f32.mrb[0].mxu0
      %v2350 = vadd.f32 0.0, %v2349
      %v2351 = vpop.f32.mrb[0].mxu0
      %v2352 = vpop.f32.mrb[0].mxu0
      %v2353 = vadd.f32 0.0, %v2352
      %v2354 = vpop.f32.mrb[0].mxu0
      %2355 = vmatprep.mubr.bf16.mxu0 0
      %2356 = vmatmul.mubr.bf16.gmra.mrb[0].mxu0 %v475
      %v2357 = vpop.f32.mrb[0].mxu0
      %v2358 = vadd.f32 0.0, %v2357
      %v2359 = vpop.f32.mrb[0].mxu0
      %v2360 = vpop.f32.mrb[0].mxu0
      %v2361 = vadd.f32 0.0, %v2360
      %v2362 = vpop.f32.mrb[0].mxu0
      %2363 = vdwg.mxu0
      %v2364 = vrot.slane %v1759, 1
      %v2365 = vrot.slane %v1763, 1
      %v2366 = vrot.slane %v1769, 1
      %v2367 = vrot.slane %v1773, 1
      %v2368 = vrot.slane %v1779, 1
      %v2369 = vrot.slane %v1783, 1
      %v2370 = vrot.slane %v1789, 1
      %v2371 = vrot.slane %v1793, 1
      %v2372 = vrot.slane %v1799, 1
      %v2373 = vrot.slane %v1803, 1
      %v2374 = vrot.slane %v1809, 1
      %v2375 = vrot.slane %v1813, 1
      %v2376 = vrot.slane %v1819, 1
      %v2377 = vrot.slane %v1823, 1
      %v2378 = vrot.slane %v1829, 1
      %v2379 = vrot.slane %v1833, 1
      %v2380 = vrot.slane %v1839, 1
      %v2381 = vrot.slane %v1843, 1
      %v2382 = vrot.slane %v1849, 1
      %v2383 = vrot.slane %v1853, 1
      %v2384 = vrot.slane %v1859, 1
      %v2385 = vrot.slane %v1863, 1
      %v2386 = vrot.slane %v1869, 1
      %v2387 = vrot.slane %v1873, 1
      %v2388 = vrot.slane %v1879, 1
      %v2389 = vrot.slane %v1883, 1
      %v2390 = vrot.slane %v1889, 1
      %v2391 = vrot.slane %v1893, 1
      %v2392 = vrot.slane %v1899, 1
      %v2393 = vrot.slane %v1903, 1
      %v2394 = vrot.slane %v1909, 1
      %v2395 = vrot.slane %v1913, 1
      %v2396 = vrot.slane %v1919, 1
      %v2397 = vrot.slane %v1923, 1
      %v2398 = vrot.slane %v1929, 1
      %v2399 = vrot.slane %v1933, 1
      %v2400 = vrot.slane %v1939, 1
      %v2401 = vrot.slane %v1943, 1
      %v2402 = vrot.slane %v1949, 1
      %v2403 = vrot.slane %v1953, 1
      %v2404 = vrot.slane %v1959, 1
      %v2405 = vrot.slane %v1963, 1
      %v2406 = vrot.slane %v1969, 1
      %v2407 = vrot.slane %v1973, 1
      %v2408 = vrot.slane %v1979, 1
      %v2409 = vrot.slane %v1983, 1
      %v2410 = vrot.slane %v1989, 1
      %v2411 = vrot.slane %v1993, 1
      %v2412 = vrot.slane %v1999, 1
      %v2413 = vrot.slane %v2003, 1
      %v2414 = vrot.slane %v2009, 1
      %v2415 = vrot.slane %v2013, 1
      %v2416 = vrot.slane %v2019, 1
      %v2417 = vrot.slane %v2023, 1
      %v2418 = vrot.slane %v2029, 1
      %v2419 = vrot.slane %v2033, 1
      %v2420 = vrot.slane %v2039, 1
      %v2421 = vrot.slane %v2043, 1
      %v2422 = vrot.slane %v2049, 1
      %v2423 = vrot.slane %v2053, 1
      %v2424 = vrot.slane %v2059, 1
      %v2425 = vrot.slane %v2063, 1
      %v2426 = vrot.slane %v2069, 1
      %v2427 = vrot.slane %v2073, 1
      %v2428 = vsel %vm1005, %v2426, %v2427
      %v2429 = vsel %vm1005, %v2425, %v2426
      %v2430 = vsel %vm1005, %v2424, %v2425
      %v2431 = vsel %vm1005, %v2423, %v2424
      %v2432 = vsel %vm1005, %v2422, %v2423
      %v2433 = vsel %vm1005, %v2421, %v2422
      %v2434 = vsel %vm1005, %v2420, %v2421
      %v2435 = vsel %vm1005, %v2419, %v2420
      %v2436 = vsel %vm1005, %v2418, %v2419
      %v2437 = vsel %vm1005, %v2417, %v2418
      %v2438 = vsel %vm1005, %v2416, %v2417
      %v2439 = vsel %vm1005, %v2415, %v2416
      %v2440 = vsel %vm1005, %v2414, %v2415
      %v2441 = vsel %vm1005, %v2413, %v2414
      %v2442 = vsel %vm1005, %v2412, %v2413
      %v2443 = vsel %vm1005, %v2411, %v2412
      %v2444 = vsel %vm1005, %v2410, %v2411
      %v2445 = vsel %vm1005, %v2409, %v2410
      %v2446 = vsel %vm1005, %v2408, %v2409
      %v2447 = vsel %vm1005, %v2407, %v2408
      %v2448 = vsel %vm1005, %v2406, %v2407
      %v2449 = vsel %vm1005, %v2405, %v2406
      %v2450 = vsel %vm1005, %v2404, %v2405
      %v2451 = vsel %vm1005, %v2403, %v2404
      %v2452 = vsel %vm1005, %v2402, %v2403
      %v2453 = vsel %vm1005, %v2401, %v2402
      %v2454 = vsel %vm1005, %v2400, %v2401
      %v2455 = vsel %vm1005, %v2399, %v2400
      %v2456 = vsel %vm1005, %v2398, %v2399
      %v2457 = vsel %vm1005, %v2397, %v2398
      %v2458 = vsel %vm1005, %v2396, %v2397
      %v2459 = vsel %vm1005, %v2395, %v2396
      %v2460 = vsel %vm1005, %v2394, %v2395
      %v2461 = vsel %vm1005, %v2393, %v2394
      %v2462 = vsel %vm1005, %v2392, %v2393
      %v2463 = vsel %vm1005, %v2391, %v2392
      %v2464 = vsel %vm1005, %v2390, %v2391
      %v2465 = vsel %vm1005, %v2389, %v2390
      %v2466 = vsel %vm1005, %v2388, %v2389
      %v2467 = vsel %vm1005, %v2387, %v2388
      %v2468 = vsel %vm1005, %v2386, %v2387
      %v2469 = vsel %vm1005, %v2385, %v2386
      %v2470 = vsel %vm1005, %v2384, %v2385
      %v2471 = vsel %vm1005, %v2383, %v2384
      %v2472 = vsel %vm1005, %v2382, %v2383
      %v2473 = vsel %vm1005, %v2381, %v2382
      %v2474 = vsel %vm1005, %v2380, %v2381
      %v2475 = vsel %vm1005, %v2379, %v2380
      %v2476 = vsel %vm1005, %v2378, %v2379
      %v2477 = vsel %vm1005, %v2377, %v2378
      %v2478 = vsel %vm1005, %v2376, %v2377
      %v2479 = vsel %vm1005, %v2375, %v2376
      %v2480 = vsel %vm1005, %v2374, %v2375
      %v2481 = vsel %vm1005, %v2373, %v2374
      %v2482 = vsel %vm1005, %v2372, %v2373
      %v2483 = vsel %vm1005, %v2371, %v2372
      %v2484 = vsel %vm1005, %v2370, %v2371
      %v2485 = vsel %vm1005, %v2369, %v2370
      %v2486 = vsel %vm1005, %v2368, %v2369
      %v2487 = vsel %vm1005, %v2367, %v2368
      %v2488 = vsel %vm1005, %v2366, %v2367
      %v2489 = vsel %vm1005, %v2365, %v2366
      %v2490 = vsel %vm1005, %v2364, %v2365
      %v2491 = vsel %vm1005, %v2427, %v2364
      %v2492 = vadd.f32 %v1757, %v2490
      %v2493 = vadd.f32 %v1761, %v2489
      %v2494 = vadd.f32 %v1767, %v2488
      %v2495 = vadd.f32 %v1771, %v2487
      %v2496 = vadd.f32 %v1777, %v2486
      %v2497 = vadd.f32 %v1781, %v2485
      %v2498 = vadd.f32 %v1787, %v2484
      %v2499 = vadd.f32 %v1791, %v2483
      %v2500 = vadd.f32 %v1797, %v2482
      %v2501 = vadd.f32 %v1801, %v2481
      %v2502 = vadd.f32 %v1807, %v2480
      %v2503 = vadd.f32 %v1811, %v2479
      %v2504 = vadd.f32 %v1817, %v2478
      %v2505 = vadd.f32 %v1821, %v2477
      %v2506 = vadd.f32 %v1827, %v2476
      %v2507 = vadd.f32 %v1831, %v2475
      %v2508 = vadd.f32 %v1837, %v2474
      %v2509 = vadd.f32 %v1841, %v2473
      %v2510 = vadd.f32 %v1847, %v2472
      %v2511 = vadd.f32 %v1851, %v2471
      %v2512 = vadd.f32 %v1857, %v2470
      %v2513 = vadd.f32 %v1861, %v2469
      %v2514 = vadd.f32 %v1867, %v2468
      %v2515 = vadd.f32 %v1871, %v2467
      %v2516 = vadd.f32 %v1877, %v2466
      %v2517 = vadd.f32 %v1881, %v2465
      %v2518 = vadd.f32 %v1887, %v2464
      %v2519 = vadd.f32 %v1891, %v2463
      %v2520 = vadd.f32 %v1897, %v2462
      %v2521 = vadd.f32 %v1901, %v2461
      %v2522 = vadd.f32 %v1907, %v2460
      %v2523 = vadd.f32 %v1911, %v2459
      %v2524 = vadd.f32 %v1917, %v2458
      %v2525 = vadd.f32 %v1921, %v2457
      %v2526 = vadd.f32 %v1927, %v2456
      %v2527 = vadd.f32 %v1931, %v2455
      %v2528 = vadd.f32 %v1937, %v2454
      %v2529 = vadd.f32 %v1941, %v2453
      %v2530 = vadd.f32 %v1947, %v2452
      %v2531 = vadd.f32 %v1951, %v2451
      %v2532 = vadd.f32 %v1957, %v2450
      %v2533 = vadd.f32 %v1961, %v2449
      %v2534 = vadd.f32 %v1967, %v2448
      %v2535 = vadd.f32 %v1971, %v2447
      %v2536 = vadd.f32 %v1977, %v2446
      %v2537 = vadd.f32 %v1981, %v2445
      %v2538 = vadd.f32 %v1987, %v2444
      %v2539 = vadd.f32 %v1991, %v2443
      %v2540 = vadd.f32 %v1997, %v2442
      %v2541 = vadd.f32 %v2001, %v2441
      %v2542 = vadd.f32 %v2007, %v2440
      %v2543 = vadd.f32 %v2011, %v2439
      %v2544 = vadd.f32 %v2017, %v2438
      %v2545 = vadd.f32 %v2021, %v2437
      %v2546 = vadd.f32 %v2027, %v2436
      %v2547 = vadd.f32 %v2031, %v2435
      %v2548 = vadd.f32 %v2037, %v2434
      %v2549 = vadd.f32 %v2041, %v2433
      %v2550 = vadd.f32 %v2047, %v2432
      %v2551 = vadd.f32 %v2051, %v2431
      %v2552 = vadd.f32 %v2057, %v2430
      %v2553 = vadd.f32 %v2061, %v2429
      %v2554 = vadd.f32 %v2067, %v2428
      %v2555 = vadd.f32 %v2071, %v2491
      %v2556 = vrot.slane %v2110, 2
      %v2557 = vrot.slane %v2113, 2
      %v2558 = vrot.slane %v2118, 2
      %v2559 = vrot.slane %v2121, 2
      %v2560 = vrot.slane %v2126, 2
      %v2561 = vrot.slane %v2129, 2
      %v2562 = vrot.slane %v2134, 2
      %v2563 = vrot.slane %v2137, 2
      %v2564 = vrot.slane %v2142, 2
      %v2565 = vrot.slane %v2145, 2
      %v2566 = vrot.slane %v2150, 2
      %v2567 = vrot.slane %v2153, 2
      %v2568 = vrot.slane %v2158, 2
      %v2569 = vrot.slane %v2161, 2
      %v2570 = vrot.slane %v2166, 2
      %v2571 = vrot.slane %v2169, 2
      %v2572 = vrot.slane %v2174, 2
      %v2573 = vrot.slane %v2177, 2
      %v2574 = vrot.slane %v2182, 2
      %v2575 = vrot.slane %v2185, 2
      %v2576 = vrot.slane %v2190, 2
      %v2577 = vrot.slane %v2193, 2
      %v2578 = vrot.slane %v2198, 2
      %v2579 = vrot.slane %v2201, 2
      %v2580 = vrot.slane %v2206, 2
      %v2581 = vrot.slane %v2209, 2
      %v2582 = vrot.slane %v2214, 2
      %v2583 = vrot.slane %v2217, 2
      %v2584 = vrot.slane %v2222, 2
      %v2585 = vrot.slane %v2225, 2
      %v2586 = vrot.slane %v2230, 2
      %v2587 = vrot.slane %v2233, 2
      %v2588 = vrot.slane %v2238, 2
      %v2589 = vrot.slane %v2241, 2
      %v2590 = vrot.slane %v2246, 2
      %v2591 = vrot.slane %v2249, 2
      %v2592 = vrot.slane %v2254, 2
      %v2593 = vrot.slane %v2257, 2
      %v2594 = vrot.slane %v2262, 2
      %v2595 = vrot.slane %v2265, 2
      %v2596 = vrot.slane %v2270, 2
      %v2597 = vrot.slane %v2273, 2
      %v2598 = vrot.slane %v2278, 2
      %v2599 = vrot.slane %v2281, 2
      %v2600 = vrot.slane %v2286, 2
      %v2601 = vrot.slane %v2289, 2
      %v2602 = vrot.slane %v2294, 2
      %v2603 = vrot.slane %v2297, 2
      %v2604 = vrot.slane %v2302, 2
      %v2605 = vrot.slane %v2305, 2
      %v2606 = vrot.slane %v2310, 2
      %v2607 = vrot.slane %v2313, 2
      %v2608 = vrot.slane %v2318, 2
      %v2609 = vrot.slane %v2321, 2
      %v2610 = vrot.slane %v2326, 2
      %v2611 = vrot.slane %v2329, 2
      %v2612 = vrot.slane %v2334, 2
      %v2613 = vrot.slane %v2337, 2
      %v2614 = vrot.slane %v2342, 2
      %v2615 = vrot.slane %v2345, 2
      %v2616 = vrot.slane %v2350, 2
      %v2617 = vrot.slane %v2353, 2
      %v2618 = vrot.slane %v2358, 2
      %v2619 = vrot.slane %v2361, 2
      %vm2620 = vcmp.lt.s32.totalorder %v298, 6
      %v2621 = vsel %vm2620, %v2618, %v2619
      %v2622 = vsel %vm2620, %v2617, %v2618
      %v2623 = vsel %vm2620, %v2616, %v2617
      %v2624 = vsel %vm2620, %v2615, %v2616
      %v2625 = vsel %vm2620, %v2614, %v2615
      %v2626 = vsel %vm2620, %v2613, %v2614
      %v2627 = vsel %vm2620, %v2612, %v2613
      %v2628 = vsel %vm2620, %v2611, %v2612
      %v2629 = vsel %vm2620, %v2610, %v2611
      %v2630 = vsel %vm2620, %v2609, %v2610
      %v2631 = vsel %vm2620, %v2608, %v2609
      %v2632 = vsel %vm2620, %v2607, %v2608
      %v2633 = vsel %vm2620, %v2606, %v2607
      %v2634 = vsel %vm2620, %v2605, %v2606
      %v2635 = vsel %vm2620, %v2604, %v2605
      %v2636 = vsel %vm2620, %v2603, %v2604
      %v2637 = vsel %vm2620, %v2602, %v2603
      %v2638 = vsel %vm2620, %v2601, %v2602
      %v2639 = vsel %vm2620, %v2600, %v2601
      %v2640 = vsel %vm2620, %v2599, %v2600
      %v2641 = vsel %vm2620, %v2598, %v2599
      %v2642 = vsel %vm2620, %v2597, %v2598
      %v2643 = vsel %vm2620, %v2596, %v2597
      %v2644 = vsel %vm2620, %v2595, %v2596
      %v2645 = vsel %vm2620, %v2594, %v2595
      %v2646 = vsel %vm2620, %v2593, %v2594
      %v2647 = vsel %vm2620, %v2592, %v2593
      %v2648 = vsel %vm2620, %v2591, %v2592
      %v2649 = vsel %vm2620, %v2590, %v2591
      %v2650 = vsel %vm2620, %v2589, %v2590
      %v2651 = vsel %vm2620, %v2588, %v2589
      %v2652 = vsel %vm2620, %v2587, %v2588
      %v2653 = vsel %vm2620, %v2586, %v2587
      %v2654 = vsel %vm2620, %v2585, %v2586
      %v2655 = vsel %vm2620, %v2584, %v2585
      %v2656 = vsel %vm2620, %v2583, %v2584
      %v2657 = vsel %vm2620, %v2582, %v2583
      %v2658 = vsel %vm2620, %v2581, %v2582
      %v2659 = vsel %vm2620, %v2580, %v2581
      %v2660 = vsel %vm2620, %v2579, %v2580
      %v2661 = vsel %vm2620, %v2578, %v2579
      %v2662 = vsel %vm2620, %v2577, %v2578
      %v2663 = vsel %vm2620, %v2576, %v2577
      %v2664 = vsel %vm2620, %v2575, %v2576
      %v2665 = vsel %vm2620, %v2574, %v2575
      %v2666 = vsel %vm2620, %v2573, %v2574
      %v2667 = vsel %vm2620, %v2572, %v2573
      %v2668 = vsel %vm2620, %v2571, %v2572
      %v2669 = vsel %vm2620, %v2570, %v2571
      %v2670 = vsel %vm2620, %v2569, %v2570
      %v2671 = vsel %vm2620, %v2568, %v2569
      %v2672 = vsel %vm2620, %v2567, %v2568
      %v2673 = vsel %vm2620, %v2566, %v2567
      %v2674 = vsel %vm2620, %v2565, %v2566
      %v2675 = vsel %vm2620, %v2564, %v2565
      %v2676 = vsel %vm2620, %v2563, %v2564
      %v2677 = vsel %vm2620, %v2562, %v2563
      %v2678 = vsel %vm2620, %v2561, %v2562
      %v2679 = vsel %vm2620, %v2560, %v2561
      %v2680 = vsel %vm2620, %v2559, %v2560
      %v2681 = vsel %vm2620, %v2558, %v2559
      %v2682 = vsel %vm2620, %v2557, %v2558
      %v2683 = vsel %vm2620, %v2556, %v2557
      %v2684 = vsel %vm2620, %v2619, %v2556
      %v2685 = vadd.f32 %v2492, %v2683
      %v2686 = vadd.f32 %v2493, %v2682
      %v2687 = vadd.f32 %v2494, %v2681
      %v2688 = vadd.f32 %v2495, %v2680
      %v2689 = vadd.f32 %v2496, %v2679
      %v2690 = vadd.f32 %v2497, %v2678
      %v2691 = vadd.f32 %v2498, %v2677
      %v2692 = vadd.f32 %v2499, %v2676
      %v2693 = vadd.f32 %v2500, %v2675
      %v2694 = vadd.f32 %v2501, %v2674
      %v2695 = vadd.f32 %v2502, %v2673
      %v2696 = vadd.f32 %v2503, %v2672
      %v2697 = vadd.f32 %v2504, %v2671
      %v2698 = vadd.f32 %v2505, %v2670
      %v2699 = vadd.f32 %v2506, %v2669
      %v2700 = vadd.f32 %v2507, %v2668
      %v2701 = vadd.f32 %v2508, %v2667
      %v2702 = vadd.f32 %v2509, %v2666
      %v2703 = vadd.f32 %v2510, %v2665
      %v2704 = vadd.f32 %v2511, %v2664
      %v2705 = vadd.f32 %v2512, %v2663
      %v2706 = vadd.f32 %v2513, %v2662
      %v2707 = vadd.f32 %v2514, %v2661
      %v2708 = vadd.f32 %v2515, %v2660
      %v2709 = vadd.f32 %v2516, %v2659
      %v2710 = vadd.f32 %v2517, %v2658
      %v2711 = vadd.f32 %v2518, %v2657
      %v2712 = vadd.f32 %v2519, %v2656
      %v2713 = vadd.f32 %v2520, %v2655
      %v2714 = vadd.f32 %v2521, %v2654
      %v2715 = vadd.f32 %v2522, %v2653
      %v2716 = vadd.f32 %v2523, %v2652
      %v2717 = vadd.f32 %v2524, %v2651
      %v2718 = vadd.f32 %v2525, %v2650
      %v2719 = vadd.f32 %v2526, %v2649
      %v2720 = vadd.f32 %v2527, %v2648
      %v2721 = vadd.f32 %v2528, %v2647
      %v2722 = vadd.f32 %v2529, %v2646
      %v2723 = vadd.f32 %v2530, %v2645
      %v2724 = vadd.f32 %v2531, %v2644
      %v2725 = vadd.f32 %v2532, %v2643
      %v2726 = vadd.f32 %v2533, %v2642
      %v2727 = vadd.f32 %v2534, %v2641
      %v2728 = vadd.f32 %v2535, %v2640
      %v2729 = vadd.f32 %v2536, %v2639
      %v2730 = vadd.f32 %v2537, %v2638
      %v2731 = vadd.f32 %v2538, %v2637
      %v2732 = vadd.f32 %v2539, %v2636
      %v2733 = vadd.f32 %v2540, %v2635
      %v2734 = vadd.f32 %v2541, %v2634
      %v2735 = vadd.f32 %v2542, %v2633
      %v2736 = vadd.f32 %v2543, %v2632
      %v2737 = vadd.f32 %v2544, %v2631
      %v2738 = vadd.f32 %v2545, %v2630
      %v2739 = vadd.f32 %v2546, %v2629
      %v2740 = vadd.f32 %v2547, %v2628
      %v2741 = vadd.f32 %v2548, %v2627
      %v2742 = vadd.f32 %v2549, %v2626
      %v2743 = vadd.f32 %v2550, %v2625
      %v2744 = vadd.f32 %v2551, %v2624
      %v2745 = vadd.f32 %v2552, %v2623
      %v2746 = vadd.f32 %v2553, %v2622
      %v2747 = vadd.f32 %v2554, %v2621
      %v2748 = vadd.f32 %v2555, %v2684
      %v2749 = vrot.slane %v296, 1
      %v2750 = vlaneseq
      %v2751 = vshrl.u32 %v2750, 7
      %v2752 = vsub.s32 0, %v2751
      %v2753 = vrot.slane %v2749, %v2752
      %v2755 = vadd.f32 %v2685, %v2753
      %v2756 = vadd.f32 %v2686, %v2753
      %v2757 = vadd.f32 %v2687, %v2753
      %v2758 = vadd.f32 %v2688, %v2753
      %v2759 = vadd.f32 %v2689, %v2753
      %v2760 = vadd.f32 %v2690, %v2753
      %v2761 = vadd.f32 %v2691, %v2753
      %v2762 = vadd.f32 %v2692, %v2753
      %v2763 = vadd.f32 %v2693, %v2753
      %v2764 = vadd.f32 %v2694, %v2753
      %v2765 = vadd.f32 %v2695, %v2753
      %v2766 = vadd.f32 %v2696, %v2753
      %v2767 = vadd.f32 %v2697, %v2753
      %v2768 = vadd.f32 %v2698, %v2753
      %v2769 = vadd.f32 %v2699, %v2753
      %v2770 = vadd.f32 %v2700, %v2753
      %v2771 = vadd.f32 %v2701, %v2753
      %v2772 = vadd.f32 %v2702, %v2753
      %v2773 = vadd.f32 %v2703, %v2753
      %v2774 = vadd.f32 %v2704, %v2753
      %v2775 = vadd.f32 %v2705, %v2753
      %v2776 = vadd.f32 %v2706, %v2753
      %v2777 = vadd.f32 %v2707, %v2753
      %v2778 = vadd.f32 %v2708, %v2753
      %v2779 = vadd.f32 %v2709, %v2753
      %v2780 = vadd.f32 %v2710, %v2753
      %v2781 = vadd.f32 %v2711, %v2753
      %v2782 = vadd.f32 %v2712, %v2753
      %v2783 = vadd.f32 %v2713, %v2753
      %v2784 = vadd.f32 %v2714, %v2753
      %v2785 = vadd.f32 %v2715, %v2753
      %v2786 = vadd.f32 %v2716, %v2753
      %v2787 = vadd.f32 %v2717, %v2753
      %v2788 = vadd.f32 %v2718, %v2753
      %v2789 = vadd.f32 %v2719, %v2753
      %v2790 = vadd.f32 %v2720, %v2753
      %v2791 = vadd.f32 %v2721, %v2753
      %v2792 = vadd.f32 %v2722, %v2753
      %v2793 = vadd.f32 %v2723, %v2753
      %v2794 = vadd.f32 %v2724, %v2753
      %v2795 = vadd.f32 %v2725, %v2753
      %v2796 = vadd.f32 %v2726, %v2753
      %v2797 = vadd.f32 %v2727, %v2753
      %v2798 = vadd.f32 %v2728, %v2753
      %v2799 = vadd.f32 %v2729, %v2753
      %v2800 = vadd.f32 %v2730, %v2753
      %v2801 = vadd.f32 %v2731, %v2753
      %v2802 = vadd.f32 %v2732, %v2753
      %v2803 = vadd.f32 %v2733, %v2753
      %v2804 = vadd.f32 %v2734, %v2753
      %v2805 = vadd.f32 %v2735, %v2753
      %v2806 = vadd.f32 %v2736, %v2753
      %v2807 = vadd.f32 %v2737, %v2753
      %v2808 = vadd.f32 %v2738, %v2753
      %v2809 = vadd.f32 %v2739, %v2753
      %v2810 = vadd.f32 %v2740, %v2753
      %v2811 = vadd.f32 %v2741, %v2753
      %v2812 = vadd.f32 %v2742, %v2753
      %v2813 = vadd.f32 %v2743, %v2753
      %v2814 = vadd.f32 %v2744, %v2753
      %v2815 = vadd.f32 %v2745, %v2753
      %v2816 = vadd.f32 %v2746, %v2753
      %v2817 = vadd.f32 %v2747, %v2753
      %v2818 = vadd.f32 %v2748, %v2753
      %v2819 = vmax.f32 %v2755, 0.0
      %v2820 = vmax.f32 %v2756, 0.0
      %v2821 = vmax.f32 %v2757, 0.0
      %v2822 = vmax.f32 %v2758, 0.0
      %v2823 = vmax.f32 %v2759, 0.0
      %v2824 = vmax.f32 %v2760, 0.0
      %v2825 = vmax.f32 %v2761, 0.0
      %v2826 = vmax.f32 %v2762, 0.0
      %v2827 = vmax.f32 %v2763, 0.0
      %v2828 = vmax.f32 %v2764, 0.0
      %v2829 = vmax.f32 %v2765, 0.0
      %v2830 = vmax.f32 %v2766, 0.0
      %v2831 = vmax.f32 %v2767, 0.0
      %v2832 = vmax.f32 %v2768, 0.0
      %v2833 = vmax.f32 %v2769, 0.0
      %v2834 = vmax.f32 %v2770, 0.0
      %v2835 = vmax.f32 %v2771, 0.0
      %v2836 = vmax.f32 %v2772, 0.0
      %v2837 = vmax.f32 %v2773, 0.0
      %v2838 = vmax.f32 %v2774, 0.0
      %v2839 = vmax.f32 %v2775, 0.0
      %v2840 = vmax.f32 %v2776, 0.0
      %v2841 = vmax.f32 %v2777, 0.0
      %v2842 = vmax.f32 %v2778, 0.0
      %v2843 = vmax.f32 %v2779, 0.0
      %v2844 = vmax.f32 %v2780, 0.0
      %v2845 = vmax.f32 %v2781, 0.0
      %v2846 = vmax.f32 %v2782, 0.0
      %v2847 = vmax.f32 %v2783, 0.0
      %v2848 = vmax.f32 %v2784, 0.0
      %v2849 = vmax.f32 %v2785, 0.0
      %v2850 = vmax.f32 %v2786, 0.0
      %v2851 = vmax.f32 %v2787, 0.0
      %v2852 = vmax.f32 %v2788, 0.0
      %v2853 = vmax.f32 %v2789, 0.0
      %v2854 = vmax.f32 %v2790, 0.0
      %v2855 = vmax.f32 %v2791, 0.0
      %v2856 = vmax.f32 %v2792, 0.0
      %v2857 = vmax.f32 %v2793, 0.0
      %v2858 = vmax.f32 %v2794, 0.0
      %v2859 = vmax.f32 %v2795, 0.0
      %v2860 = vmax.f32 %v2796, 0.0
      %v2861 = vmax.f32 %v2797, 0.0
      %v2862 = vmax.f32 %v2798, 0.0
      %v2863 = vmax.f32 %v2799, 0.0
      %v2864 = vmax.f32 %v2800, 0.0
      %v2865 = vmax.f32 %v2801, 0.0
      %v2866 = vmax.f32 %v2802, 0.0
      %v2867 = vmax.f32 %v2803, 0.0
      %v2868 = vmax.f32 %v2804, 0.0
      %v2869 = vmax.f32 %v2805, 0.0
      %v2870 = vmax.f32 %v2806, 0.0
      %v2871 = vmax.f32 %v2807, 0.0
      %v2872 = vmax.f32 %v2808, 0.0
      %v2873 = vmax.f32 %v2809, 0.0
      %v2874 = vmax.f32 %v2810, 0.0
      %v2875 = vmax.f32 %v2811, 0.0
      %v2876 = vmax.f32 %v2812, 0.0
      %v2877 = vmax.f32 %v2813, 0.0
      %v2878 = vmax.f32 %v2814, 0.0
      %v2879 = vmax.f32 %v2815, 0.0
      %v2880 = vmax.f32 %v2816, 0.0
      %v2881 = vmax.f32 %v2817, 0.0
      %v2882 = vmax.f32 %v2818, 0.0
      %vm2883 = vcmp.lt.s32.totalorder %v298, 14
      %vm2884 = vcmp.lt.s32.totalorder %v299, 14
      %v2885 = vsel %vm2883, 1, 0
      %v2886 = vsel %vm2884, 1, 0
      %vm2887 = vcmp.eq.s32.totalorder %v2885, 1
      %vm2888 = vcmp.eq.s32.totalorder %v2886, 1
      %v2889 = vsel %vm2887, %v2819, 0.0
      %v2890 = vsel %vm2888, %v2820, 0.0
      %v2891 = vsel %vm2887, %v2821, 0.0
      %v2892 = vsel %vm2888, %v2822, 0.0
      %v2893 = vsel %vm2887, %v2823, 0.0
      %v2894 = vsel %vm2888, %v2824, 0.0
      %v2895 = vsel %vm2887, %v2825, 0.0
      %v2896 = vsel %vm2888, %v2826, 0.0
      %v2897 = vsel %vm2887, %v2827, 0.0
      %v2898 = vsel %vm2888, %v2828, 0.0
      %v2899 = vsel %vm2887, %v2829, 0.0
      %v2900 = vsel %vm2888, %v2830, 0.0
      %v2901 = vsel %vm2887, %v2831, 0.0
      %v2902 = vsel %vm2888, %v2832, 0.0
      %v2903 = vsel %vm2887, %v2833, 0.0
      %v2904 = vsel %vm2888, %v2834, 0.0
      %v2905 = vsel %vm2887, %v2835, 0.0
      %v2906 = vsel %vm2888, %v2836, 0.0
      %v2907 = vsel %vm2887, %v2837, 0.0
      %v2908 = vsel %vm2888, %v2838, 0.0
      %v2909 = vsel %vm2887, %v2839, 0.0
      %v2910 = vsel %vm2888, %v2840, 0.0
      %v2911 = vsel %vm2887, %v2841, 0.0
      %v2912 = vsel %vm2888, %v2842, 0.0
      %v2913 = vsel %vm2887, %v2843, 0.0
      %v2914 = vsel %vm2888, %v2844, 0.0
      %v2915 = vsel %vm2887, %v2845, 0.0
      %v2916 = vsel %vm2888, %v2846, 0.0
      %v2917 = vsel %vm2887, %v2847, 0.0
      %v2918 = vsel %vm2888, %v2848, 0.0
      %v2919 = vsel %vm2887, %v2849, 0.0
      %v2920 = vsel %vm2888, %v2850, 0.0
      %v2921 = vsel %vm2887, %v2851, 0.0
      %v2922 = vsel %vm2888, %v2852, 0.0
      %v2923 = vsel %vm2887, %v2853, 0.0
      %v2924 = vsel %vm2888, %v2854, 0.0
      %v2925 = vsel %vm2887, %v2855, 0.0
      %v2926 = vsel %vm2888, %v2856, 0.0
      %v2927 = vsel %vm2887, %v2857, 0.0
      %v2928 = vsel %vm2888, %v2858, 0.0
      %v2929 = vsel %vm2887, %v2859, 0.0
      %v2930 = vsel %vm2888, %v2860, 0.0
      %v2931 = vsel %vm2887, %v2861, 0.0
      %v2932 = vsel %vm2888, %v2862, 0.0
      %v2933 = vsel %vm2887, %v2863, 0.0
      %v2934 = vsel %vm2888, %v2864, 0.0
      %v2935 = vsel %vm2887, %v2865, 0.0
      %v2936 = vsel %vm2888, %v2866, 0.0
      %v2937 = vsel %vm2887, %v2867, 0.0
      %v2938 = vsel %vm2888, %v2868, 0.0
      %v2939 = vsel %vm2887, %v2869, 0.0
      %v2940 = vsel %vm2888, %v2870, 0.0
      %v2941 = vsel %vm2887, %v2871, 0.0
      %v2942 = vsel %vm2888, %v2872, 0.0
      %v2943 = vsel %vm2887, %v2873, 0.0
      %v2944 = vsel %vm2888, %v2874, 0.0
      %v2945 = vsel %vm2887, %v2875, 0.0
      %v2946 = vsel %vm2888, %v2876, 0.0
      %v2947 = vsel %vm2887, %v2877, 0.0
      %v2948 = vsel %vm2888, %v2878, 0.0
      %v2949 = vsel %vm2887, %v2879, 0.0
      %v2950 = vsel %vm2888, %v2880, 0.0
      %v2951 = vsel %vm2887, %v2881, 0.0
      %v2952 = vsel %vm2888, %v2882, 0.0
      %v2953 = vmax.f32 %v2889, %v2890
      %v2954 = vrot.slane %v2953, 4
      %v2955 = vmax.f32 %v2953, %v2954
      %v2956 = vrot.slane %v2955, 2
      %v2957 = vmax.f32 %v2955, %v2956
      %v2958 = vrot.slane %v2957, 1
      %v2959 = vmax.f32 %v2957, %v2958
      %v2960 = vmax.f32 %v2891, %v2892
      %v2961 = vrot.slane %v2960, 4
      %v2962 = vmax.f32 %v2960, %v2961
      %v2963 = vrot.slane %v2962, 2
      %v2964 = vmax.f32 %v2962, %v2963
      %v2965 = vrot.slane %v2964, 1
      %v2966 = vmax.f32 %v2964, %v2965
      %v2967 = vmax.f32 %v2893, %v2894
      %v2968 = vrot.slane %v2967, 4
      %v2969 = vmax.f32 %v2967, %v2968
      %v2970 = vrot.slane %v2969, 2
      %v2971 = vmax.f32 %v2969, %v2970
      %v2972 = vrot.slane %v2971, 1
      %v2973 = vmax.f32 %v2971, %v2972
      %v2974 = vmax.f32 %v2895, %v2896
      %v2975 = vrot.slane %v2974, 4
      %v2976 = vmax.f32 %v2974, %v2975
      %v2977 = vrot.slane %v2976, 2
      %v2978 = vmax.f32 %v2976, %v2977
      %v2979 = vrot.slane %v2978, 1
      %v2980 = vmax.f32 %v2978, %v2979
      %v2981 = vmax.f32 %v2897, %v2898
      %v2982 = vrot.slane %v2981, 4
      %v2983 = vmax.f32 %v2981, %v2982
      %v2984 = vrot.slane %v2983, 2
      %v2985 = vmax.f32 %v2983, %v2984
      %v2986 = vrot.slane %v2985, 1
      %v2987 = vmax.f32 %v2985, %v2986
      %v2988 = vmax.f32 %v2899, %v2900
      %v2989 = vrot.slane %v2988, 4
      %v2990 = vmax.f32 %v2988, %v2989
      %v2991 = vrot.slane %v2990, 2
      %v2992 = vmax.f32 %v2990, %v2991
      %v2993 = vrot.slane %v2992, 1
      %v2994 = vmax.f32 %v2992, %v2993
      %v2995 = vmax.f32 %v2901, %v2902
      %v2996 = vrot.slane %v2995, 4
      %v2997 = vmax.f32 %v2995, %v2996
      %v2998 = vrot.slane %v2997, 2
      %v2999 = vmax.f32 %v2997, %v2998
      %v3000 = vrot.slane %v2999, 1
      %v3001 = vmax.f32 %v2999, %v3000
      %v3002 = vmax.f32 %v2903, %v2904
      %v3003 = vrot.slane %v3002, 4
      %v3004 = vmax.f32 %v3002, %v3003
      %v3005 = vrot.slane %v3004, 2
      %v3006 = vmax.f32 %v3004, %v3005
      %v3007 = vrot.slane %v3006, 1
      %v3008 = vmax.f32 %v3006, %v3007
      %v3009 = vmax.f32 %v2905, %v2906
      %v3010 = vrot.slane %v3009, 4
      %v3011 = vmax.f32 %v3009, %v3010
      %v3012 = vrot.slane %v3011, 2
      %v3013 = vmax.f32 %v3011, %v3012
      %v3014 = vrot.slane %v3013, 1
      %v3015 = vmax.f32 %v3013, %v3014
      %v3016 = vmax.f32 %v2907, %v2908
      %v3017 = vrot.slane %v3016, 4
      %v3018 = vmax.f32 %v3016, %v3017
      %v3019 = vrot.slane %v3018, 2
      %v3020 = vmax.f32 %v3018, %v3019
      %v3021 = vrot.slane %v3020, 1
      %v3022 = vmax.f32 %v3020, %v3021
      %v3023 = vmax.f32 %v2909, %v2910
      %v3024 = vrot.slane %v3023, 4
      %v3025 = vmax.f32 %v3023, %v3024
      %v3026 = vrot.slane %v3025, 2
      %v3027 = vmax.f32 %v3025, %v3026
      %v3028 = vrot.slane %v3027, 1
      %v3029 = vmax.f32 %v3027, %v3028
      %v3030 = vmax.f32 %v2911, %v2912
      %v3031 = vrot.slane %v3030, 4
      %v3032 = vmax.f32 %v3030, %v3031
      %v3033 = vrot.slane %v3032, 2
      %v3034 = vmax.f32 %v3032, %v3033
      %v3035 = vrot.slane %v3034, 1
      %v3036 = vmax.f32 %v3034, %v3035
      %v3037 = vmax.f32 %v2913, %v2914
      %v3038 = vrot.slane %v3037, 4
      %v3039 = vmax.f32 %v3037, %v3038
      %v3040 = vrot.slane %v3039, 2
      %v3041 = vmax.f32 %v3039, %v3040
      %v3042 = vrot.slane %v3041, 1
      %v3043 = vmax.f32 %v3041, %v3042
      %v3044 = vmax.f32 %v2915, %v2916
      %v3045 = vrot.slane %v3044, 4
      %v3046 = vmax.f32 %v3044, %v3045
      %v3047 = vrot.slane %v3046, 2
      %v3048 = vmax.f32 %v3046, %v3047
      %v3049 = vrot.slane %v3048, 1
      %v3050 = vmax.f32 %v3048, %v3049
      %v3051 = vmax.f32 %v2917, %v2918
      %v3052 = vrot.slane %v3051, 4
      %v3053 = vmax.f32 %v3051, %v3052
      %v3054 = vrot.slane %v3053, 2
      %v3055 = vmax.f32 %v3053, %v3054
      %v3056 = vrot.slane %v3055, 1
      %v3057 = vmax.f32 %v3055, %v3056
      %v3058 = vmax.f32 %v2919, %v2920
      %v3059 = vrot.slane %v3058, 4
      %v3060 = vmax.f32 %v3058, %v3059
      %v3061 = vrot.slane %v3060, 2
      %v3062 = vmax.f32 %v3060, %v3061
      %v3063 = vrot.slane %v3062, 1
      %v3064 = vmax.f32 %v3062, %v3063
      %v3065 = vmax.f32 %v2921, %v2922
      %v3066 = vrot.slane %v3065, 4
      %v3067 = vmax.f32 %v3065, %v3066
      %v3068 = vrot.slane %v3067, 2
      %v3069 = vmax.f32 %v3067, %v3068
      %v3070 = vrot.slane %v3069, 1
      %v3071 = vmax.f32 %v3069, %v3070
      %v3072 = vmax.f32 %v2923, %v2924
      %v3073 = vrot.slane %v3072, 4
      %v3074 = vmax.f32 %v3072, %v3073
      %v3075 = vrot.slane %v3074, 2
      %v3076 = vmax.f32 %v3074, %v3075
      %v3077 = vrot.slane %v3076, 1
      %v3078 = vmax.f32 %v3076, %v3077
      %v3079 = vmax.f32 %v2925, %v2926
      %v3080 = vrot.slane %v3079, 4
      %v3081 = vmax.f32 %v3079, %v3080
      %v3082 = vrot.slane %v3081, 2
      %v3083 = vmax.f32 %v3081, %v3082
      %v3084 = vrot.slane %v3083, 1
      %v3085 = vmax.f32 %v3083, %v3084
      %v3086 = vmax.f32 %v2927, %v2928
      %v3087 = vrot.slane %v3086, 4
      %v3088 = vmax.f32 %v3086, %v3087
      %v3089 = vrot.slane %v3088, 2
      %v3090 = vmax.f32 %v3088, %v3089
      %v3091 = vrot.slane %v3090, 1
      %v3092 = vmax.f32 %v3090, %v3091
      %v3093 = vmax.f32 %v2929, %v2930
      %v3094 = vrot.slane %v3093, 4
      %v3095 = vmax.f32 %v3093, %v3094
      %v3096 = vrot.slane %v3095, 2
      %v3097 = vmax.f32 %v3095, %v3096
      %v3098 = vrot.slane %v3097, 1
      %v3099 = vmax.f32 %v3097, %v3098
      %v3100 = vmax.f32 %v2931, %v2932
      %v3101 = vrot.slane %v3100, 4
      %v3102 = vmax.f32 %v3100, %v3101
      %v3103 = vrot.slane %v3102, 2
      %v3104 = vmax.f32 %v3102, %v3103
      %v3105 = vrot.slane %v3104, 1
      %v3106 = vmax.f32 %v3104, %v3105
      %v3107 = vmax.f32 %v2933, %v2934
      %v3108 = vrot.slane %v3107, 4
      %v3109 = vmax.f32 %v3107, %v3108
      %v3110 = vrot.slane %v3109, 2
      %v3111 = vmax.f32 %v3109, %v3110
      %v3112 = vrot.slane %v3111, 1
      %v3113 = vmax.f32 %v3111, %v3112
      %v3114 = vmax.f32 %v2935, %v2936
      %v3115 = vrot.slane %v3114, 4
      %v3116 = vmax.f32 %v3114, %v3115
      %v3117 = vrot.slane %v3116, 2
      %v3118 = vmax.f32 %v3116, %v3117
      %v3119 = vrot.slane %v3118, 1
      %v3120 = vmax.f32 %v3118, %v3119
      %v3121 = vmax.f32 %v2937, %v2938
      %v3122 = vrot.slane %v3121, 4
      %v3123 = vmax.f32 %v3121, %v3122
      %v3124 = vrot.slane %v3123, 2
      %v3125 = vmax.f32 %v3123, %v3124
      %v3126 = vrot.slane %v3125, 1
      %v3127 = vmax.f32 %v3125, %v3126
      %v3128 = vmax.f32 %v2939, %v2940
      %v3129 = vrot.slane %v3128, 4
      %v3130 = vmax.f32 %v3128, %v3129
      %v3131 = vrot.slane %v3130, 2
      %v3132 = vmax.f32 %v3130, %v3131
      %v3133 = vrot.slane %v3132, 1
      %v3134 = vmax.f32 %v3132, %v3133
      %v3135 = vmax.f32 %v2941, %v2942
      %v3136 = vrot.slane %v3135, 4
      %v3137 = vmax.f32 %v3135, %v3136
      %v3138 = vrot.slane %v3137, 2
      %v3139 = vmax.f32 %v3137, %v3138
      %v3140 = vrot.slane %v3139, 1
      %v3141 = vmax.f32 %v3139, %v3140
      %v3142 = vmax.f32 %v2943, %v2944
      %v3143 = vrot.slane %v3142, 4
      %v3144 = vmax.f32 %v3142, %v3143
      %v3145 = vrot.slane %v3144, 2
      %v3146 = vmax.f32 %v3144, %v3145
      %v3147 = vrot.slane %v3146, 1
      %v3148 = vmax.f32 %v3146, %v3147
      %v3149 = vmax.f32 %v2945, %v2946
      %v3150 = vrot.slane %v3149, 4
      %v3151 = vmax.f32 %v3149, %v3150
      %v3152 = vrot.slane %v3151, 2
      %v3153 = vmax.f32 %v3151, %v3152
      %v3154 = vrot.slane %v3153, 1
      %v3155 = vmax.f32 %v3153, %v3154
      %v3156 = vmax.f32 %v2947, %v2948
      %v3157 = vrot.slane %v3156, 4
      %v3158 = vmax.f32 %v3156, %v3157
      %v3159 = vrot.slane %v3158, 2
      %v3160 = vmax.f32 %v3158, %v3159
      %v3161 = vrot.slane %v3160, 1
      %v3162 = vmax.f32 %v3160, %v3161
      %v3163 = vmax.f32 %v2949, %v2950
      %v3164 = vrot.slane %v3163, 4
      %v3165 = vmax.f32 %v3163, %v3164
      %v3166 = vrot.slane %v3165, 2
      %v3167 = vmax.f32 %v3165, %v3166
      %v3168 = vrot.slane %v3167, 1
      %v3169 = vmax.f32 %v3167, %v3168
      %v3170 = vmax.f32 %v2951, %v2952
      %v3171 = vrot.slane %v3170, 4
      %v3172 = vmax.f32 %v3170, %v3171
      %v3173 = vrot.slane %v3172, 2
      %v3174 = vmax.f32 %v3172, %v3173
      %v3175 = vrot.slane %v3174, 1
      %v3176 = vmax.f32 %v3174, %v3175
      %v3177 = vld [vmem:[%s1 + $0x14] sm:$0xff]
      %v3178 = vld [vmem:[%s1 + $0x1c] sm:$0xff]
      %v3179 = vld [vmem:[%s1 + $0x38] sm:$0xff]
      %v3180 = vld [vmem:[%s1 + $0x40] sm:$0xff]
      %v3181 = vld [vmem:[%s1 + $0x5c] sm:$0xff]
      %v3182 = vld [vmem:[%s1 + $0x64] sm:$0xff]
      %v3183 = vld [vmem:[%s1 + $0x80] sm:$0xff]
      %v3184 = vld [vmem:[%s1 + $0x88] sm:$0xff]
      %v3185 = vld [vmem:[%s1 + $0xa4] sm:$0xff]
      %v3186 = vld [vmem:[%s1 + $0xac] sm:$0xff]
      %v3187 = vld [vmem:[%s1 + $0xc8] sm:$0xff]
      %v3188 = vld [vmem:[%s1 + $0xd0] sm:$0xff]
      %v3189 = vld [vmem:[%s1 + $0xec] sm:$0xff]
      %v3190 = vld [vmem:[%s1 + $0xf4] sm:$0xff]
      %v3191 = vld [vmem:[%s1 + $0x110] sm:$0xff]
      %v3192 = vld [vmem:[%s1 + $0x118] sm:$0xff]
      %v3193 = vld [vmem:[%s1 + $0x134] sm:$0xff]
      %v3194 = vld [vmem:[%s1 + $0x13c] sm:$0xff]
      %v3195 = vld [vmem:[%s1 + $0x158] sm:$0xff]
      %v3196 = vld [vmem:[%s1 + $0x160] sm:$0xff]
      %v3197 = vld [vmem:[%s1 + $0x17c] sm:$0xff]
      %v3198 = vld [vmem:[%s1 + $0x184] sm:$0xff]
      %v3199 = vld [vmem:[%s1 + $0x1a0] sm:$0xff]
      %v3200 = vld [vmem:[%s1 + $0x1a8] sm:$0xff]
      %v3201 = vld [vmem:[%s1 + $0x1c4] sm:$0xff]
      %v3202 = vld [vmem:[%s1 + $0x1cc] sm:$0xff]
      %v3203 = vld [vmem:[%s1 + $0x1e8] sm:$0xff]
      %v3204 = vld [vmem:[%s1 + $0x1f0] sm:$0xff]
      %v3205 = vld [vmem:[%s1 + $0x20c] sm:$0xff]
      %v3206 = vld [vmem:[%s1 + $0x214] sm:$0xff]
      %v3207 = vld [vmem:[%s1 + $0x230] sm:$0xff]
      %v3208 = vld [vmem:[%s1 + $0x238] sm:$0xff]
      %v3241 = vunpack.c.l.b16 %v3177
      %v3242 = vunpack.c.h.b16 %v3177
      %v3243 = vunpack.c.l.b16 %v3178
      %v3244 = vunpack.c.h.b16 %v3178
      %v3245 = vunpack.c.l.b16 %v3179
      %v3246 = vunpack.c.h.b16 %v3179
      %v3247 = vunpack.c.l.b16 %v3180
      %v3248 = vunpack.c.h.b16 %v3180
      %v3249 = vunpack.c.l.b16 %v3181
      %v3250 = vunpack.c.h.b16 %v3181
      %v3251 = vunpack.c.l.b16 %v3182
      %v3252 = vunpack.c.h.b16 %v3182
      %v3253 = vunpack.c.l.b16 %v3183
      %v3254 = vunpack.c.h.b16 %v3183
      %v3255 = vunpack.c.l.b16 %v3184
      %v3256 = vunpack.c.h.b16 %v3184
      %v3257 = vunpack.c.l.b16 %v3185
      %v3258 = vunpack.c.h.b16 %v3185
      %v3259 = vunpack.c.l.b16 %v3186
      %v3260 = vunpack.c.h.b16 %v3186
      %v3261 = vunpack.c.l.b16 %v3187
      %v3262 = vunpack.c.h.b16 %v3187
      %v3263 = vunpack.c.l.b16 %v3188
      %v3264 = vunpack.c.h.b16 %v3188
      %v3265 = vunpack.c.l.b16 %v3189
      %v3266 = vunpack.c.h.b16 %v3189
      %v3267 = vunpack.c.l.b16 %v3190
      %v3268 = vunpack.c.h.b16 %v3190
      %v3269 = vunpack.c.l.b16 %v3191
      %v3270 = vunpack.c.h.b16 %v3191
      %v3271 = vunpack.c.l.b16 %v3192
      %v3272 = vunpack.c.h.b16 %v3192
      %v3273 = vunpack.c.l.b16 %v3193
      %v3274 = vunpack.c.h.b16 %v3193
      %v3275 = vunpack.c.l.b16 %v3194
      %v3276 = vunpack.c.h.b16 %v3194
      %v3277 = vunpack.c.l.b16 %v3195
      %v3278 = vunpack.c.h.b16 %v3195
      %v3279 = vunpack.c.l.b16 %v3196
      %v3280 = vunpack.c.h.b16 %v3196
      %v3281 = vunpack.c.l.b16 %v3197
      %v3282 = vunpack.c.h.b16 %v3197
      %v3283 = vunpack.c.l.b16 %v3198
      %v3284 = vunpack.c.h.b16 %v3198
      %v3285 = vunpack.c.l.b16 %v3199
      %v3286 = vunpack.c.h.b16 %v3199
      %v3287 = vunpack.c.l.b16 %v3200
      %v3288 = vunpack.c.h.b16 %v3200
      %v3289 = vunpack.c.l.b16 %v3201
      %v3290 = vunpack.c.h.b16 %v3201
      %v3291 = vunpack.c.l.b16 %v3202
      %v3292 = vunpack.c.h.b16 %v3202
      %v3293 = vunpack.c.l.b16 %v3203
      %v3294 = vunpack.c.h.b16 %v3203
      %v3295 = vunpack.c.l.b16 %v3204
      %v3296 = vunpack.c.h.b16 %v3204
      %v3297 = vunpack.c.l.b16 %v3205
      %v3298 = vunpack.c.h.b16 %v3205
      %v3299 = vunpack.c.l.b16 %v3206
      %v3300 = vunpack.c.h.b16 %v3206
      %v3301 = vunpack.c.l.b16 %v3207
      %v3302 = vunpack.c.h.b16 %v3207
      %v3303 = vunpack.c.l.b16 %v3208
      %v3304 = vunpack.c.h.b16 %v3208
      %v3305 = vpack.c.b16 %v3245, %v3241
      %v3306 = vpack.c.b16 %v3246, %v3242
      %v3307 = vpack.c.b16 %v3247, %v3243
      %v3308 = vpack.c.b16 %v3248, %v3244
      %v3309 = vpack.c.b16 %v3253, %v3249
      %v3310 = vpack.c.b16 %v3254, %v3250
      %v3311 = vpack.c.b16 %v3255, %v3251
      %v3312 = vpack.c.b16 %v3256, %v3252
      %v3313 = vpack.c.b16 %v3261, %v3257
      %v3314 = vpack.c.b16 %v3262, %v3258
      %v3315 = vpack.c.b16 %v3263, %v3259
      %v3316 = vpack.c.b16 %v3264, %v3260
      %v3317 = vpack.c.b16 %v3269, %v3265
      %v3318 = vpack.c.b16 %v3270, %v3266
      %v3319 = vpack.c.b16 %v3271, %v3267
      %v3320 = vpack.c.b16 %v3272, %v3268
      %v3321 = vpack.c.b16 %v3277, %v3273
      %v3322 = vpack.c.b16 %v3278, %v3274
      %v3323 = vpack.c.b16 %v3279, %v3275
      %v3324 = vpack.c.b16 %v3280, %v3276
      %v3325 = vpack.c.b16 %v3285, %v3281
      %v3326 = vpack.c.b16 %v3286, %v3282
      %v3327 = vpack.c.b16 %v3287, %v3283
      %v3328 = vpack.c.b16 %v3288, %v3284
      %v3329 = vpack.c.b16 %v3293, %v3289
      %v3330 = vpack.c.b16 %v3294, %v3290
      %v3331 = vpack.c.b16 %v3295, %v3291
      %v3332 = vpack.c.b16 %v3296, %v3292
      %v3333 = vpack.c.b16 %v3301, %v3297
      %v3334 = vpack.c.b16 %v3302, %v3298
      %v3335 = vpack.c.b16 %v3303, %v3299
      %v3336 = vpack.c.b16 %v3304, %v3300
      %3369 = vmatprep.subr.bf16.mxu0 %v3306
      %3370 = vmatpush1.bf16.msra.mxu0 %v3305
      %3371 = vmatprep.subr.bf16.mxu0 %v3310
      %3372 = vmatpush1.bf16.msra.mxu0 %v3309
      %3373 = vmatprep.subr.bf16.mxu0 %v3314
      %3374 = vmatpush1.bf16.msra.mxu0 %v3313
      %3375 = vmatprep.subr.bf16.mxu0 %v3318
      %3376 = vmatpush1.bf16.msra.mxu0 %v3317
      %3377 = vmatprep.subr.bf16.mxu0 %v3322
      %3378 = vmatpush1.bf16.msra.mxu0 %v3321
      %3379 = vmatprep.subr.bf16.mxu0 %v3326
      %3380 = vmatpush1.bf16.msra.mxu0 %v3325
      %3381 = vmatprep.subr.bf16.mxu0 %v3330
      %3382 = vmatpush1.bf16.msra.mxu0 %v3329
      %3383 = vmatprep.subr.bf16.mxu0 %v3334
      %3384 = vmatpush1.bf16.msra.mxu0 %v3333
      %3385 = vmatprep.subr.bf16.mxu0 0
      %3386 = vmatpush1.bf16.msra.mxu0 0
      %3387 = vmatprep.subr.bf16.mxu0 0
      %3388 = vmatpush1.bf16.msra.mxu0 0
      %3389 = vmatprep.subr.bf16.mxu0 0
      %3390 = vmatpush1.bf16.msra.mxu0 0
      %3391 = vmatprep.subr.bf16.mxu0 0
      %3392 = vmatpush1.bf16.msra.mxu0 0
      %3393 = vmatprep.subr.bf16.mxu0 0
      %3394 = vmatpush1.bf16.msra.mxu0 0
      %3395 = vmatprep.subr.bf16.mxu0 0
      %3396 = vmatpush1.bf16.msra.mxu0 0
      %3397 = vmatprep.subr.bf16.mxu0 0
      %3398 = vmatpush1.bf16.msra.mxu0 0
      %3399 = vmatprep.subr.bf16.mxu0 0
      %3400 = vmatpush1.bf16.msra.mxu0 0
      %3401 = vmatprep.mubr.bf16.mxu0 0
      %3402 = vmatmul.mubr.bf16.gmra.mrb[0].mxu0 %v444
      %v3403 = vpop.f32.mrb[0].mxu0
      %v3404 = vadd.f32 0.0, %v3403
      %v3405 = vpop.f32.mrb[0].mxu0
      %v3406 = vadd.f32 0.0, %v3405
      %v3407 = vpop.f32.mrb[0].mxu0
      %v3408 = vadd.f32 0.0, %v3407
      %v3409 = vpop.f32.mrb[0].mxu0
      %v3410 = vadd.f32 0.0, %v3409
      %3411 = vmatprep.mubr.bf16.mxu0 0
      %3412 = vmatmul.mubr.bf16.gmra.mrb[0].mxu0 %v445
      %v3413 = vpop.f32.mrb[0].mxu0
      %v3414 = vadd.f32 0.0, %v3413
      %v3415 = vpop.f32.mrb[0].mxu0
      %v3416 = vadd.f32 0.0, %v3415
      %v3417 = vpop.f32.mrb[0].mxu0
      %v3418 = vadd.f32 0.0, %v3417
      %v3419 = vpop.f32.mrb[0].mxu0
      %v3420 = vadd.f32 0.0, %v3419
      %3421 = vmatprep.mubr.bf16.mxu0 0
      %3422 = vmatmul.mubr.bf16.gmra.mrb[0].mxu0 %v446
      %v3423 = vpop.f32.mrb[0].mxu0
      %v3424 = vadd.f32 0.0, %v3423
      %v3425 = vpop.f32.mrb[0].mxu0
      %v3426 = vadd.f32 0.0, %v3425
      %v3427 = vpop.f32.mrb[0].mxu0
      %v3428 = vadd.f32 0.0, %v3427
      %v3429 = vpop.f32.mrb[0].mxu0
      %v3430 = vadd.f32 0.0, %v3429
      %3431 = vmatprep.mubr.bf16.mxu0 0
      %3432 = vmatmul.mubr.bf16.gmra.mrb[0].mxu0 %v447
      %v3433 = vpop.f32.mrb[0].mxu0
      %v3434 = vadd.f32 0.0, %v3433
      %v3435 = vpop.f32.mrb[0].mxu0
      %v3436 = vadd.f32 0.0, %v3435
      %v3437 = vpop.f32.mrb[0].mxu0
      %v3438 = vadd.f32 0.0, %v3437
      %v3439 = vpop.f32.mrb[0].mxu0
      %v3440 = vadd.f32 0.0, %v3439
      %3441 = vmatprep.mubr.bf16.mxu0 0
      %3442 = vmatmul.mubr.bf16.gmra.mrb[0].mxu0 %v448
      %v3443 = vpop.f32.mrb[0].mxu0
      %v3444 = vadd.f32 0.0, %v3443
      %v3445 = vpop.f32.mrb[0].mxu0
      %v3446 = vadd.f32 0.0, %v3445
      %v3447 = vpop.f32.mrb[0].mxu0
      %v3448 = vadd.f32 0.0, %v3447
      %v3449 = vpop.f32.mrb[0].mxu0
      %v3450 = vadd.f32 0.0, %v3449
      %3451 = vmatprep.mubr.bf16.mxu0 0
      %3452 = vmatmul.mubr.bf16.gmra.mrb[0].mxu0 %v449
      %v3453 = vpop.f32.mrb[0].mxu0
      %v3454 = vadd.f32 0.0, %v3453
      %v3455 = vpop.f32.mrb[0].mxu0
      %v3456 = vadd.f32 0.0, %v3455
      %v3457 = vpop.f32.mrb[0].mxu0
      %v3458 = vadd.f32 0.0, %v3457
      %v3459 = vpop.f32.mrb[0].mxu0
      %v3460 = vadd.f32 0.0, %v3459
      %3461 = vmatprep.mubr.bf16.mxu0 0
      %3462 = vmatmul.mubr.bf16.gmra.mrb[0].mxu0 %v450
      %v3463 = vpop.f32.mrb[0].mxu0
      %v3464 = vadd.f32 0.0, %v3463
      %v3465 = vpop.f32.mrb[0].mxu0
      %v3466 = vadd.f32 0.0, %v3465
      %v3467 = vpop.f32.mrb[0].mxu0
      %v3468 = vadd.f32 0.0, %v3467
      %v3469 = vpop.f32.mrb[0].mxu0
      %v3470 = vadd.f32 0.0, %v3469
      %3471 = vmatprep.mubr.bf16.mxu0 0
      %3472 = vmatmul.mubr.bf16.gmra.mrb[0].mxu0 %v451
      %v3473 = vpop.f32.mrb[0].mxu0
      %v3474 = vadd.f32 0.0, %v3473
      %v3475 = vpop.f32.mrb[0].mxu0
      %v3476 = vadd.f32 0.0, %v3475
      %v3477 = vpop.f32.mrb[0].mxu0
      %v3478 = vadd.f32 0.0, %v3477
      %v3479 = vpop.f32.mrb[0].mxu0
      %v3480 = vadd.f32 0.0, %v3479
      %3481 = vmatprep.mubr.bf16.mxu0 0
      %3482 = vmatmul.mubr.bf16.gmra.mrb[0].mxu0 %v452
      %v3483 = vpop.f32.mrb[0].mxu0
      %v3484 = vadd.f32 0.0, %v3483
      %v3485 = vpop.f32.mrb[0].mxu0
      %v3486 = vadd.f32 0.0, %v3485
      %v3487 = vpop.f32.mrb[0].mxu0
      %v3488 = vadd.f32 0.0, %v3487
      %v3489 = vpop.f32.mrb[0].mxu0
      %v3490 = vadd.f32 0.0, %v3489
      %3491 = vmatprep.mubr.bf16.mxu0 0
      %3492 = vmatmul.mubr.bf16.gmra.mrb[0].mxu0 %v453
      %v3493 = vpop.f32.mrb[0].mxu0
      %v3494 = vadd.f32 0.0, %v3493
      %v3495 = vpop.f32.mrb[0].mxu0
      %v3496 = vadd.f32 0.0, %v3495
      %v3497 = vpop.f32.mrb[0].mxu0
      %v3498 = vadd.f32 0.0, %v3497
      %v3499 = vpop.f32.mrb[0].mxu0
      %v3500 = vadd.f32 0.0, %v3499
      %3501 = vmatprep.mubr.bf16.mxu0 0
      %3502 = vmatmul.mubr.bf16.gmra.mrb[0].mxu0 %v454
      %v3503 = vpop.f32.mrb[0].mxu0
      %v3504 = vadd.f32 0.0, %v3503
      %v3505 = vpop.f32.mrb[0].mxu0
      %v3506 = vadd.f32 0.0, %v3505
      %v3507 = vpop.f32.mrb[0].mxu0
      %v3508 = vadd.f32 0.0, %v3507
      %v3509 = vpop.f32.mrb[0].mxu0
      %v3510 = vadd.f32 0.0, %v3509
      %3511 = vmatprep.mubr.bf16.mxu0 0
      %3512 = vmatmul.mubr.bf16.gmra.mrb[0].mxu0 %v455
      %v3513 = vpop.f32.mrb[0].mxu0
      %v3514 = vadd.f32 0.0, %v3513
      %v3515 = vpop.f32.mrb[0].mxu0
      %v3516 = vadd.f32 0.0, %v3515
      %v3517 = vpop.f32.mrb[0].mxu0
      %v3518 = vadd.f32 0.0, %v3517
      %v3519 = vpop.f32.mrb[0].mxu0
      %v3520 = vadd.f32 0.0, %v3519
      %3521 = vmatprep.mubr.bf16.mxu0 0
      %3522 = vmatmul.mubr.bf16.gmra.mrb[0].mxu0 %v456
      %v3523 = vpop.f32.mrb[0].mxu0
      %v3524 = vadd.f32 0.0, %v3523
      %v3525 = vpop.f32.mrb[0].mxu0
      %v3526 = vadd.f32 0.0, %v3525
      %v3527 = vpop.f32.mrb[0].mxu0
      %v3528 = vadd.f32 0.0, %v3527
      %v3529 = vpop.f32.mrb[0].mxu0
      %v3530 = vadd.f32 0.0, %v3529
      %3531 = vmatprep.mubr.bf16.mxu0 0
      %3532 = vmatmul.mubr.bf16.gmra.mrb[0].mxu0 %v457
      %v3533 = vpop.f32.mrb[0].mxu0
      %v3534 = vadd.f32 0.0, %v3533
      %v3535 = vpop.f32.mrb[0].mxu0
      %v3536 = vadd.f32 0.0, %v3535
      %v3537 = vpop.f32.mrb[0].mxu0
      %v3538 = vadd.f32 0.0, %v3537
      %v3539 = vpop.f32.mrb[0].mxu0
      %v3540 = vadd.f32 0.0, %v3539
      %3541 = vmatprep.mubr.bf16.mxu0 0
      %3542 = vmatmul.mubr.bf16.gmra.mrb[0].mxu0 %v458
      %v3543 = vpop.f32.mrb[0].mxu0
      %v3544 = vadd.f32 0.0, %v3543
      %v3545 = vpop.f32.mrb[0].mxu0
      %v3546 = vadd.f32 0.0, %v3545
      %v3547 = vpop.f32.mrb[0].mxu0
      %v3548 = vadd.f32 0.0, %v3547
      %v3549 = vpop.f32.mrb[0].mxu0
      %v3550 = vadd.f32 0.0, %v3549
      %3551 = vmatprep.mubr.bf16.mxu0 0
      %3552 = vmatmul.mubr.bf16.gmra.mrb[0].mxu0 %v459
      %v3553 = vpop.f32.mrb[0].mxu0
      %v3554 = vadd.f32 0.0, %v3553
      %v3555 = vpop.f32.mrb[0].mxu0
      %v3556 = vadd.f32 0.0, %v3555
      %v3557 = vpop.f32.mrb[0].mxu0
      %v3558 = vadd.f32 0.0, %v3557
      %v3559 = vpop.f32.mrb[0].mxu0
      %v3560 = vadd.f32 0.0, %v3559
      %3561 = vmatprep.mubr.bf16.mxu0 0
      %3562 = vmatmul.mubr.bf16.gmra.mrb[0].mxu0 %v460
      %v3563 = vpop.f32.mrb[0].mxu0
      %v3564 = vadd.f32 0.0, %v3563
      %v3565 = vpop.f32.mrb[0].mxu0
      %v3566 = vadd.f32 0.0, %v3565
      %v3567 = vpop.f32.mrb[0].mxu0
      %v3568 = vadd.f32 0.0, %v3567
      %v3569 = vpop.f32.mrb[0].mxu0
      %v3570 = vadd.f32 0.0, %v3569
      %3571 = vmatprep.mubr.bf16.mxu0 0
      %3572 = vmatmul.mubr.bf16.gmra.mrb[0].mxu0 %v461
      %v3573 = vpop.f32.mrb[0].mxu0
      %v3574 = vadd.f32 0.0, %v3573
      %v3575 = vpop.f32.mrb[0].mxu0
      %v3576 = vadd.f32 0.0, %v3575
      %v3577 = vpop.f32.mrb[0].mxu0
      %v3578 = vadd.f32 0.0, %v3577
      %v3579 = vpop.f32.mrb[0].mxu0
      %v3580 = vadd.f32 0.0, %v3579
      %3581 = vmatprep.mubr.bf16.mxu0 0
      %3582 = vmatmul.mubr.bf16.gmra.mrb[0].mxu0 %v462
      %v3583 = vpop.f32.mrb[0].mxu0
      %v3584 = vadd.f32 0.0, %v3583
      %v3585 = vpop.f32.mrb[0].mxu0
      %v3586 = vadd.f32 0.0, %v3585
      %v3587 = vpop.f32.mrb[0].mxu0
      %v3588 = vadd.f32 0.0, %v3587
      %v3589 = vpop.f32.mrb[0].mxu0
      %v3590 = vadd.f32 0.0, %v3589
      %3591 = vmatprep.mubr.bf16.mxu0 0
      %3592 = vmatmul.mubr.bf16.gmra.mrb[0].mxu0 %v463
      %v3593 = vpop.f32.mrb[0].mxu0
      %v3594 = vadd.f32 0.0, %v3593
      %v3595 = vpop.f32.mrb[0].mxu0
      %v3596 = vadd.f32 0.0, %v3595
      %v3597 = vpop.f32.mrb[0].mxu0
      %v3598 = vadd.f32 0.0, %v3597
      %v3599 = vpop.f32.mrb[0].mxu0
      %v3600 = vadd.f32 0.0, %v3599
      %3601 = vmatprep.mubr.bf16.mxu0 0
      %3602 = vmatmul.mubr.bf16.gmra.mrb[0].mxu0 %v464
      %v3603 = vpop.f32.mrb[0].mxu0
      %v3604 = vadd.f32 0.0, %v3603
      %v3605 = vpop.f32.mrb[0].mxu0
      %v3606 = vadd.f32 0.0, %v3605
      %v3607 = vpop.f32.mrb[0].mxu0
      %v3608 = vadd.f32 0.0, %v3607
      %v3609 = vpop.f32.mrb[0].mxu0
      %v3610 = vadd.f32 0.0, %v3609
      %3611 = vmatprep.mubr.bf16.mxu0 0
      %3612 = vmatmul.mubr.bf16.gmra.mrb[0].mxu0 %v465
      %v3613 = vpop.f32.mrb[0].mxu0
      %v3614 = vadd.f32 0.0, %v3613
      %v3615 = vpop.f32.mrb[0].mxu0
      %v3616 = vadd.f32 0.0, %v3615
      %v3617 = vpop.f32.mrb[0].mxu0
      %v3618 = vadd.f32 0.0, %v3617
      %v3619 = vpop.f32.mrb[0].mxu0
      %v3620 = vadd.f32 0.0, %v3619
      %3621 = vmatprep.mubr.bf16.mxu0 0
      %3622 = vmatmul.mubr.bf16.gmra.mrb[0].mxu0 %v466
      %v3623 = vpop.f32.mrb[0].mxu0
      %v3624 = vadd.f32 0.0, %v3623
      %v3625 = vpop.f32.mrb[0].mxu0
      %v3626 = vadd.f32 0.0, %v3625
      %v3627 = vpop.f32.mrb[0].mxu0
      %v3628 = vadd.f32 0.0, %v3627
      %v3629 = vpop.f32.mrb[0].mxu0
      %v3630 = vadd.f32 0.0, %v3629
      %3631 = vmatprep.mubr.bf16.mxu0 0
      %3632 = vmatmul.mubr.bf16.gmra.mrb[0].mxu0 %v467
      %v3633 = vpop.f32.mrb[0].mxu0
      %v3634 = vadd.f32 0.0, %v3633
      %v3635 = vpop.f32.mrb[0].mxu0
      %v3636 = vadd.f32 0.0, %v3635
      %v3637 = vpop.f32.mrb[0].mxu0
      %v3638 = vadd.f32 0.0, %v3637
      %v3639 = vpop.f32.mrb[0].mxu0
      %v3640 = vadd.f32 0.0, %v3639
      %3641 = vmatprep.mubr.bf16.mxu0 0
      %3642 = vmatmul.mubr.bf16.gmra.mrb[0].mxu0 %v468
      %v3643 = vpop.f32.mrb[0].mxu0
      %v3644 = vadd.f32 0.0, %v3643
      %v3645 = vpop.f32.mrb[0].mxu0
      %v3646 = vadd.f32 0.0, %v3645
      %v3647 = vpop.f32.mrb[0].mxu0
      %v3648 = vadd.f32 0.0, %v3647
      %v3649 = vpop.f32.mrb[0].mxu0
      %v3650 = vadd.f32 0.0, %v3649
      %3651 = vmatprep.mubr.bf16.mxu0 0
      %3652 = vmatmul.mubr.bf16.gmra.mrb[0].mxu0 %v469
      %v3653 = vpop.f32.mrb[0].mxu0
      %v3654 = vadd.f32 0.0, %v3653
      %v3655 = vpop.f32.mrb[0].mxu0
      %v3656 = vadd.f32 0.0, %v3655
      %v3657 = vpop.f32.mrb[0].mxu0
      %v3658 = vadd.f32 0.0, %v3657
      %v3659 = vpop.f32.mrb[0].mxu0
      %v3660 = vadd.f32 0.0, %v3659
      %3661 = vmatprep.mubr.bf16.mxu0 0
      %3662 = vmatmul.mubr.bf16.gmra.mrb[0].mxu0 %v470
      %v3663 = vpop.f32.mrb[0].mxu0
      %v3664 = vadd.f32 0.0, %v3663
      %v3665 = vpop.f32.mrb[0].mxu0
      %v3666 = vadd.f32 0.0, %v3665
      %v3667 = vpop.f32.mrb[0].mxu0
      %v3668 = vadd.f32 0.0, %v3667
      %v3669 = vpop.f32.mrb[0].mxu0
      %v3670 = vadd.f32 0.0, %v3669
      %3671 = vmatprep.mubr.bf16.mxu0 0
      %3672 = vmatmul.mubr.bf16.gmra.mrb[0].mxu0 %v471
      %v3673 = vpop.f32.mrb[0].mxu0
      %v3674 = vadd.f32 0.0, %v3673
      %v3675 = vpop.f32.mrb[0].mxu0
      %v3676 = vadd.f32 0.0, %v3675
      %v3677 = vpop.f32.mrb[0].mxu0
      %v3678 = vadd.f32 0.0, %v3677
      %v3679 = vpop.f32.mrb[0].mxu0
      %v3680 = vadd.f32 0.0, %v3679
      %3681 = vmatprep.mubr.bf16.mxu0 0
      %3682 = vmatmul.mubr.bf16.gmra.mrb[0].mxu0 %v472
      %v3683 = vpop.f32.mrb[0].mxu0
      %v3684 = vadd.f32 0.0, %v3683
      %v3685 = vpop.f32.mrb[0].mxu0
      %v3686 = vadd.f32 0.0, %v3685
      %v3687 = vpop.f32.mrb[0].mxu0
      %v3688 = vadd.f32 0.0, %v3687
      %v3689 = vpop.f32.mrb[0].mxu0
      %v3690 = vadd.f32 0.0, %v3689
      %3691 = vmatprep.mubr.bf16.mxu0 0
      %3692 = vmatmul.mubr.bf16.gmra.mrb[0].mxu0 %v473
      %v3693 = vpop.f32.mrb[0].mxu0
      %v3694 = vadd.f32 0.0, %v3693
      %v3695 = vpop.f32.mrb[0].mxu0
      %v3696 = vadd.f32 0.0, %v3695
      %v3697 = vpop.f32.mrb[0].mxu0
      %v3698 = vadd.f32 0.0, %v3697
      %v3699 = vpop.f32.mrb[0].mxu0
      %v3700 = vadd.f32 0.0, %v3699
      %3701 = vmatprep.mubr.bf16.mxu0 0
      %3702 = vmatmul.mubr.bf16.gmra.mrb[0].mxu0 %v474
      %v3703 = vpop.f32.mrb[0].mxu0
      %v3704 = vadd.f32 0.0, %v3703
      %v3705 = vpop.f32.mrb[0].mxu0
      %v3706 = vadd.f32 0.0, %v3705
      %v3707 = vpop.f32.mrb[0].mxu0
      %v3708 = vadd.f32 0.0, %v3707
      %v3709 = vpop.f32.mrb[0].mxu0
      %v3710 = vadd.f32 0.0, %v3709
      %3711 = vmatprep.mubr.bf16.mxu0 0
      %3712 = vmatmul.mubr.bf16.gmra.mrb[0].mxu0 %v475
      %v3713 = vpop.f32.mrb[0].mxu0
      %v3714 = vadd.f32 0.0, %v3713
      %v3715 = vpop.f32.mrb[0].mxu0
      %v3716 = vadd.f32 0.0, %v3715
      %v3717 = vpop.f32.mrb[0].mxu0
      %v3718 = vadd.f32 0.0, %v3717
      %v3719 = vpop.f32.mrb[0].mxu0
      %v3720 = vadd.f32 0.0, %v3719
      %3721 = vdwg.mxu0
      %3722 = vmatprep.subr.bf16.mxu0 %v3308
      %3723 = vmatpush1.bf16.msra.mxu0 %v3307
      %3724 = vmatprep.subr.bf16.mxu0 %v3312
      %3725 = vmatpush1.bf16.msra.mxu0 %v3311
      %3726 = vmatprep.subr.bf16.mxu0 %v3316
      %3727 = vmatpush1.bf16.msra.mxu0 %v3315
      %3728 = vmatprep.subr.bf16.mxu0 %v3320
      %3729 = vmatpush1.bf16.msra.mxu0 %v3319
      %3730 = vmatprep.subr.bf16.mxu0 %v3324
      %3731 = vmatpush1.bf16.msra.mxu0 %v3323
      %3732 = vmatprep.subr.bf16.mxu0 %v3328
      %3733 = vmatpush1.bf16.msra.mxu0 %v3327
      %3734 = vmatprep.subr.bf16.mxu0 %v3332
      %3735 = vmatpush1.bf16.msra.mxu0 %v3331
      %3736 = vmatprep.subr.bf16.mxu0 %v3336
      %3737 = vmatpush1.bf16.msra.mxu0 %v3335
      %3738 = vmatprep.subr.bf16.mxu0 0
      %3739 = vmatpush1.bf16.msra.mxu0 0
      %3740 = vmatprep.subr.bf16.mxu0 0
      %3741 = vmatpush1.bf16.msra.mxu0 0
      %3742 = vmatprep.subr.bf16.mxu0 0
      %3743 = vmatpush1.bf16.msra.mxu0 0
      %3744 = vmatprep.subr.bf16.mxu0 0
      %3745 = vmatpush1.bf16.msra.mxu0 0
      %3746 = vmatprep.subr.bf16.mxu0 0
      %3747 = vmatpush1.bf16.msra.mxu0 0
      %3748 = vmatprep.subr.bf16.mxu0 0
      %3749 = vmatpush1.bf16.msra.mxu0 0
      %3750 = vmatprep.subr.bf16.mxu0 0
      %3751 = vmatpush1.bf16.msra.mxu0 0
      %3752 = vmatprep.subr.bf16.mxu0 0
      %3753 = vmatpush1.bf16.msra.mxu0 0
      %3754 = vmatprep.mubr.bf16.mxu0 0
      %3755 = vmatmul.mubr.bf16.gmra.mrb[0].mxu0 %v444
      %v3756 = vpop.f32.mrb[0].mxu0
      %v3757 = vadd.f32 0.0, %v3756
      %v3758 = vpop.f32.mrb[0].mxu0
      %v3759 = vadd.f32 0.0, %v3758
      %v3760 = vpop.f32.mrb[0].mxu0
      %v3761 = vadd.f32 0.0, %v3760
      %v3762 = vpop.f32.mrb[0].mxu0
      %v3763 = vadd.f32 0.0, %v3762
      %3764 = vmatprep.mubr.bf16.mxu0 0
      %3765 = vmatmul.mubr.bf16.gmra.mrb[0].mxu0 %v445
      %v3766 = vpop.f32.mrb[0].mxu0
      %v3767 = vadd.f32 0.0, %v3766
      %v3768 = vpop.f32.mrb[0].mxu0
      %v3769 = vadd.f32 0.0, %v3768
      %v3770 = vpop.f32.mrb[0].mxu0
      %v3771 = vadd.f32 0.0, %v3770
      %v3772 = vpop.f32.mrb[0].mxu0
      %v3773 = vadd.f32 0.0, %v3772
      %3774 = vmatprep.mubr.bf16.mxu0 0
      %3775 = vmatmul.mubr.bf16.gmra.mrb[0].mxu0 %v446
      %v3776 = vpop.f32.mrb[0].mxu0
      %v3777 = vadd.f32 0.0, %v3776
      %v3778 = vpop.f32.mrb[0].mxu0
      %v3779 = vadd.f32 0.0, %v3778
      %v3780 = vpop.f32.mrb[0].mxu0
      %v3781 = vadd.f32 0.0, %v3780
      %v3782 = vpop.f32.mrb[0].mxu0
      %v3783 = vadd.f32 0.0, %v3782
      %3784 = vmatprep.mubr.bf16.mxu0 0
      %3785 = vmatmul.mubr.bf16.gmra.mrb[0].mxu0 %v447
      %v3786 = vpop.f32.mrb[0].mxu0
      %v3787 = vadd.f32 0.0, %v3786
      %v3788 = vpop.f32.mrb[0].mxu0
      %v3789 = vadd.f32 0.0, %v3788
      %v3790 = vpop.f32.mrb[0].mxu0
      %v3791 = vadd.f32 0.0, %v3790
      %v3792 = vpop.f32.mrb[0].mxu0
      %v3793 = vadd.f32 0.0, %v3792
      %3794 = vmatprep.mubr.bf16.mxu0 0
      %3795 = vmatmul.mubr.bf16.gmra.mrb[0].mxu0 %v448
      %v3796 = vpop.f32.mrb[0].mxu0
      %v3797 = vadd.f32 0.0, %v3796
      %v3798 = vpop.f32.mrb[0].mxu0
      %v3799 = vadd.f32 0.0, %v3798
      %v3800 = vpop.f32.mrb[0].mxu0
      %v3801 = vadd.f32 0.0, %v3800
      %v3802 = vpop.f32.mrb[0].mxu0
      %v3803 = vadd.f32 0.0, %v3802
      %3804 = vmatprep.mubr.bf16.mxu0 0
      %3805 = vmatmul.mubr.bf16.gmra.mrb[0].mxu0 %v449
      %v3806 = vpop.f32.mrb[0].mxu0
      %v3807 = vadd.f32 0.0, %v3806
      %v3808 = vpop.f32.mrb[0].mxu0
      %v3809 = vadd.f32 0.0, %v3808
      %v3810 = vpop.f32.mrb[0].mxu0
      %v3811 = vadd.f32 0.0, %v3810
      %v3812 = vpop.f32.mrb[0].mxu0
      %v3813 = vadd.f32 0.0, %v3812
      %3814 = vmatprep.mubr.bf16.mxu0 0
      %3815 = vmatmul.mubr.bf16.gmra.mrb[0].mxu0 %v450
      %v3816 = vpop.f32.mrb[0].mxu0
      %v3817 = vadd.f32 0.0, %v3816
      %v3818 = vpop.f32.mrb[0].mxu0
      %v3819 = vadd.f32 0.0, %v3818
      %v3820 = vpop.f32.mrb[0].mxu0
      %v3821 = vadd.f32 0.0, %v3820
      %v3822 = vpop.f32.mrb[0].mxu0
      %v3823 = vadd.f32 0.0, %v3822
      %3824 = vmatprep.mubr.bf16.mxu0 0
      %3825 = vmatmul.mubr.bf16.gmra.mrb[0].mxu0 %v451
      %v3826 = vpop.f32.mrb[0].mxu0
      %v3827 = vadd.f32 0.0, %v3826
      %v3828 = vpop.f32.mrb[0].mxu0
      %v3829 = vadd.f32 0.0, %v3828
      %v3830 = vpop.f32.mrb[0].mxu0
      %v3831 = vadd.f32 0.0, %v3830
      %v3832 = vpop.f32.mrb[0].mxu0
      %v3833 = vadd.f32 0.0, %v3832
      %3834 = vmatprep.mubr.bf16.mxu0 0
      %3835 = vmatmul.mubr.bf16.gmra.mrb[0].mxu0 %v452
      %v3836 = vpop.f32.mrb[0].mxu0
      %v3837 = vadd.f32 0.0, %v3836
      %v3838 = vpop.f32.mrb[0].mxu0
      %v3839 = vadd.f32 0.0, %v3838
      %v3840 = vpop.f32.mrb[0].mxu0
      %v3841 = vadd.f32 0.0, %v3840
      %v3842 = vpop.f32.mrb[0].mxu0
      %v3843 = vadd.f32 0.0, %v3842
      %3844 = vmatprep.mubr.bf16.mxu0 0
      %3845 = vmatmul.mubr.bf16.gmra.mrb[0].mxu0 %v453
      %v3846 = vpop.f32.mrb[0].mxu0
      %v3847 = vadd.f32 0.0, %v3846
      %v3848 = vpop.f32.mrb[0].mxu0
      %v3849 = vadd.f32 0.0, %v3848
      %v3850 = vpop.f32.mrb[0].mxu0
      %v3851 = vadd.f32 0.0, %v3850
      %v3852 = vpop.f32.mrb[0].mxu0
      %v3853 = vadd.f32 0.0, %v3852
      %3854 = vmatprep.mubr.bf16.mxu0 0
      %3855 = vmatmul.mubr.bf16.gmra.mrb[0].mxu0 %v454
      %v3856 = vpop.f32.mrb[0].mxu0
      %v3857 = vadd.f32 0.0, %v3856
      %v3858 = vpop.f32.mrb[0].mxu0
      %v3859 = vadd.f32 0.0, %v3858
      %v3860 = vpop.f32.mrb[0].mxu0
      %v3861 = vadd.f32 0.0, %v3860
      %v3862 = vpop.f32.mrb[0].mxu0
      %v3863 = vadd.f32 0.0, %v3862
      %3864 = vmatprep.mubr.bf16.mxu0 0
      %3865 = vmatmul.mubr.bf16.gmra.mrb[0].mxu0 %v455
      %v3866 = vpop.f32.mrb[0].mxu0
      %v3867 = vadd.f32 0.0, %v3866
      %v3868 = vpop.f32.mrb[0].mxu0
      %v3869 = vadd.f32 0.0, %v3868
      %v3870 = vpop.f32.mrb[0].mxu0
      %v3871 = vadd.f32 0.0, %v3870
      %v3872 = vpop.f32.mrb[0].mxu0
      %v3873 = vadd.f32 0.0, %v3872
      %3874 = vmatprep.mubr.bf16.mxu0 0
      %3875 = vmatmul.mubr.bf16.gmra.mrb[0].mxu0 %v456
      %v3876 = vpop.f32.mrb[0].mxu0
      %v3877 = vadd.f32 0.0, %v3876
      %v3878 = vpop.f32.mrb[0].mxu0
      %v3879 = vadd.f32 0.0, %v3878
      %v3880 = vpop.f32.mrb[0].mxu0
      %v3881 = vadd.f32 0.0, %v3880
      %v3882 = vpop.f32.mrb[0].mxu0
      %v3883 = vadd.f32 0.0, %v3882
      %3884 = vmatprep.mubr.bf16.mxu0 0
      %3885 = vmatmul.mubr.bf16.gmra.mrb[0].mxu0 %v457
      %v3886 = vpop.f32.mrb[0].mxu0
      %v3887 = vadd.f32 0.0, %v3886
      %v3888 = vpop.f32.mrb[0].mxu0
      %v3889 = vadd.f32 0.0, %v3888
      %v3890 = vpop.f32.mrb[0].mxu0
      %v3891 = vadd.f32 0.0, %v3890
      %v3892 = vpop.f32.mrb[0].mxu0
      %v3893 = vadd.f32 0.0, %v3892
      %3894 = vmatprep.mubr.bf16.mxu0 0
      %3895 = vmatmul.mubr.bf16.gmra.mrb[0].mxu0 %v458
      %v3896 = vpop.f32.mrb[0].mxu0
      %v3897 = vadd.f32 0.0, %v3896
      %v3898 = vpop.f32.mrb[0].mxu0
      %v3899 = vadd.f32 0.0, %v3898
      %v3900 = vpop.f32.mrb[0].mxu0
      %v3901 = vadd.f32 0.0, %v3900
      %v3902 = vpop.f32.mrb[0].mxu0
      %v3903 = vadd.f32 0.0, %v3902
      %3904 = vmatprep.mubr.bf16.mxu0 0
      %3905 = vmatmul.mubr.bf16.gmra.mrb[0].mxu0 %v459
      %v3906 = vpop.f32.mrb[0].mxu0
      %v3907 = vadd.f32 0.0, %v3906
      %v3908 = vpop.f32.mrb[0].mxu0
      %v3909 = vadd.f32 0.0, %v3908
      %v3910 = vpop.f32.mrb[0].mxu0
      %v3911 = vadd.f32 0.0, %v3910
      %v3912 = vpop.f32.mrb[0].mxu0
      %v3913 = vadd.f32 0.0, %v3912
      %3914 = vmatprep.mubr.bf16.mxu0 0
      %3915 = vmatmul.mubr.bf16.gmra.mrb[0].mxu0 %v460
      %v3916 = vpop.f32.mrb[0].mxu0
      %v3917 = vadd.f32 0.0, %v3916
      %v3918 = vpop.f32.mrb[0].mxu0
      %v3919 = vadd.f32 0.0, %v3918
      %v3920 = vpop.f32.mrb[0].mxu0
      %v3921 = vadd.f32 0.0, %v3920
      %v3922 = vpop.f32.mrb[0].mxu0
      %v3923 = vadd.f32 0.0, %v3922
      %3924 = vmatprep.mubr.bf16.mxu0 0
      %3925 = vmatmul.mubr.bf16.gmra.mrb[0].mxu0 %v461
      %v3926 = vpop.f32.mrb[0].mxu0
      %v3927 = vadd.f32 0.0, %v3926
      %v3928 = vpop.f32.mrb[0].mxu0
      %v3929 = vadd.f32 0.0, %v3928
      %v3930 = vpop.f32.mrb[0].mxu0
      %v3931 = vadd.f32 0.0, %v3930
      %v3932 = vpop.f32.mrb[0].mxu0
      %v3933 = vadd.f32 0.0, %v3932
      %3934 = vmatprep.mubr.bf16.mxu0 0
      %3935 = vmatmul.mubr.bf16.gmra.mrb[0].mxu0 %v462
      %v3936 = vpop.f32.mrb[0].mxu0
      %v3937 = vadd.f32 0.0, %v3936
      %v3938 = vpop.f32.mrb[0].mxu0
      %v3939 = vadd.f32 0.0, %v3938
      %v3940 = vpop.f32.mrb[0].mxu0
      %v3941 = vadd.f32 0.0, %v3940
      %v3942 = vpop.f32.mrb[0].mxu0
      %v3943 = vadd.f32 0.0, %v3942
      %3944 = vmatprep.mubr.bf16.mxu0 0
      %3945 = vmatmul.mubr.bf16.gmra.mrb[0].mxu0 %v463
      %v3946 = vpop.f32.mrb[0].mxu0
      %v3947 = vadd.f32 0.0, %v3946
      %v3948 = vpop.f32.mrb[0].mxu0
      %v3949 = vadd.f32 0.0, %v3948
      %v3950 = vpop.f32.mrb[0].mxu0
      %v3951 = vadd.f32 0.0, %v3950
      %v3952 = vpop.f32.mrb[0].mxu0
      %v3953 = vadd.f32 0.0, %v3952
      %3954 = vmatprep.mubr.bf16.mxu0 0
      %3955 = vmatmul.mubr.bf16.gmra.mrb[0].mxu0 %v464
      %v3956 = vpop.f32.mrb[0].mxu0
      %v3957 = vadd.f32 0.0, %v3956
      %v3958 = vpop.f32.mrb[0].mxu0
      %v3959 = vadd.f32 0.0, %v3958
      %v3960 = vpop.f32.mrb[0].mxu0
      %v3961 = vadd.f32 0.0, %v3960
      %v3962 = vpop.f32.mrb[0].mxu0
      %v3963 = vadd.f32 0.0, %v3962
      %3964 = vmatprep.mubr.bf16.mxu0 0
      %3965 = vmatmul.mubr.bf16.gmra.mrb[0].mxu0 %v465
      %v3966 = vpop.f32.mrb[0].mxu0
      %v3967 = vadd.f32 0.0, %v3966
      %v3968 = vpop.f32.mrb[0].mxu0
      %v3969 = vadd.f32 0.0, %v3968
      %v3970 = vpop.f32.mrb[0].mxu0
      %v3971 = vadd.f32 0.0, %v3970
      %v3972 = vpop.f32.mrb[0].mxu0
      %v3973 = vadd.f32 0.0, %v3972
      %3974 = vmatprep.mubr.bf16.mxu0 0
      %3975 = vmatmul.mubr.bf16.gmra.mrb[0].mxu0 %v466
      %v3976 = vpop.f32.mrb[0].mxu0
      %v3977 = vadd.f32 0.0, %v3976
      %v3978 = vpop.f32.mrb[0].mxu0
      %v3979 = vadd.f32 0.0, %v3978
      %v3980 = vpop.f32.mrb[0].mxu0
      %v3981 = vadd.f32 0.0, %v3980
      %v3982 = vpop.f32.mrb[0].mxu0
      %v3983 = vadd.f32 0.0, %v3982
      %3984 = vmatprep.mubr.bf16.mxu0 0
      %3985 = vmatmul.mubr.bf16.gmra.mrb[0].mxu0 %v467
      %v3986 = vpop.f32.mrb[0].mxu0
      %v3987 = vadd.f32 0.0, %v3986
      %v3988 = vpop.f32.mrb[0].mxu0
      %v3989 = vadd.f32 0.0, %v3988
      %v3990 = vpop.f32.mrb[0].mxu0
      %v3991 = vadd.f32 0.0, %v3990
      %v3992 = vpop.f32.mrb[0].mxu0
      %v3993 = vadd.f32 0.0, %v3992
      %3994 = vmatprep.mubr.bf16.mxu0 0
      %3995 = vmatmul.mubr.bf16.gmra.mrb[0].mxu0 %v468
      %v3996 = vpop.f32.mrb[0].mxu0
      %v3997 = vadd.f32 0.0, %v3996
      %v3998 = vpop.f32.mrb[0].mxu0
      %v3999 = vadd.f32 0.0, %v3998
      %v4000 = vpop.f32.mrb[0].mxu0
      %v4001 = vadd.f32 0.0, %v4000
      %v4002 = vpop.f32.mrb[0].mxu0
      %v4003 = vadd.f32 0.0, %v4002
      %4004 = vmatprep.mubr.bf16.mxu0 0
      %4005 = vmatmul.mubr.bf16.gmra.mrb[0].mxu0 %v469
      %v4006 = vpop.f32.mrb[0].mxu0
      %v4007 = vadd.f32 0.0, %v4006
      %v4008 = vpop.f32.mrb[0].mxu0
      %v4009 = vadd.f32 0.0, %v4008
      %v4010 = vpop.f32.mrb[0].mxu0
      %v4011 = vadd.f32 0.0, %v4010
      %v4012 = vpop.f32.mrb[0].mxu0
      %v4013 = vadd.f32 0.0, %v4012
      %4014 = vmatprep.mubr.bf16.mxu0 0
      %4015 = vmatmul.mubr.bf16.gmra.mrb[0].mxu0 %v470
      %v4016 = vpop.f32.mrb[0].mxu0
      %v4017 = vadd.f32 0.0, %v4016
      %v4018 = vpop.f32.mrb[0].mxu0
      %v4019 = vadd.f32 0.0, %v4018
      %v4020 = vpop.f32.mrb[0].mxu0
      %v4021 = vadd.f32 0.0, %v4020
      %v4022 = vpop.f32.mrb[0].mxu0
      %v4023 = vadd.f32 0.0, %v4022
      %4024 = vmatprep.mubr.bf16.mxu0 0
      %4025 = vmatmul.mubr.bf16.gmra.mrb[0].mxu0 %v471
      %v4026 = vpop.f32.mrb[0].mxu0
      %v4027 = vadd.f32 0.0, %v4026
      %v4028 = vpop.f32.mrb[0].mxu0
      %v4029 = vadd.f32 0.0, %v4028
      %v4030 = vpop.f32.mrb[0].mxu0
      %v4031 = vadd.f32 0.0, %v4030
      %v4032 = vpop.f32.mrb[0].mxu0
      %v4033 = vadd.f32 0.0, %v4032
      %4034 = vmatprep.mubr.bf16.mxu0 0
      %4035 = vmatmul.mubr.bf16.gmra.mrb[0].mxu0 %v472
      %v4036 = vpop.f32.mrb[0].mxu0
      %v4037 = vadd.f32 0.0, %v4036
      %v4038 = vpop.f32.mrb[0].mxu0
      %v4039 = vadd.f32 0.0, %v4038
      %v4040 = vpop.f32.mrb[0].mxu0
      %v4041 = vadd.f32 0.0, %v4040
      %v4042 = vpop.f32.mrb[0].mxu0
      %v4043 = vadd.f32 0.0, %v4042
      %4044 = vmatprep.mubr.bf16.mxu0 0
      %4045 = vmatmul.mubr.bf16.gmra.mrb[0].mxu0 %v473
      %v4046 = vpop.f32.mrb[0].mxu0
      %v4047 = vadd.f32 0.0, %v4046
      %v4048 = vpop.f32.mrb[0].mxu0
      %v4049 = vadd.f32 0.0, %v4048
      %v4050 = vpop.f32.mrb[0].mxu0
      %v4051 = vadd.f32 0.0, %v4050
      %v4052 = vpop.f32.mrb[0].mxu0
      %v4053 = vadd.f32 0.0, %v4052
      %4054 = vmatprep.mubr.bf16.mxu0 0
      %4055 = vmatmul.mubr.bf16.gmra.mrb[0].mxu0 %v474
      %v4056 = vpop.f32.mrb[0].mxu0
      %v4057 = vadd.f32 0.0, %v4056
      %v4058 = vpop.f32.mrb[0].mxu0
      %v4059 = vadd.f32 0.0, %v4058
      %v4060 = vpop.f32.mrb[0].mxu0
      %v4061 = vadd.f32 0.0, %v4060
      %v4062 = vpop.f32.mrb[0].mxu0
      %v4063 = vadd.f32 0.0, %v4062
      %4064 = vmatprep.mubr.bf16.mxu0 0
      %4065 = vmatmul.mubr.bf16.gmra.mrb[0].mxu0 %v475
      %v4066 = vpop.f32.mrb[0].mxu0
      %v4067 = vadd.f32 0.0, %v4066
      %v4068 = vpop.f32.mrb[0].mxu0
      %v4069 = vadd.f32 0.0, %v4068
      %v4070 = vpop.f32.mrb[0].mxu0
      %v4071 = vadd.f32 0.0, %v4070
      %v4072 = vpop.f32.mrb[0].mxu0
      %v4073 = vadd.f32 0.0, %v4072
      %4074 = vdwg.mxu0
      %v4075 = vrot.slane %v3406, 1
      %v4076 = vrot.slane %v3410, 1
      %v4077 = vrot.slane %v3416, 1
      %v4078 = vrot.slane %v3420, 1
      %v4079 = vrot.slane %v3426, 1
      %v4080 = vrot.slane %v3430, 1
      %v4081 = vrot.slane %v3436, 1
      %v4082 = vrot.slane %v3440, 1
      %v4083 = vrot.slane %v3446, 1
      %v4084 = vrot.slane %v3450, 1
      %v4085 = vrot.slane %v3456, 1
      %v4086 = vrot.slane %v3460, 1
      %v4087 = vrot.slane %v3466, 1
      %v4088 = vrot.slane %v3470, 1
      %v4089 = vrot.slane %v3476, 1
      %v4090 = vrot.slane %v3480, 1
      %v4091 = vrot.slane %v3486, 1
      %v4092 = vrot.slane %v3490, 1
      %v4093 = vrot.slane %v3496, 1
      %v4094 = vrot.slane %v3500, 1
      %v4095 = vrot.slane %v3506, 1
      %v4096 = vrot.slane %v3510, 1
      %v4097 = vrot.slane %v3516, 1
      %v4098 = vrot.slane %v3520, 1
      %v4099 = vrot.slane %v3526, 1
      %v4100 = vrot.slane %v3530, 1
      %v4101 = vrot.slane %v3536, 1
      %v4102 = vrot.slane %v3540, 1
      %v4103 = vrot.slane %v3546, 1
      %v4104 = vrot.slane %v3550, 1
      %v4105 = vrot.slane %v3556, 1
      %v4106 = vrot.slane %v3560, 1
      %v4107 = vrot.slane %v3566, 1
      %v4108 = vrot.slane %v3570, 1
      %v4109 = vrot.slane %v3576, 1
      %v4110 = vrot.slane %v3580, 1
      %v4111 = vrot.slane %v3586, 1
      %v4112 = vrot.slane %v3590, 1
      %v4113 = vrot.slane %v3596, 1
      %v4114 = vrot.slane %v3600, 1
      %v4115 = vrot.slane %v3606, 1
      %v4116 = vrot.slane %v3610, 1
      %v4117 = vrot.slane %v3616, 1
      %v4118 = vrot.slane %v3620, 1
      %v4119 = vrot.slane %v3626, 1
      %v4120 = vrot.slane %v3630, 1
      %v4121 = vrot.slane %v3636, 1
      %v4122 = vrot.slane %v3640, 1
      %v4123 = vrot.slane %v3646, 1
      %v4124 = vrot.slane %v3650, 1
      %v4125 = vrot.slane %v3656, 1
      %v4126 = vrot.slane %v3660, 1
      %v4127 = vrot.slane %v3666, 1
      %v4128 = vrot.slane %v3670, 1
      %v4129 = vrot.slane %v3676, 1
      %v4130 = vrot.slane %v3680, 1
      %v4131 = vrot.slane %v3686, 1
      %v4132 = vrot.slane %v3690, 1
      %v4133 = vrot.slane %v3696, 1
      %v4134 = vrot.slane %v3700, 1
      %v4135 = vrot.slane %v3706, 1
      %v4136 = vrot.slane %v3710, 1
      %v4137 = vrot.slane %v3716, 1
      %v4138 = vrot.slane %v3720, 1
      %v4139 = vsel %vm1005, %v4137, %v4138
      %v4140 = vsel %vm1005, %v4136, %v4137
      %v4141 = vsel %vm1005, %v4135, %v4136
      %v4142 = vsel %vm1005, %v4134, %v4135
      %v4143 = vsel %vm1005, %v4133, %v4134
      %v4144 = vsel %vm1005, %v4132, %v4133
      %v4145 = vsel %vm1005, %v4131, %v4132
      %v4146 = vsel %vm1005, %v4130, %v4131
      %v4147 = vsel %vm1005, %v4129, %v4130
      %v4148 = vsel %vm1005, %v4128, %v4129
      %v4149 = vsel %vm1005, %v4127, %v4128
      %v4150 = vsel %vm1005, %v4126, %v4127
      %v4151 = vsel %vm1005, %v4125, %v4126
      %v4152 = vsel %vm1005, %v4124, %v4125
      %v4153 = vsel %vm1005, %v4123, %v4124
      %v4154 = vsel %vm1005, %v4122, %v4123
      %v4155 = vsel %vm1005, %v4121, %v4122
      %v4156 = vsel %vm1005, %v4120, %v4121
      %v4157 = vsel %vm1005, %v4119, %v4120
      %v4158 = vsel %vm1005, %v4118, %v4119
      %v4159 = vsel %vm1005, %v4117, %v4118
      %v4160 = vsel %vm1005, %v4116, %v4117
      %v4161 = vsel %vm1005, %v4115, %v4116
      %v4162 = vsel %vm1005, %v4114, %v4115
      %v4163 = vsel %vm1005, %v4113, %v4114
      %v4164 = vsel %vm1005, %v4112, %v4113
      %v4165 = vsel %vm1005, %v4111, %v4112
      %v4166 = vsel %vm1005, %v4110, %v4111
      %v4167 = vsel %vm1005, %v4109, %v4110
      %v4168 = vsel %vm1005, %v4108, %v4109
      %v4169 = vsel %vm1005, %v4107, %v4108
      %v4170 = vsel %vm1005, %v4106, %v4107
      %v4171 = vsel %vm1005, %v4105, %v4106
      %v4172 = vsel %vm1005, %v4104, %v4105
      %v4173 = vsel %vm1005, %v4103, %v4104
      %v4174 = vsel %vm1005, %v4102, %v4103
      %v4175 = vsel %vm1005, %v4101, %v4102
      %v4176 = vsel %vm1005, %v4100, %v4101
      %v4177 = vsel %vm1005, %v4099, %v4100
      %v4178 = vsel %vm1005, %v4098, %v4099
      %v4179 = vsel %vm1005, %v4097, %v4098
      %v4180 = vsel %vm1005, %v4096, %v4097
      %v4181 = vsel %vm1005, %v4095, %v4096
      %v4182 = vsel %vm1005, %v4094, %v4095
      %v4183 = vsel %vm1005, %v4093, %v4094
      %v4184 = vsel %vm1005, %v4092, %v4093
      %v4185 = vsel %vm1005, %v4091, %v4092
      %v4186 = vsel %vm1005, %v4090, %v4091
      %v4187 = vsel %vm1005, %v4089, %v4090
      %v4188 = vsel %vm1005, %v4088, %v4089
      %v4189 = vsel %vm1005, %v4087, %v4088
      %v4190 = vsel %vm1005, %v4086, %v4087
      %v4191 = vsel %vm1005, %v4085, %v4086
      %v4192 = vsel %vm1005, %v4084, %v4085
      %v4193 = vsel %vm1005, %v4083, %v4084
      %v4194 = vsel %vm1005, %v4082, %v4083
      %v4195 = vsel %vm1005, %v4081, %v4082
      %v4196 = vsel %vm1005, %v4080, %v4081
      %v4197 = vsel %vm1005, %v4079, %v4080
      %v4198 = vsel %vm1005, %v4078, %v4079
      %v4199 = vsel %vm1005, %v4077, %v4078
      %v4200 = vsel %vm1005, %v4076, %v4077
      %v4201 = vsel %vm1005, %v4075, %v4076
      %v4202 = vsel %vm1005, %v4138, %v4075
      %v4203 = vadd.f32 %v3404, %v4201
      %v4204 = vadd.f32 %v3408, %v4200
      %v4205 = vadd.f32 %v3414, %v4199
      %v4206 = vadd.f32 %v3418, %v4198
      %v4207 = vadd.f32 %v3424, %v4197
      %v4208 = vadd.f32 %v3428, %v4196
      %v4209 = vadd.f32 %v3434, %v4195
      %v4210 = vadd.f32 %v3438, %v4194
      %v4211 = vadd.f32 %v3444, %v4193
      %v4212 = vadd.f32 %v3448, %v4192
      %v4213 = vadd.f32 %v3454, %v4191
      %v4214 = vadd.f32 %v3458, %v4190
      %v4215 = vadd.f32 %v3464, %v4189
      %v4216 = vadd.f32 %v3468, %v4188
      %v4217 = vadd.f32 %v3474, %v4187
      %v4218 = vadd.f32 %v3478, %v4186
      %v4219 = vadd.f32 %v3484, %v4185
      %v4220 = vadd.f32 %v3488, %v4184
      %v4221 = vadd.f32 %v3494, %v4183
      %v4222 = vadd.f32 %v3498, %v4182
      %v4223 = vadd.f32 %v3504, %v4181
      %v4224 = vadd.f32 %v3508, %v4180
      %v4225 = vadd.f32 %v3514, %v4179
      %v4226 = vadd.f32 %v3518, %v4178
      %v4227 = vadd.f32 %v3524, %v4177
      %v4228 = vadd.f32 %v3528, %v4176
      %v4229 = vadd.f32 %v3534, %v4175
      %v4230 = vadd.f32 %v3538, %v4174
      %v4231 = vadd.f32 %v3544, %v4173
      %v4232 = vadd.f32 %v3548, %v4172
      %v4233 = vadd.f32 %v3554, %v4171
      %v4234 = vadd.f32 %v3558, %v4170
      %v4235 = vadd.f32 %v3564, %v4169
      %v4236 = vadd.f32 %v3568, %v4168
      %v4237 = vadd.f32 %v3574, %v4167
      %v4238 = vadd.f32 %v3578, %v4166
      %v4239 = vadd.f32 %v3584, %v4165
      %v4240 = vadd.f32 %v3588, %v4164
      %v4241 = vadd.f32 %v3594, %v4163
      %v4242 = vadd.f32 %v3598, %v4162
      %v4243 = vadd.f32 %v3604, %v4161
      %v4244 = vadd.f32 %v3608, %v4160
      %v4245 = vadd.f32 %v3614, %v4159
      %v4246 = vadd.f32 %v3618, %v4158
      %v4247 = vadd.f32 %v3624, %v4157
      %v4248 = vadd.f32 %v3628, %v4156
      %v4249 = vadd.f32 %v3634, %v4155
      %v4250 = vadd.f32 %v3638, %v4154
      %v4251 = vadd.f32 %v3644, %v4153
      %v4252 = vadd.f32 %v3648, %v4152
      %v4253 = vadd.f32 %v3654, %v4151
      %v4254 = vadd.f32 %v3658, %v4150
      %v4255 = vadd.f32 %v3664, %v4149
      %v4256 = vadd.f32 %v3668, %v4148
      %v4257 = vadd.f32 %v3674, %v4147
      %v4258 = vadd.f32 %v3678, %v4146
      %v4259 = vadd.f32 %v3684, %v4145
      %v4260 = vadd.f32 %v3688, %v4144
      %v4261 = vadd.f32 %v3694, %v4143
      %v4262 = vadd.f32 %v3698, %v4142
      %v4263 = vadd.f32 %v3704, %v4141
      %v4264 = vadd.f32 %v3708, %v4140
      %v4265 = vadd.f32 %v3714, %v4139
      %v4266 = vadd.f32 %v3718, %v4202
      %v4267 = vrot.slane %v3757, 2
      %v4268 = vrot.slane %v3761, 2
      %v4269 = vrot.slane %v3767, 2
      %v4270 = vrot.slane %v3771, 2
      %v4271 = vrot.slane %v3777, 2
      %v4272 = vrot.slane %v3781, 2
      %v4273 = vrot.slane %v3787, 2
      %v4274 = vrot.slane %v3791, 2
      %v4275 = vrot.slane %v3797, 2
      %v4276 = vrot.slane %v3801, 2
      %v4277 = vrot.slane %v3807, 2
      %v4278 = vrot.slane %v3811, 2
      %v4279 = vrot.slane %v3817, 2
      %v4280 = vrot.slane %v3821, 2
      %v4281 = vrot.slane %v3827, 2
      %v4282 = vrot.slane %v3831, 2
      %v4283 = vrot.slane %v3837, 2
      %v4284 = vrot.slane %v3841, 2
      %v4285 = vrot.slane %v3847, 2
      %v4286 = vrot.slane %v3851, 2
      %v4287 = vrot.slane %v3857, 2
      %v4288 = vrot.slane %v3861, 2
      %v4289 = vrot.slane %v3867, 2
      %v4290 = vrot.slane %v3871, 2
      %v4291 = vrot.slane %v3877, 2
      %v4292 = vrot.slane %v3881, 2
      %v4293 = vrot.slane %v3887, 2
      %v4294 = vrot.slane %v3891, 2
      %v4295 = vrot.slane %v3897, 2
      %v4296 = vrot.slane %v3901, 2
      %v4297 = vrot.slane %v3907, 2
      %v4298 = vrot.slane %v3911, 2
      %v4299 = vrot.slane %v3917, 2
      %v4300 = vrot.slane %v3921, 2
      %v4301 = vrot.slane %v3927, 2
      %v4302 = vrot.slane %v3931, 2
      %v4303 = vrot.slane %v3937, 2
      %v4304 = vrot.slane %v3941, 2
      %v4305 = vrot.slane %v3947, 2
      %v4306 = vrot.slane %v3951, 2
      %v4307 = vrot.slane %v3957, 2
      %v4308 = vrot.slane %v3961, 2
      %v4309 = vrot.slane %v3967, 2
      %v4310 = vrot.slane %v3971, 2
      %v4311 = vrot.slane %v3977, 2
      %v4312 = vrot.slane %v3981, 2
      %v4313 = vrot.slane %v3987, 2
      %v4314 = vrot.slane %v3991, 2
      %v4315 = vrot.slane %v3997, 2
      %v4316 = vrot.slane %v4001, 2
      %v4317 = vrot.slane %v4007, 2
      %v4318 = vrot.slane %v4011, 2
      %v4319 = vrot.slane %v4017, 2
      %v4320 = vrot.slane %v4021, 2
      %v4321 = vrot.slane %v4027, 2
      %v4322 = vrot.slane %v4031, 2
      %v4323 = vrot.slane %v4037, 2
      %v4324 = vrot.slane %v4041, 2
      %v4325 = vrot.slane %v4047, 2
      %v4326 = vrot.slane %v4051, 2
      %v4327 = vrot.slane %v4057, 2
      %v4328 = vrot.slane %v4061, 2
      %v4329 = vrot.slane %v4067, 2
      %v4330 = vrot.slane %v4071, 2
      %v4331 = vsel %vm2620, %v4329, %v4330
      %v4332 = vsel %vm2620, %v4328, %v4329
      %v4333 = vsel %vm2620, %v4327, %v4328
      %v4334 = vsel %vm2620, %v4326, %v4327
      %v4335 = vsel %vm2620, %v4325, %v4326
      %v4336 = vsel %vm2620, %v4324, %v4325
      %v4337 = vsel %vm2620, %v4323, %v4324
      %v4338 = vsel %vm2620, %v4322, %v4323
      %v4339 = vsel %vm2620, %v4321, %v4322
      %v4340 = vsel %vm2620, %v4320, %v4321
      %v4341 = vsel %vm2620, %v4319, %v4320
      %v4342 = vsel %vm2620, %v4318, %v4319
      %v4343 = vsel %vm2620, %v4317, %v4318
      %v4344 = vsel %vm2620, %v4316, %v4317
      %v4345 = vsel %vm2620, %v4315, %v4316
      %v4346 = vsel %vm2620, %v4314, %v4315
      %v4347 = vsel %vm2620, %v4313, %v4314
      %v4348 = vsel %vm2620, %v4312, %v4313
      %v4349 = vsel %vm2620, %v4311, %v4312
      %v4350 = vsel %vm2620, %v4310, %v4311
      %v4351 = vsel %vm2620, %v4309, %v4310
      %v4352 = vsel %vm2620, %v4308, %v4309
      %v4353 = vsel %vm2620, %v4307, %v4308
      %v4354 = vsel %vm2620, %v4306, %v4307
      %v4355 = vsel %vm2620, %v4305, %v4306
      %v4356 = vsel %vm2620, %v4304, %v4305
      %v4357 = vsel %vm2620, %v4303, %v4304
      %v4358 = vsel %vm2620, %v4302, %v4303
      %v4359 = vsel %vm2620, %v4301, %v4302
      %v4360 = vsel %vm2620, %v4300, %v4301
      %v4361 = vsel %vm2620, %v4299, %v4300
      %v4362 = vsel %vm2620, %v4298, %v4299
      %v4363 = vsel %vm2620, %v4297, %v4298
      %v4364 = vsel %vm2620, %v4296, %v4297
      %v4365 = vsel %vm2620, %v4295, %v4296
      %v4366 = vsel %vm2620, %v4294, %v4295
      %v4367 = vsel %vm2620, %v4293, %v4294
      %v4368 = vsel %vm2620, %v4292, %v4293
      %v4369 = vsel %vm2620, %v4291, %v4292
      %v4370 = vsel %vm2620, %v4290, %v4291
      %v4371 = vsel %vm2620, %v4289, %v4290
      %v4372 = vsel %vm2620, %v4288, %v4289
      %v4373 = vsel %vm2620, %v4287, %v4288
      %v4374 = vsel %vm2620, %v4286, %v4287
      %v4375 = vsel %vm2620, %v4285, %v4286
      %v4376 = vsel %vm2620, %v4284, %v4285
      %v4377 = vsel %vm2620, %v4283, %v4284
      %v4378 = vsel %vm2620, %v4282, %v4283
      %v4379 = vsel %vm2620, %v4281, %v4282
      %v4380 = vsel %vm2620, %v4280, %v4281
      %v4381 = vsel %vm2620, %v4279, %v4280
      %v4382 = vsel %vm2620, %v4278, %v4279
      %v4383 = vsel %vm2620, %v4277, %v4278
      %v4384 = vsel %vm2620, %v4276, %v4277
      %v4385 = vsel %vm2620, %v4275, %v4276
      %v4386 = vsel %vm2620, %v4274, %v4275
      %v4387 = vsel %vm2620, %v4273, %v4274
      %v4388 = vsel %vm2620, %v4272, %v4273
      %v4389 = vsel %vm2620, %v4271, %v4272
      %v4390 = vsel %vm2620, %v4270, %v4271
      %v4391 = vsel %vm2620, %v4269, %v4270
      %v4392 = vsel %vm2620, %v4268, %v4269
      %v4393 = vsel %vm2620, %v4267, %v4268
      %v4394 = vsel %vm2620, %v4330, %v4267
      %v4395 = vadd.f32 %v4203, %v4393
      %v4396 = vadd.f32 %v4204, %v4392
      %v4397 = vadd.f32 %v4205, %v4391
      %v4398 = vadd.f32 %v4206, %v4390
      %v4399 = vadd.f32 %v4207, %v4389
      %v4400 = vadd.f32 %v4208, %v4388
      %v4401 = vadd.f32 %v4209, %v4387
      %v4402 = vadd.f32 %v4210, %v4386
      %v4403 = vadd.f32 %v4211, %v4385
      %v4404 = vadd.f32 %v4212, %v4384
      %v4405 = vadd.f32 %v4213, %v4383
      %v4406 = vadd.f32 %v4214, %v4382
      %v4407 = vadd.f32 %v4215, %v4381
      %v4408 = vadd.f32 %v4216, %v4380
      %v4409 = vadd.f32 %v4217, %v4379
      %v4410 = vadd.f32 %v4218, %v4378
      %v4411 = vadd.f32 %v4219, %v4377
      %v4412 = vadd.f32 %v4220, %v4376
      %v4413 = vadd.f32 %v4221, %v4375
      %v4414 = vadd.f32 %v4222, %v4374
      %v4415 = vadd.f32 %v4223, %v4373
      %v4416 = vadd.f32 %v4224, %v4372
      %v4417 = vadd.f32 %v4225, %v4371
      %v4418 = vadd.f32 %v4226, %v4370
      %v4419 = vadd.f32 %v4227, %v4369
      %v4420 = vadd.f32 %v4228, %v4368
      %v4421 = vadd.f32 %v4229, %v4367
      %v4422 = vadd.f32 %v4230, %v4366
      %v4423 = vadd.f32 %v4231, %v4365
      %v4424 = vadd.f32 %v4232, %v4364
      %v4425 = vadd.f32 %v4233, %v4363
      %v4426 = vadd.f32 %v4234, %v4362
      %v4427 = vadd.f32 %v4235, %v4361
      %v4428 = vadd.f32 %v4236, %v4360
      %v4429 = vadd.f32 %v4237, %v4359
      %v4430 = vadd.f32 %v4238, %v4358
      %v4431 = vadd.f32 %v4239, %v4357
      %v4432 = vadd.f32 %v4240, %v4356
      %v4433 = vadd.f32 %v4241, %v4355
      %v4434 = vadd.f32 %v4242, %v4354
      %v4435 = vadd.f32 %v4243, %v4353
      %v4436 = vadd.f32 %v4244, %v4352
      %v4437 = vadd.f32 %v4245, %v4351
      %v4438 = vadd.f32 %v4246, %v4350
      %v4439 = vadd.f32 %v4247, %v4349
      %v4440 = vadd.f32 %v4248, %v4348
      %v4441 = vadd.f32 %v4249, %v4347
      %v4442 = vadd.f32 %v4250, %v4346
      %v4443 = vadd.f32 %v4251, %v4345
      %v4444 = vadd.f32 %v4252, %v4344
      %v4445 = vadd.f32 %v4253, %v4343
      %v4446 = vadd.f32 %v4254, %v4342
      %v4447 = vadd.f32 %v4255, %v4341
      %v4448 = vadd.f32 %v4256, %v4340
      %v4449 = vadd.f32 %v4257, %v4339
      %v4450 = vadd.f32 %v4258, %v4338
      %v4451 = vadd.f32 %v4259, %v4337
      %v4452 = vadd.f32 %v4260, %v4336
      %v4453 = vadd.f32 %v4261, %v4335
      %v4454 = vadd.f32 %v4262, %v4334
      %v4455 = vadd.f32 %v4263, %v4333
      %v4456 = vadd.f32 %v4264, %v4332
      %v4457 = vadd.f32 %v4265, %v4331
      %v4458 = vadd.f32 %v4266, %v4394
      %v4459 = vrot.slane %v3759, 3
      %v4460 = vrot.slane %v3763, 3
      %v4461 = vrot.slane %v3769, 3
      %v4462 = vrot.slane %v3773, 3
      %v4463 = vrot.slane %v3779, 3
      %v4464 = vrot.slane %v3783, 3
      %v4465 = vrot.slane %v3789, 3
      %v4466 = vrot.slane %v3793, 3
      %v4467 = vrot.slane %v3799, 3
      %v4468 = vrot.slane %v3803, 3
      %v4469 = vrot.slane %v3809, 3
      %v4470 = vrot.slane %v3813, 3
      %v4471 = vrot.slane %v3819, 3
      %v4472 = vrot.slane %v3823, 3
      %v4473 = vrot.slane %v3829, 3
      %v4474 = vrot.slane %v3833, 3
      %v4475 = vrot.slane %v3839, 3
      %v4476 = vrot.slane %v3843, 3
      %v4477 = vrot.slane %v3849, 3
      %v4478 = vrot.slane %v3853, 3
      %v4479 = vrot.slane %v3859, 3
      %v4480 = vrot.slane %v3863, 3
      %v4481 = vrot.slane %v3869, 3
      %v4482 = vrot.slane %v3873, 3
      %v4483 = vrot.slane %v3879, 3
      %v4484 = vrot.slane %v3883, 3
      %v4485 = vrot.slane %v3889, 3
      %v4486 = vrot.slane %v3893, 3
      %v4487 = vrot.slane %v3899, 3
      %v4488 = vrot.slane %v3903, 3
      %v4489 = vrot.slane %v3909, 3
      %v4490 = vrot.slane %v3913, 3
      %v4491 = vrot.slane %v3919, 3
      %v4492 = vrot.slane %v3923, 3
      %v4493 = vrot.slane %v3929, 3
      %v4494 = vrot.slane %v3933, 3
      %v4495 = vrot.slane %v3939, 3
      %v4496 = vrot.slane %v3943, 3
      %v4497 = vrot.slane %v3949, 3
      %v4498 = vrot.slane %v3953, 3
      %v4499 = vrot.slane %v3959, 3
      %v4500 = vrot.slane %v3963, 3
      %v4501 = vrot.slane %v3969, 3
      %v4502 = vrot.slane %v3973, 3
      %v4503 = vrot.slane %v3979, 3
      %v4504 = vrot.slane %v3983, 3
      %v4505 = vrot.slane %v3989, 3
      %v4506 = vrot.slane %v3993, 3
      %v4507 = vrot.slane %v3999, 3
      %v4508 = vrot.slane %v4003, 3
      %v4509 = vrot.slane %v4009, 3
      %v4510 = vrot.slane %v4013, 3
      %v4511 = vrot.slane %v4019, 3
      %v4512 = vrot.slane %v4023, 3
      %v4513 = vrot.slane %v4029, 3
      %v4514 = vrot.slane %v4033, 3
      %v4515 = vrot.slane %v4039, 3
      %v4516 = vrot.slane %v4043, 3
      %v4517 = vrot.slane %v4049, 3
      %v4518 = vrot.slane %v4053, 3
      %v4519 = vrot.slane %v4059, 3
      %v4520 = vrot.slane %v4063, 3
      %v4521 = vrot.slane %v4069, 3
      %v4522 = vrot.slane %v4073, 3
      %vm4523 = vcmp.lt.s32.totalorder %v298, 5
      %v4524 = vsel %vm4523, %v4521, %v4522
      %v4525 = vsel %vm4523, %v4520, %v4521
      %v4526 = vsel %vm4523, %v4519, %v4520
      %v4527 = vsel %vm4523, %v4518, %v4519
      %v4528 = vsel %vm4523, %v4517, %v4518
      %v4529 = vsel %vm4523, %v4516, %v4517
      %v4530 = vsel %vm4523, %v4515, %v4516
      %v4531 = vsel %vm4523, %v4514, %v4515
      %v4532 = vsel %vm4523, %v4513, %v4514
      %v4533 = vsel %vm4523, %v4512, %v4513
      %v4534 = vsel %vm4523, %v4511, %v4512
      %v4535 = vsel %vm4523, %v4510, %v4511
      %v4536 = vsel %vm4523, %v4509, %v4510
      %v4537 = vsel %vm4523, %v4508, %v4509
      %v4538 = vsel %vm4523, %v4507, %v4508
      %v4539 = vsel %vm4523, %v4506, %v4507
      %v4540 = vsel %vm4523, %v4505, %v4506
      %v4541 = vsel %vm4523, %v4504, %v4505
      %v4542 = vsel %vm4523, %v4503, %v4504
      %v4543 = vsel %vm4523, %v4502, %v4503
      %v4544 = vsel %vm4523, %v4501, %v4502
      %v4545 = vsel %vm4523, %v4500, %v4501
      %v4546 = vsel %vm4523, %v4499, %v4500
      %v4547 = vsel %vm4523, %v4498, %v4499
      %v4548 = vsel %vm4523, %v4497, %v4498
      %v4549 = vsel %vm4523, %v4496, %v4497
      %v4550 = vsel %vm4523, %v4495, %v4496
      %v4551 = vsel %vm4523, %v4494, %v4495
      %v4552 = vsel %vm4523, %v4493, %v4494
      %v4553 = vsel %vm4523, %v4492, %v4493
      %v4554 = vsel %vm4523, %v4491, %v4492
      %v4555 = vsel %vm4523, %v4490, %v4491
      %v4556 = vsel %vm4523, %v4489, %v4490
      %v4557 = vsel %vm4523, %v4488, %v4489
      %v4558 = vsel %vm4523, %v4487, %v4488
      %v4559 = vsel %vm4523, %v4486, %v4487
      %v4560 = vsel %vm4523, %v4485, %v4486
      %v4561 = vsel %vm4523, %v4484, %v4485
      %v4562 = vsel %vm4523, %v4483, %v4484
      %v4563 = vsel %vm4523, %v4482, %v4483
      %v4564 = vsel %vm4523, %v4481, %v4482
      %v4565 = vsel %vm4523, %v4480, %v4481
      %v4566 = vsel %vm4523, %v4479, %v4480
      %v4567 = vsel %vm4523, %v4478, %v4479
      %v4568 = vsel %vm4523, %v4477, %v4478
      %v4569 = vsel %vm4523, %v4476, %v4477
      %v4570 = vsel %vm4523, %v4475, %v4476
      %v4571 = vsel %vm4523, %v4474, %v4475
      %v4572 = vsel %vm4523, %v4473, %v4474
      %v4573 = vsel %vm4523, %v4472, %v4473
      %v4574 = vsel %vm4523, %v4471, %v4472
      %v4575 = vsel %vm4523, %v4470, %v4471
      %v4576 = vsel %vm4523, %v4469, %v4470
      %v4577 = vsel %vm4523, %v4468, %v4469
      %v4578 = vsel %vm4523, %v4467, %v4468
      %v4579 = vsel %vm4523, %v4466, %v4467
      %v4580 = vsel %vm4523, %v4465, %v4466
      %v4581 = vsel %vm4523, %v4464, %v4465
      %v4582 = vsel %vm4523, %v4463, %v4464
      %v4583 = vsel %vm4523, %v4462, %v4463
      %v4584 = vsel %vm4523, %v4461, %v4462
      %v4585 = vsel %vm4523, %v4460, %v4461
      %v4586 = vsel %vm4523, %v4459, %v4460
      %v4587 = vsel %vm4523, %v4522, %v4459
      %v4588 = vadd.f32 %v4395, %v4586
      %v4589 = vadd.f32 %v4396, %v4585
      %v4590 = vadd.f32 %v4397, %v4584
      %v4591 = vadd.f32 %v4398, %v4583
      %v4592 = vadd.f32 %v4399, %v4582
      %v4593 = vadd.f32 %v4400, %v4581
      %v4594 = vadd.f32 %v4401, %v4580
      %v4595 = vadd.f32 %v4402, %v4579
      %v4596 = vadd.f32 %v4403, %v4578
      %v4597 = vadd.f32 %v4404, %v4577
      %v4598 = vadd.f32 %v4405, %v4576
      %v4599 = vadd.f32 %v4406, %v4575
      %v4600 = vadd.f32 %v4407, %v4574
      %v4601 = vadd.f32 %v4408, %v4573
      %v4602 = vadd.f32 %v4409, %v4572
      %v4603 = vadd.f32 %v4410, %v4571
      %v4604 = vadd.f32 %v4411, %v4570
      %v4605 = vadd.f32 %v4412, %v4569
      %v4606 = vadd.f32 %v4413, %v4568
      %v4607 = vadd.f32 %v4414, %v4567
      %v4608 = vadd.f32 %v4415, %v4566
      %v4609 = vadd.f32 %v4416, %v4565
      %v4610 = vadd.f32 %v4417, %v4564
      %v4611 = vadd.f32 %v4418, %v4563
      %v4612 = vadd.f32 %v4419, %v4562
      %v4613 = vadd.f32 %v4420, %v4561
      %v4614 = vadd.f32 %v4421, %v4560
      %v4615 = vadd.f32 %v4422, %v4559
      %v4616 = vadd.f32 %v4423, %v4558
      %v4617 = vadd.f32 %v4424, %v4557
      %v4618 = vadd.f32 %v4425, %v4556
      %v4619 = vadd.f32 %v4426, %v4555
      %v4620 = vadd.f32 %v4427, %v4554
      %v4621 = vadd.f32 %v4428, %v4553
      %v4622 = vadd.f32 %v4429, %v4552
      %v4623 = vadd.f32 %v4430, %v4551
      %v4624 = vadd.f32 %v4431, %v4550
      %v4625 = vadd.f32 %v4432, %v4549
      %v4626 = vadd.f32 %v4433, %v4548
      %v4627 = vadd.f32 %v4434, %v4547
      %v4628 = vadd.f32 %v4435, %v4546
      %v4629 = vadd.f32 %v4436, %v4545
      %v4630 = vadd.f32 %v4437, %v4544
      %v4631 = vadd.f32 %v4438, %v4543
      %v4632 = vadd.f32 %v4439, %v4542
      %v4633 = vadd.f32 %v4440, %v4541
      %v4634 = vadd.f32 %v4441, %v4540
      %v4635 = vadd.f32 %v4442, %v4539
      %v4636 = vadd.f32 %v4443, %v4538
      %v4637 = vadd.f32 %v4444, %v4537
      %v4638 = vadd.f32 %v4445, %v4536
      %v4639 = vadd.f32 %v4446, %v4535
      %v4640 = vadd.f32 %v4447, %v4534
      %v4641 = vadd.f32 %v4448, %v4533
      %v4642 = vadd.f32 %v4449, %v4532
      %v4643 = vadd.f32 %v4450, %v4531
      %v4644 = vadd.f32 %v4451, %v4530
      %v4645 = vadd.f32 %v4452, %v4529
      %v4646 = vadd.f32 %v4453, %v4528
      %v4647 = vadd.f32 %v4454, %v4527
      %v4648 = vadd.f32 %v4455, %v4526
      %v4649 = vadd.f32 %v4456, %v4525
      %v4650 = vadd.f32 %v4457, %v4524
      %v4651 = vadd.f32 %v4458, %v4587
      %v4652 = vrot.slane %v296, 2
      %v4653 = vlaneseq
      %v4654 = vshrl.u32 %v4653, 7
      %v4655 = vsub.s32 0, %v4654
      %v4656 = vrot.slane %v4652, %v4655
      %v4658 = vadd.f32 %v4588, %v4656
      %v4659 = vadd.f32 %v4589, %v4656
      %v4660 = vadd.f32 %v4590, %v4656
      %v4661 = vadd.f32 %v4591, %v4656
      %v4662 = vadd.f32 %v4592, %v4656
      %v4663 = vadd.f32 %v4593, %v4656
      %v4664 = vadd.f32 %v4594, %v4656
      %v4665 = vadd.f32 %v4595, %v4656
      %v4666 = vadd.f32 %v4596, %v4656
      %v4667 = vadd.f32 %v4597, %v4656
      %v4668 = vadd.f32 %v4598, %v4656
      %v4669 = vadd.f32 %v4599, %v4656
      %v4670 = vadd.f32 %v4600, %v4656
      %v4671 = vadd.f32 %v4601, %v4656
      %v4672 = vadd.f32 %v4602, %v4656
      %v4673 = vadd.f32 %v4603, %v4656
      %v4674 = vadd.f32 %v4604, %v4656
      %v4675 = vadd.f32 %v4605, %v4656
      %v4676 = vadd.f32 %v4606, %v4656
      %v4677 = vadd.f32 %v4607, %v4656
      %v4678 = vadd.f32 %v4608, %v4656
      %v4679 = vadd.f32 %v4609, %v4656
      %v4680 = vadd.f32 %v4610, %v4656
      %v4681 = vadd.f32 %v4611, %v4656
      %v4682 = vadd.f32 %v4612, %v4656
      %v4683 = vadd.f32 %v4613, %v4656
      %v4684 = vadd.f32 %v4614, %v4656
      %v4685 = vadd.f32 %v4615, %v4656
      %v4686 = vadd.f32 %v4616, %v4656
      %v4687 = vadd.f32 %v4617, %v4656
      %v4688 = vadd.f32 %v4618, %v4656
      %v4689 = vadd.f32 %v4619, %v4656
      %v4690 = vadd.f32 %v4620, %v4656
      %v4691 = vadd.f32 %v4621, %v4656
      %v4692 = vadd.f32 %v4622, %v4656
      %v4693 = vadd.f32 %v4623, %v4656
      %v4694 = vadd.f32 %v4624, %v4656
      %v4695 = vadd.f32 %v4625, %v4656
      %v4696 = vadd.f32 %v4626, %v4656
      %v4697 = vadd.f32 %v4627, %v4656
      %v4698 = vadd.f32 %v4628, %v4656
      %v4699 = vadd.f32 %v4629, %v4656
      %v4700 = vadd.f32 %v4630, %v4656
      %v4701 = vadd.f32 %v4631, %v4656
      %v4702 = vadd.f32 %v4632, %v4656
      %v4703 = vadd.f32 %v4633, %v4656
      %v4704 = vadd.f32 %v4634, %v4656
      %v4705 = vadd.f32 %v4635, %v4656
      %v4706 = vadd.f32 %v4636, %v4656
      %v4707 = vadd.f32 %v4637, %v4656
      %v4708 = vadd.f32 %v4638, %v4656
      %v4709 = vadd.f32 %v4639, %v4656
      %v4710 = vadd.f32 %v4640, %v4656
      %v4711 = vadd.f32 %v4641, %v4656
      %v4712 = vadd.f32 %v4642, %v4656
      %v4713 = vadd.f32 %v4643, %v4656
      %v4714 = vadd.f32 %v4644, %v4656
      %v4715 = vadd.f32 %v4645, %v4656
      %v4716 = vadd.f32 %v4646, %v4656
      %v4717 = vadd.f32 %v4647, %v4656
      %v4718 = vadd.f32 %v4648, %v4656
      %v4719 = vadd.f32 %v4649, %v4656
      %v4720 = vadd.f32 %v4650, %v4656
      %v4721 = vadd.f32 %v4651, %v4656
      %v4722 = vmax.f32 %v4658, 0.0
      %v4723 = vmax.f32 %v4659, 0.0
      %v4724 = vmax.f32 %v4660, 0.0
      %v4725 = vmax.f32 %v4661, 0.0
      %v4726 = vmax.f32 %v4662, 0.0
      %v4727 = vmax.f32 %v4663, 0.0
      %v4728 = vmax.f32 %v4664, 0.0
      %v4729 = vmax.f32 %v4665, 0.0
      %v4730 = vmax.f32 %v4666, 0.0
      %v4731 = vmax.f32 %v4667, 0.0
      %v4732 = vmax.f32 %v4668, 0.0
      %v4733 = vmax.f32 %v4669, 0.0
      %v4734 = vmax.f32 %v4670, 0.0
      %v4735 = vmax.f32 %v4671, 0.0
      %v4736 = vmax.f32 %v4672, 0.0
      %v4737 = vmax.f32 %v4673, 0.0
      %v4738 = vmax.f32 %v4674, 0.0
      %v4739 = vmax.f32 %v4675, 0.0
      %v4740 = vmax.f32 %v4676, 0.0
      %v4741 = vmax.f32 %v4677, 0.0
      %v4742 = vmax.f32 %v4678, 0.0
      %v4743 = vmax.f32 %v4679, 0.0
      %v4744 = vmax.f32 %v4680, 0.0
      %v4745 = vmax.f32 %v4681, 0.0
      %v4746 = vmax.f32 %v4682, 0.0
      %v4747 = vmax.f32 %v4683, 0.0
      %v4748 = vmax.f32 %v4684, 0.0
      %v4749 = vmax.f32 %v4685, 0.0
      %v4750 = vmax.f32 %v4686, 0.0
      %v4751 = vmax.f32 %v4687, 0.0
      %v4752 = vmax.f32 %v4688, 0.0
      %v4753 = vmax.f32 %v4689, 0.0
      %v4754 = vmax.f32 %v4690, 0.0
      %v4755 = vmax.f32 %v4691, 0.0
      %v4756 = vmax.f32 %v4692, 0.0
      %v4757 = vmax.f32 %v4693, 0.0
      %v4758 = vmax.f32 %v4694, 0.0
      %v4759 = vmax.f32 %v4695, 0.0
      %v4760 = vmax.f32 %v4696, 0.0
      %v4761 = vmax.f32 %v4697, 0.0
      %v4762 = vmax.f32 %v4698, 0.0
      %v4763 = vmax.f32 %v4699, 0.0
      %v4764 = vmax.f32 %v4700, 0.0
      %v4765 = vmax.f32 %v4701, 0.0
      %v4766 = vmax.f32 %v4702, 0.0
      %v4767 = vmax.f32 %v4703, 0.0
      %v4768 = vmax.f32 %v4704, 0.0
      %v4769 = vmax.f32 %v4705, 0.0
      %v4770 = vmax.f32 %v4706, 0.0
      %v4771 = vmax.f32 %v4707, 0.0
      %v4772 = vmax.f32 %v4708, 0.0
      %v4773 = vmax.f32 %v4709, 0.0
      %v4774 = vmax.f32 %v4710, 0.0
      %v4775 = vmax.f32 %v4711, 0.0
      %v4776 = vmax.f32 %v4712, 0.0
      %v4777 = vmax.f32 %v4713, 0.0
      %v4778 = vmax.f32 %v4714, 0.0
      %v4779 = vmax.f32 %v4715, 0.0
      %v4780 = vmax.f32 %v4716, 0.0
      %v4781 = vmax.f32 %v4717, 0.0
      %v4782 = vmax.f32 %v4718, 0.0
      %v4783 = vmax.f32 %v4719, 0.0
      %v4784 = vmax.f32 %v4720, 0.0
      %v4785 = vmax.f32 %v4721, 0.0
      %vm4786 = vcmp.lt.s32.totalorder %v298, 13
      %vm4787 = vcmp.lt.s32.totalorder %v299, 13
      %v4788 = vsel %vm4786, 1, 0
      %v4789 = vsel %vm4787, 1, 0
      %vm4790 = vcmp.eq.s32.totalorder %v4788, 1
      %vm4791 = vcmp.eq.s32.totalorder %v4789, 1
      %v4792 = vsel %vm4790, %v4722, 0.0
      %v4793 = vsel %vm4791, %v4723, 0.0
      %v4794 = vsel %vm4790, %v4724, 0.0
      %v4795 = vsel %vm4791, %v4725, 0.0
      %v4796 = vsel %vm4790, %v4726, 0.0
      %v4797 = vsel %vm4791, %v4727, 0.0
      %v4798 = vsel %vm4790, %v4728, 0.0
      %v4799 = vsel %vm4791, %v4729, 0.0
      %v4800 = vsel %vm4790, %v4730, 0.0
      %v4801 = vsel %vm4791, %v4731, 0.0
      %v4802 = vsel %vm4790, %v4732, 0.0
      %v4803 = vsel %vm4791, %v4733, 0.0
      %v4804 = vsel %vm4790, %v4734, 0.0
      %v4805 = vsel %vm4791, %v4735, 0.0
      %v4806 = vsel %vm4790, %v4736, 0.0
      %v4807 = vsel %vm4791, %v4737, 0.0
      %v4808 = vsel %vm4790, %v4738, 0.0
      %v4809 = vsel %vm4791, %v4739, 0.0
      %v4810 = vsel %vm4790, %v4740, 0.0
      %v4811 = vsel %vm4791, %v4741, 0.0
      %v4812 = vsel %vm4790, %v4742, 0.0
      %v4813 = vsel %vm4791, %v4743, 0.0
      %v4814 = vsel %vm4790, %v4744, 0.0
      %v4815 = vsel %vm4791, %v4745, 0.0
      %v4816 = vsel %vm4790, %v4746, 0.0
      %v4817 = vsel %vm4791, %v4747, 0.0
      %v4818 = vsel %vm4790, %v4748, 0.0
      %v4819 = vsel %vm4791, %v4749, 0.0
      %v4820 = vsel %vm4790, %v4750, 0.0
      %v4821 = vsel %vm4791, %v4751, 0.0
      %v4822 = vsel %vm4790, %v4752, 0.0
      %v4823 = vsel %vm4791, %v4753, 0.0
      %v4824 = vsel %vm4790, %v4754, 0.0
      %v4825 = vsel %vm4791, %v4755, 0.0
      %v4826 = vsel %vm4790, %v4756, 0.0
      %v4827 = vsel %vm4791, %v4757, 0.0
      %v4828 = vsel %vm4790, %v4758, 0.0
      %v4829 = vsel %vm4791, %v4759, 0.0
      %v4830 = vsel %vm4790, %v4760, 0.0
      %v4831 = vsel %vm4791, %v4761, 0.0
      %v4832 = vsel %vm4790, %v4762, 0.0
      %v4833 = vsel %vm4791, %v4763, 0.0
      %v4834 = vsel %vm4790, %v4764, 0.0
      %v4835 = vsel %vm4791, %v4765, 0.0
      %v4836 = vsel %vm4790, %v4766, 0.0
      %v4837 = vsel %vm4791, %v4767, 0.0
      %v4838 = vsel %vm4790, %v4768, 0.0
      %v4839 = vsel %vm4791, %v4769, 0.0
      %v4840 = vsel %vm4790, %v4770, 0.0
      %v4841 = vsel %vm4791, %v4771, 0.0
      %v4842 = vsel %vm4790, %v4772, 0.0
      %v4843 = vsel %vm4791, %v4773, 0.0
      %v4844 = vsel %vm4790, %v4774, 0.0
      %v4845 = vsel %vm4791, %v4775, 0.0
      %v4846 = vsel %vm4790, %v4776, 0.0
      %v4847 = vsel %vm4791, %v4777, 0.0
      %v4848 = vsel %vm4790, %v4778, 0.0
      %v4849 = vsel %vm4791, %v4779, 0.0
      %v4850 = vsel %vm4790, %v4780, 0.0
      %v4851 = vsel %vm4791, %v4781, 0.0
      %v4852 = vsel %vm4790, %v4782, 0.0
      %v4853 = vsel %vm4791, %v4783, 0.0
      %v4854 = vsel %vm4790, %v4784, 0.0
      %v4855 = vsel %vm4791, %v4785, 0.0
      %v4856 = vmax.f32 %v4792, %v4793
      %v4857 = vrot.slane %v4856, 4
      %v4858 = vmax.f32 %v4856, %v4857
      %v4859 = vrot.slane %v4858, 2
      %v4860 = vmax.f32 %v4858, %v4859
      %v4861 = vrot.slane %v4860, 1
      %v4862 = vmax.f32 %v4860, %v4861
      %v4863 = vmax.f32 %v4794, %v4795
      %v4864 = vrot.slane %v4863, 4
      %v4865 = vmax.f32 %v4863, %v4864
      %v4866 = vrot.slane %v4865, 2
      %v4867 = vmax.f32 %v4865, %v4866
      %v4868 = vrot.slane %v4867, 1
      %v4869 = vmax.f32 %v4867, %v4868
      %v4870 = vmax.f32 %v4796, %v4797
      %v4871 = vrot.slane %v4870, 4
      %v4872 = vmax.f32 %v4870, %v4871
      %v4873 = vrot.slane %v4872, 2
      %v4874 = vmax.f32 %v4872, %v4873
      %v4875 = vrot.slane %v4874, 1
      %v4876 = vmax.f32 %v4874, %v4875
      %v4877 = vmax.f32 %v4798, %v4799
      %v4878 = vrot.slane %v4877, 4
      %v4879 = vmax.f32 %v4877, %v4878
      %v4880 = vrot.slane %v4879, 2
      %v4881 = vmax.f32 %v4879, %v4880
      %v4882 = vrot.slane %v4881, 1
      %v4883 = vmax.f32 %v4881, %v4882
      %v4884 = vmax.f32 %v4800, %v4801
      %v4885 = vrot.slane %v4884, 4
      %v4886 = vmax.f32 %v4884, %v4885
      %v4887 = vrot.slane %v4886, 2
      %v4888 = vmax.f32 %v4886, %v4887
      %v4889 = vrot.slane %v4888, 1
      %v4890 = vmax.f32 %v4888, %v4889
      %v4891 = vmax.f32 %v4802, %v4803
      %v4892 = vrot.slane %v4891, 4
      %v4893 = vmax.f32 %v4891, %v4892
      %v4894 = vrot.slane %v4893, 2
      %v4895 = vmax.f32 %v4893, %v4894
      %v4896 = vrot.slane %v4895, 1
      %v4897 = vmax.f32 %v4895, %v4896
      %v4898 = vmax.f32 %v4804, %v4805
      %v4899 = vrot.slane %v4898, 4
      %v4900 = vmax.f32 %v4898, %v4899
      %v4901 = vrot.slane %v4900, 2
      %v4902 = vmax.f32 %v4900, %v4901
      %v4903 = vrot.slane %v4902, 1
      %v4904 = vmax.f32 %v4902, %v4903
      %v4905 = vmax.f32 %v4806, %v4807
      %v4906 = vrot.slane %v4905, 4
      %v4907 = vmax.f32 %v4905, %v4906
      %v4908 = vrot.slane %v4907, 2
      %v4909 = vmax.f32 %v4907, %v4908
      %v4910 = vrot.slane %v4909, 1
      %v4911 = vmax.f32 %v4909, %v4910
      %v4912 = vmax.f32 %v4808, %v4809
      %v4913 = vrot.slane %v4912, 4
      %v4914 = vmax.f32 %v4912, %v4913
      %v4915 = vrot.slane %v4914, 2
      %v4916 = vmax.f32 %v4914, %v4915
      %v4917 = vrot.slane %v4916, 1
      %v4918 = vmax.f32 %v4916, %v4917
      %v4919 = vmax.f32 %v4810, %v4811
      %v4920 = vrot.slane %v4919, 4
      %v4921 = vmax.f32 %v4919, %v4920
      %v4922 = vrot.slane %v4921, 2
      %v4923 = vmax.f32 %v4921, %v4922
      %v4924 = vrot.slane %v4923, 1
      %v4925 = vmax.f32 %v4923, %v4924
      %v4926 = vmax.f32 %v4812, %v4813
      %v4927 = vrot.slane %v4926, 4
      %v4928 = vmax.f32 %v4926, %v4927
      %v4929 = vrot.slane %v4928, 2
      %v4930 = vmax.f32 %v4928, %v4929
      %v4931 = vrot.slane %v4930, 1
      %v4932 = vmax.f32 %v4930, %v4931
      %v4933 = vmax.f32 %v4814, %v4815
      %v4934 = vrot.slane %v4933, 4
      %v4935 = vmax.f32 %v4933, %v4934
      %v4936 = vrot.slane %v4935, 2
      %v4937 = vmax.f32 %v4935, %v4936
      %v4938 = vrot.slane %v4937, 1
      %v4939 = vmax.f32 %v4937, %v4938
      %v4940 = vmax.f32 %v4816, %v4817
      %v4941 = vrot.slane %v4940, 4
      %v4942 = vmax.f32 %v4940, %v4941
      %v4943 = vrot.slane %v4942, 2
      %v4944 = vmax.f32 %v4942, %v4943
      %v4945 = vrot.slane %v4944, 1
      %v4946 = vmax.f32 %v4944, %v4945
      %v4947 = vmax.f32 %v4818, %v4819
      %v4948 = vrot.slane %v4947, 4
      %v4949 = vmax.f32 %v4947, %v4948
      %v4950 = vrot.slane %v4949, 2
      %v4951 = vmax.f32 %v4949, %v4950
      %v4952 = vrot.slane %v4951, 1
      %v4953 = vmax.f32 %v4951, %v4952
      %v4954 = vmax.f32 %v4820, %v4821
      %v4955 = vrot.slane %v4954, 4
      %v4956 = vmax.f32 %v4954, %v4955
      %v4957 = vrot.slane %v4956, 2
      %v4958 = vmax.f32 %v4956, %v4957
      %v4959 = vrot.slane %v4958, 1
      %v4960 = vmax.f32 %v4958, %v4959
      %v4961 = vmax.f32 %v4822, %v4823
      %v4962 = vrot.slane %v4961, 4
      %v4963 = vmax.f32 %v4961, %v4962
      %v4964 = vrot.slane %v4963, 2
      %v4965 = vmax.f32 %v4963, %v4964
      %v4966 = vrot.slane %v4965, 1
      %v4967 = vmax.f32 %v4965, %v4966
      %v4968 = vmax.f32 %v4824, %v4825
      %v4969 = vrot.slane %v4968, 4
      %v4970 = vmax.f32 %v4968, %v4969
      %v4971 = vrot.slane %v4970, 2
      %v4972 = vmax.f32 %v4970, %v4971
      %v4973 = vrot.slane %v4972, 1
      %v4974 = vmax.f32 %v4972, %v4973
      %v4975 = vmax.f32 %v4826, %v4827
      %v4976 = vrot.slane %v4975, 4
      %v4977 = vmax.f32 %v4975, %v4976
      %v4978 = vrot.slane %v4977, 2
      %v4979 = vmax.f32 %v4977, %v4978
      %v4980 = vrot.slane %v4979, 1
      %v4981 = vmax.f32 %v4979, %v4980
      %v4982 = vmax.f32 %v4828, %v4829
      %v4983 = vrot.slane %v4982, 4
      %v4984 = vmax.f32 %v4982, %v4983
      %v4985 = vrot.slane %v4984, 2
      %v4986 = vmax.f32 %v4984, %v4985
      %v4987 = vrot.slane %v4986, 1
      %v4988 = vmax.f32 %v4986, %v4987
      %v4989 = vmax.f32 %v4830, %v4831
      %v4990 = vrot.slane %v4989, 4
      %v4991 = vmax.f32 %v4989, %v4990
      %v4992 = vrot.slane %v4991, 2
      %v4993 = vmax.f32 %v4991, %v4992
      %v4994 = vrot.slane %v4993, 1
      %v4995 = vmax.f32 %v4993, %v4994
      %v4996 = vmax.f32 %v4832, %v4833
      %v4997 = vrot.slane %v4996, 4
      %v4998 = vmax.f32 %v4996, %v4997
      %v4999 = vrot.slane %v4998, 2
      %v5000 = vmax.f32 %v4998, %v4999
      %v5001 = vrot.slane %v5000, 1
      %v5002 = vmax.f32 %v5000, %v5001
      %v5003 = vmax.f32 %v4834, %v4835
      %v5004 = vrot.slane %v5003, 4
      %v5005 = vmax.f32 %v5003, %v5004
      %v5006 = vrot.slane %v5005, 2
      %v5007 = vmax.f32 %v5005, %v5006
      %v5008 = vrot.slane %v5007, 1
      %v5009 = vmax.f32 %v5007, %v5008
      %v5010 = vmax.f32 %v4836, %v4837
      %v5011 = vrot.slane %v5010, 4
      %v5012 = vmax.f32 %v5010, %v5011
      %v5013 = vrot.slane %v5012, 2
      %v5014 = vmax.f32 %v5012, %v5013
      %v5015 = vrot.slane %v5014, 1
      %v5016 = vmax.f32 %v5014, %v5015
      %v5017 = vmax.f32 %v4838, %v4839
      %v5018 = vrot.slane %v5017, 4
      %v5019 = vmax.f32 %v5017, %v5018
      %v5020 = vrot.slane %v5019, 2
      %v5021 = vmax.f32 %v5019, %v5020
      %v5022 = vrot.slane %v5021, 1
      %v5023 = vmax.f32 %v5021, %v5022
      %v5024 = vmax.f32 %v4840, %v4841
      %v5025 = vrot.slane %v5024, 4
      %v5026 = vmax.f32 %v5024, %v5025
      %v5027 = vrot.slane %v5026, 2
      %v5028 = vmax.f32 %v5026, %v5027
      %v5029 = vrot.slane %v5028, 1
      %v5030 = vmax.f32 %v5028, %v5029
      %v5031 = vmax.f32 %v4842, %v4843
      %v5032 = vrot.slane %v5031, 4
      %v5033 = vmax.f32 %v5031, %v5032
      %v5034 = vrot.slane %v5033, 2
      %v5035 = vmax.f32 %v5033, %v5034
      %v5036 = vrot.slane %v5035, 1
      %v5037 = vmax.f32 %v5035, %v5036
      %v5038 = vmax.f32 %v4844, %v4845
      %v5039 = vrot.slane %v5038, 4
      %v5040 = vmax.f32 %v5038, %v5039
      %v5041 = vrot.slane %v5040, 2
      %v5042 = vmax.f32 %v5040, %v5041
      %v5043 = vrot.slane %v5042, 1
      %v5044 = vmax.f32 %v5042, %v5043
      %v5045 = vmax.f32 %v4846, %v4847
      %v5046 = vrot.slane %v5045, 4
      %v5047 = vmax.f32 %v5045, %v5046
      %v5048 = vrot.slane %v5047, 2
      %v5049 = vmax.f32 %v5047, %v5048
      %v5050 = vrot.slane %v5049, 1
      %v5051 = vmax.f32 %v5049, %v5050
      %v5052 = vmax.f32 %v4848, %v4849
      %v5053 = vrot.slane %v5052, 4
      %v5054 = vmax.f32 %v5052, %v5053
      %v5055 = vrot.slane %v5054, 2
      %v5056 = vmax.f32 %v5054, %v5055
      %v5057 = vrot.slane %v5056, 1
      %v5058 = vmax.f32 %v5056, %v5057
      %v5059 = vmax.f32 %v4850, %v4851
      %v5060 = vrot.slane %v5059, 4
      %v5061 = vmax.f32 %v5059, %v5060
      %v5062 = vrot.slane %v5061, 2
      %v5063 = vmax.f32 %v5061, %v5062
      %v5064 = vrot.slane %v5063, 1
      %v5065 = vmax.f32 %v5063, %v5064
      %v5066 = vmax.f32 %v4852, %v4853
      %v5067 = vrot.slane %v5066, 4
      %v5068 = vmax.f32 %v5066, %v5067
      %v5069 = vrot.slane %v5068, 2
      %v5070 = vmax.f32 %v5068, %v5069
      %v5071 = vrot.slane %v5070, 1
      %v5072 = vmax.f32 %v5070, %v5071
      %v5073 = vmax.f32 %v4854, %v4855
      %v5074 = vrot.slane %v5073, 4
      %v5075 = vmax.f32 %v5073, %v5074
      %v5076 = vrot.slane %v5075, 2
      %v5077 = vmax.f32 %v5075, %v5076
      %v5078 = vrot.slane %v5077, 1
      %v5079 = vmax.f32 %v5077, %v5078
      %vm5112 = vcmask 1041409
      %v5113 = vsel %vm5112, %v1351, %v1344
      %vm5114 = vcmask 1042434
      %v5115 = vsel %vm5114, %v1358, %v5113
      %vm5116 = vcmask 1043459
      %v5117 = vsel %vm5116, %v1365, %v5115
      %vm5118 = vcmask 1044484
      %v5119 = vsel %vm5118, %v1372, %v5117
      %vm5120 = vcmask 1045509
      %v5121 = vsel %vm5120, %v1379, %v5119
      %vm5122 = vcmask 1046534
      %v5123 = vsel %vm5122, %v1386, %v5121
      %vm5124 = vcmask 1047559
      %v5125 = vsel %vm5124, %v1393, %v5123
      %v5126 = vsel %vm5112, %v1407, %v1400
      %v5127 = vsel %vm5114, %v1414, %v5126
      %v5128 = vsel %vm5116, %v1421, %v5127
      %v5129 = vsel %vm5118, %v1428, %v5128
      %v5130 = vsel %vm5120, %v1435, %v5129
      %v5131 = vsel %vm5122, %v1442, %v5130
      %v5132 = vsel %vm5124, %v1449, %v5131
      %v5133 = vsel %vm5112, %v1463, %v1456
      %v5134 = vsel %vm5114, %v1470, %v5133
      %v5135 = vsel %vm5116, %v1477, %v5134
      %v5136 = vsel %vm5118, %v1484, %v5135
      %v5137 = vsel %vm5120, %v1491, %v5136
      %v5138 = vsel %vm5122, %v1498, %v5137
      %v5139 = vsel %vm5124, %v1505, %v5138
      %v5140 = vsel %vm5112, %v1519, %v1512
      %v5141 = vsel %vm5114, %v1526, %v5140
      %v5142 = vsel %vm5116, %v1533, %v5141
      %v5143 = vsel %vm5118, %v1540, %v5142
      %v5144 = vsel %vm5120, %v1547, %v5143
      %v5145 = vsel %vm5122, %v1554, %v5144
      %v5146 = vsel %vm5124, %v1561, %v5145
      %v5183 = vsel %vm5112, %v2966, %v2959
      %v5184 = vsel %vm5114, %v2973, %v5183
      %v5185 = vsel %vm5116, %v2980, %v5184
      %v5186 = vsel %vm5118, %v2987, %v5185
      %v5187 = vsel %vm5120, %v2994, %v5186
      %v5188 = vsel %vm5122, %v3001, %v5187
      %v5189 = vsel %vm5124, %v3008, %v5188
      %v5190 = vsel %vm5112, %v3022, %v3015
      %v5191 = vsel %vm5114, %v3029, %v5190
      %v5192 = vsel %vm5116, %v3036, %v5191
      %v5193 = vsel %vm5118, %v3043, %v5192
      %v5194 = vsel %vm5120, %v3050, %v5193
      %v5195 = vsel %vm5122, %v3057, %v5194
      %v5196 = vsel %vm5124, %v3064, %v5195
      %v5197 = vsel %vm5112, %v3078, %v3071
      %v5198 = vsel %vm5114, %v3085, %v5197
      %v5199 = vsel %vm5116, %v3092, %v5198
      %v5200 = vsel %vm5118, %v3099, %v5199
      %v5201 = vsel %vm5120, %v3106, %v5200
      %v5202 = vsel %vm5122, %v3113, %v5201
      %v5203 = vsel %vm5124, %v3120, %v5202
      %v5204 = vsel %vm5112, %v3134, %v3127
      %v5205 = vsel %vm5114, %v3141, %v5204
      %v5206 = vsel %vm5116, %v3148, %v5205
      %v5207 = vsel %vm5118, %v3155, %v5206
      %v5208 = vsel %vm5120, %v3162, %v5207
      %v5209 = vsel %vm5122, %v3169, %v5208
      %v5210 = vsel %vm5124, %v3176, %v5209
      %v5247 = vsel %vm5112, %v4869, %v4862
      %v5248 = vsel %vm5114, %v4876, %v5247
      %v5249 = vsel %vm5116, %v4883, %v5248
      %v5250 = vsel %vm5118, %v4890, %v5249
      %v5251 = vsel %vm5120, %v4897, %v5250
      %v5252 = vsel %vm5122, %v4904, %v5251
      %v5253 = vsel %vm5124, %v4911, %v5252
      %v5254 = vsel %vm5112, %v4925, %v4918
      %v5255 = vsel %vm5114, %v4932, %v5254
      %v5256 = vsel %vm5116, %v4939, %v5255
      %v5257 = vsel %vm5118, %v4946, %v5256
      %v5258 = vsel %vm5120, %v4953, %v5257
      %v5259 = vsel %vm5122, %v4960, %v5258
      %v5260 = vsel %vm5124, %v4967, %v5259
      %v5261 = vsel %vm5112, %v4981, %v4974
      %v5262 = vsel %vm5114, %v4988, %v5261
      %v5263 = vsel %vm5116, %v4995, %v5262
      %v5264 = vsel %vm5118, %v5002, %v5263
      %v5265 = vsel %vm5120, %v5009, %v5264
      %v5266 = vsel %vm5122, %v5016, %v5265
      %v5267 = vsel %vm5124, %v5023, %v5266
      %v5268 = vsel %vm5112, %v5037, %v5030
      %v5269 = vsel %vm5114, %v5044, %v5268
      %v5270 = vsel %vm5116, %v5051, %v5269
      %v5271 = vsel %vm5118, %v5058, %v5270
      %v5272 = vsel %vm5120, %v5065, %v5271
      %v5273 = vsel %vm5122, %v5072, %v5272
      %v5274 = vsel %vm5124, %v5079, %v5273
      %v5279 = vpack.c.bf16 %v5132, %v5125
      %v5280 = vpack.c.bf16 %v5196, %v5189
      %v5281 = vpack.c.bf16 %v5260, %v5253
      %v5282 = vpack.c.bf16 %v5146, %v5139
      %v5283 = vpack.c.bf16 %v5210, %v5203
      %v5284 = vpack.c.bf16 %v5274, %v5267
      %v5285 = vld [vmem:[%s3] sm:$0xf]
      %v5286 = vld [vmem:[%s3 + $0x4] sm:$0xf]
      %v5287 = vld [vmem:[%s3 + $0x8] sm:$0xf]
      %v5288 = vld [vmem:[%s3 + $0xc] sm:$0xf]
      %v5289 = vld [vmem:[%s3 + $0x10] sm:$0xf]
      %v5290 = vld [vmem:[%s3 + $0x14] sm:$0xf]
      %v5291 = vld [vmem:[%s3 + $0x18] sm:$0xf]
      %v5292 = vld [vmem:[%s3 + $0x1c] sm:$0xf]
      %v5293 = vld [vmem:[%s3 + $0x20] sm:$0xf]
      %v5294 = vld [vmem:[%s3 + $0x24] sm:$0xf]
      %v5295 = vld [vmem:[%s3 + $0x28] sm:$0xf]
      %v5296 = vld [vmem:[%s3 + $0x2c] sm:$0xf]
      %v5297 = vld [vmem:[%s3 + $0x30] sm:$0xf]
      %v5298 = vld [vmem:[%s3 + $0x34] sm:$0xf]
      %v5299 = vld [vmem:[%s3 + $0x38] sm:$0xf]
      %v5300 = vld [vmem:[%s3 + $0x3c] sm:$0xf]
      %v5301 = vld [vmem:[%s3 + $0x40] sm:$0xf]
      %v5302 = vld [vmem:[%s3 + $0x44] sm:$0xf]
      %v5303 = vld [vmem:[%s3 + $0x48] sm:$0xf]
      %v5304 = vld [vmem:[%s3 + $0x4c] sm:$0xf]
      %v5305 = vld [vmem:[%s3 + $0x50] sm:$0xf]
      %v5306 = vld [vmem:[%s3 + $0x54] sm:$0xf]
      %v5307 = vld [vmem:[%s3 + $0x58] sm:$0xf]
      %v5308 = vld [vmem:[%s3 + $0x5c] sm:$0xf]
      %v5309 = vld [vmem:[%s3 + $0x60] sm:$0xf]
      %v5310 = vld [vmem:[%s3 + $0x64] sm:$0xf]
      %v5311 = vld [vmem:[%s3 + $0x68] sm:$0xf]
      %v5312 = vld [vmem:[%s3 + $0x6c] sm:$0xf]
      %v5313 = vld [vmem:[%s3 + $0x70] sm:$0xf]
      %v5314 = vld [vmem:[%s3 + $0x74] sm:$0xf]
      %v5315 = vld [vmem:[%s3 + $0x78] sm:$0xf]
      %v5316 = vld [vmem:[%s3 + $0x7c] sm:$0xf]
      %v5317 = vld [vmem:[%s3 + $0x80] sm:$0xf]
      %v5318 = vld [vmem:[%s3 + $0x84] sm:$0xf]
      %v5319 = vld [vmem:[%s3 + $0x88] sm:$0xf]
      %v5320 = vld [vmem:[%s3 + $0x8c] sm:$0xf]
      %v5321 = vld [vmem:[%s3 + $0x90] sm:$0xf]
      %v5322 = vld [vmem:[%s3 + $0x94] sm:$0xf]
      %v5323 = vld [vmem:[%s3 + $0x98] sm:$0xf]
      %v5324 = vld [vmem:[%s3 + $0x9c] sm:$0xf]
      %v5325 = vld [vmem:[%s3 + $0xa0] sm:$0xf]
      %v5326 = vld [vmem:[%s3 + $0xa4] sm:$0xf]
      %v5327 = vld [vmem:[%s3 + $0xa8] sm:$0xf]
      %v5328 = vld [vmem:[%s3 + $0xac] sm:$0xf]
      %v5329 = vld [vmem:[%s3 + $0xb0] sm:$0xf]
      %v5330 = vld [vmem:[%s3 + $0xb4] sm:$0xf]
      %v5331 = vld [vmem:[%s3 + $0xb8] sm:$0xf]
      %v5332 = vld [vmem:[%s3 + $0xbc] sm:$0xf]
      %v5333 = vld [vmem:[%s4] sm:$0x1]
      %v5335 = vlaneseq
      %v5336 = vshrl.u32 %v5335, 7
      %v5337 = vsub.s32 0, %v5336
      %v5338 = vrot.slane %v5333, %v5337
      %v5388 = vunpack.c.l.b16 %v5285
      %v5389 = vunpack.c.l.b16 %v5286
      %v5390 = vunpack.c.l.b16 %v5287
      %v5391 = vunpack.c.l.b16 %v5288
      %v5392 = vunpack.c.l.b16 %v5289
      %v5393 = vunpack.c.l.b16 %v5290
      %v5394 = vunpack.c.l.b16 %v5291
      %v5395 = vunpack.c.l.b16 %v5292
      %v5396 = vunpack.c.l.b16 %v5293
      %v5397 = vunpack.c.l.b16 %v5294
      %v5398 = vunpack.c.l.b16 %v5295
      %v5399 = vunpack.c.l.b16 %v5296
      %v5400 = vunpack.c.l.b16 %v5297
      %v5401 = vunpack.c.l.b16 %v5298
      %v5402 = vunpack.c.l.b16 %v5299
      %v5403 = vunpack.c.l.b16 %v5300
      %v5404 = vunpack.c.l.b16 %v5301
      %v5405 = vunpack.c.l.b16 %v5302
      %v5406 = vunpack.c.l.b16 %v5303
      %v5407 = vunpack.c.l.b16 %v5304
      %v5408 = vunpack.c.l.b16 %v5305
      %v5409 = vunpack.c.l.b16 %v5306
      %v5410 = vunpack.c.l.b16 %v5307
      %v5411 = vunpack.c.l.b16 %v5308
      %v5412 = vunpack.c.l.b16 %v5309
      %v5413 = vunpack.c.l.b16 %v5310
      %v5414 = vunpack.c.l.b16 %v5311
      %v5415 = vunpack.c.l.b16 %v5312
      %v5416 = vunpack.c.l.b16 %v5313
      %v5417 = vunpack.c.l.b16 %v5314
      %v5418 = vunpack.c.l.b16 %v5315
      %v5419 = vunpack.c.l.b16 %v5316
      %v5420 = vunpack.c.l.b16 %v5317
      %v5421 = vunpack.c.l.b16 %v5318
      %v5422 = vunpack.c.l.b16 %v5319
      %v5423 = vunpack.c.l.b16 %v5320
      %v5424 = vunpack.c.l.b16 %v5321
      %v5425 = vunpack.c.l.b16 %v5322
      %v5426 = vunpack.c.l.b16 %v5323
      %v5427 = vunpack.c.l.b16 %v5324
      %v5428 = vunpack.c.l.b16 %v5325
      %v5429 = vunpack.c.l.b16 %v5326
      %v5430 = vunpack.c.l.b16 %v5327
      %v5431 = vunpack.c.l.b16 %v5328
      %v5432 = vunpack.c.l.b16 %v5329
      %v5433 = vunpack.c.l.b16 %v5330
      %v5434 = vunpack.c.l.b16 %v5331
      %v5435 = vunpack.c.l.b16 %v5332
      %v5436 = vpack.c.b16 %v5389, %v5388
      %v5437 = vpack.c.b16 %v5391, %v5390
      %v5438 = vpack.c.b16 %v5393, %v5392
      %v5439 = vpack.c.b16 %v5395, %v5394
      %v5440 = vpack.c.b16 %v5397, %v5396
      %v5441 = vpack.c.b16 %v5399, %v5398
      %v5442 = vpack.c.b16 %v5401, %v5400
      %v5443 = vpack.c.b16 %v5403, %v5402
      %v5444 = vpack.c.b16 %v5405, %v5404
      %v5445 = vpack.c.b16 %v5407, %v5406
      %v5446 = vpack.c.b16 %v5409, %v5408
      %v5447 = vpack.c.b16 %v5411, %v5410
      %v5448 = vpack.c.b16 %v5413, %v5412
      %v5449 = vpack.c.b16 %v5415, %v5414
      %v5450 = vpack.c.b16 %v5417, %v5416
      %v5451 = vpack.c.b16 %v5419, %v5418
      %v5452 = vpack.c.b16 %v5421, %v5420
      %v5453 = vpack.c.b16 %v5423, %v5422
      %v5454 = vpack.c.b16 %v5425, %v5424
      %v5455 = vpack.c.b16 %v5427, %v5426
      %v5456 = vpack.c.b16 %v5429, %v5428
      %v5457 = vpack.c.b16 %v5431, %v5430
      %v5458 = vpack.c.b16 %v5433, %v5432
      %v5459 = vpack.c.b16 %v5435, %v5434
      %5484 = vmatprep.subr.bf16.mxu0 0
      %5485 = vmatpush1.bf16.msra.mxu0 %v5436
      %5486 = vmatprep.subr.bf16.mxu0 0
      %5487 = vmatpush1.bf16.msra.mxu0 %v5437
      %5488 = vmatprep.subr.bf16.mxu0 0
      %5489 = vmatpush1.bf16.msra.mxu0 %v5438
      %5490 = vmatprep.subr.bf16.mxu0 0
      %5491 = vmatpush1.bf16.msra.mxu0 %v5439
      %5492 = vmatprep.subr.bf16.mxu0 0
      %5493 = vmatpush1.bf16.msra.mxu0 %v5440
      %5494 = vmatprep.subr.bf16.mxu0 0
      %5495 = vmatpush1.bf16.msra.mxu0 %v5441
      %5496 = vmatprep.subr.bf16.mxu0 0
      %5497 = vmatpush1.bf16.msra.mxu0 %v5442
      %5498 = vmatprep.subr.bf16.mxu0 0
      %5499 = vmatpush1.bf16.msra.mxu0 %v5443
      %5500 = vmatprep.subr.bf16.mxu0 0
      %5501 = vmatpush1.bf16.msra.mxu0 %v5444
      %5502 = vmatprep.subr.bf16.mxu0 0
      %5503 = vmatpush1.bf16.msra.mxu0 %v5445
      %5504 = vmatprep.subr.bf16.mxu0 0
      %5505 = vmatpush1.bf16.msra.mxu0 %v5446
      %5506 = vmatprep.subr.bf16.mxu0 0
      %5507 = vmatpush1.bf16.msra.mxu0 %v5447
      %5508 = vmatprep.subr.bf16.mxu0 0
      %5509 = vmatpush1.bf16.msra.mxu0 %v5448
      %5510 = vmatprep.subr.bf16.mxu0 0
      %5511 = vmatpush1.bf16.msra.mxu0 %v5449
      %5512 = vmatprep.subr.bf16.mxu0 0
      %5513 = vmatpush1.bf16.msra.mxu0 %v5450
      %5514 = vmatprep.subr.bf16.mxu0 0
      %5515 = vmatpush1.bf16.msra.mxu0 %v5451
      %5516 = vmatprep.mubr.bf16.mxu0 %v5280
      %5517 = vmatmul.mubr.bf16.gmra.mrb[0].mxu0 %v5279
      %v5518 = vpop.f32.mrb[0].mxu0
      %v5519 = vadd.f32 %v5338, %v5518
      %v5520 = vpop.f32.mrb[0].mxu0
      %v5521 = vpop.f32.mrb[0].mxu0
      %v5522 = vadd.f32 %v5338, %v5521
      %v5523 = vpop.f32.mrb[0].mxu0
      %5524 = vmatprep.mubr.bf16.mxu0 %v5283
      %5525 = vmatmul.mubr.bf16.gmra.mrb[0].mxu0 %v5282
      %v5526 = vpop.f32.mrb[0].mxu0
      %v5527 = vadd.f32 %v5338, %v5526
      %v5528 = vpop.f32.mrb[0].mxu0
      %v5529 = vpop.f32.mrb[0].mxu0
      %v5530 = vadd.f32 %v5338, %v5529
      %v5531 = vpop.f32.mrb[0].mxu0
      %5532 = vdwg.mxu0
      %5533 = vmatprep.subr.bf16.mxu0 0
      %5534 = vmatpush1.bf16.msra.mxu0 %v5452
      %5535 = vmatprep.subr.bf16.mxu0 0
      %5536 = vmatpush1.bf16.msra.mxu0 %v5453
      %5537 = vmatprep.subr.bf16.mxu0 0
      %5538 = vmatpush1.bf16.msra.mxu0 %v5454
      %5539 = vmatprep.subr.bf16.mxu0 0
      %5540 = vmatpush1.bf16.msra.mxu0 %v5455
      %5541 = vmatprep.subr.bf16.mxu0 0
      %5542 = vmatpush1.bf16.msra.mxu0 %v5456
      %5543 = vmatprep.subr.bf16.mxu0 0
      %5544 = vmatpush1.bf16.msra.mxu0 %v5457
      %5545 = vmatprep.subr.bf16.mxu0 0
      %5546 = vmatpush1.bf16.msra.mxu0 %v5458
      %5547 = vmatprep.subr.bf16.mxu0 0
      %5548 = vmatpush1.bf16.msra.mxu0 %v5459
      %5549 = vmatprep.subr.bf16.mxu0 0
      %5550 = vmatpush1.bf16.msra.mxu0 0
      %5551 = vmatprep.subr.bf16.mxu0 0
      %5552 = vmatpush1.bf16.msra.mxu0 0
      %5553 = vmatprep.subr.bf16.mxu0 0
      %5554 = vmatpush1.bf16.msra.mxu0 0
      %5555 = vmatprep.subr.bf16.mxu0 0
      %5556 = vmatpush1.bf16.msra.mxu0 0
      %5557 = vmatprep.subr.bf16.mxu0 0
      %5558 = vmatpush1.bf16.msra.mxu0 0
      %5559 = vmatprep.subr.bf16.mxu0 0
      %5560 = vmatpush1.bf16.msra.mxu0 0
      %5561 = vmatprep.subr.bf16.mxu0 0
      %5562 = vmatpush1.bf16.msra.mxu0 0
      %5563 = vmatprep.subr.bf16.mxu0 0
      %5564 = vmatpush1.bf16.msra.mxu0 0
      %5565 = vmatprep.mubr.bf16.mxu0 0
      %5566 = vmatmul.mubr.bf16.gmra.mrb[0].mxu0 %v5281
      %v5567 = vpop.f32.mrb[0].mxu0
      %v5568 = vadd.f32 %v5519, %v5567
      %v5569 = vpop.f32.mrb[0].mxu0
      %v5570 = vpop.f32.mrb[0].mxu0
      %v5571 = vadd.f32 %v5522, %v5570
      %v5572 = vpop.f32.mrb[0].mxu0
      %5573 = vmatprep.mubr.bf16.mxu0 0
      %5574 = vmatmul.mubr.bf16.gmra.mrb[0].mxu0 %v5284
      %v5575 = vpop.f32.mrb[0].mxu0
      %v5576 = vadd.f32 %v5527, %v5575
      %v5577 = vpop.f32.mrb[0].mxu0
      %v5578 = vpop.f32.mrb[0].mxu0
      %v5579 = vadd.f32 %v5530, %v5578
      %v5580 = vpop.f32.mrb[0].mxu0
      %5581 = vdwg.mxu0
      %5582 = vst [vmem:[%s229] sm:$0xff] %v5568
      %5583 = vst [vmem:[%s229 + $0x8] sm:$0xff] %v5571
      %5584 = vst [vmem:[%s229 + $0x10] sm:$0xff] %v5576
      %5585 = vst [vmem:[%s229 + $0x18] sm:$0xff] %v5579
      %s5586 = smul.u32 4, %s16
      %p5587 = scmp.lt.s32.totalorder %s5586, 15
      %s5588 = scalar_select %p5587, %s5586, 15
      %s5589 = smul.addr %s5588, 8
      %s5590 = scalar_lea.vmem %s5, %s5589
      // Predicated region
      $region41: #{textcnn_forward.1} parent=39 // pred_check
        %p5591 = pneg %p144
      $region42: #{textcnn_forward.1} parent=39 // pred_check_branch
        %5593 = sbr.rel (%p5591) target = $region44
      $region43: #{textcnn_forward.1} parent=39 // pred_region
        %s5594 = smul.u32 4, %s16
      $region44: #{textcnn_forward.1} parent=39 // pred_fallthru
        _
    $region40: #{textcnn_forward.1} parent=5 // pred_fallthru
      _
    %p5595 = scmp.le.s32.totalorder 2, %s11
    // Predicated region
    $region45: #{textcnn_forward.1} parent=5 // pred_check
      %p5596 = pneg %p5595
    $region46: #{textcnn_forward.1} parent=5 // pred_check_branch
      %5598 = sbr.rel (%p5596) target = $region48
    $region47: #{textcnn_forward.1} parent=5 // pred_region
      %s5599 = ssub.s32 %s11, 2
      // Predicated region
      $region49: #{textcnn_forward.1} parent=47 // pred_check
        %p5600 = pneg %p150
      $region50: #{textcnn_forward.1} parent=47 // pred_check_branch
        %5602 = sbr.rel (%p5600) target = $region52
      $region51: #{textcnn_forward.1} parent=47 // pred_region
        %s5603 = smul.u32 4, %s17
        %p5604 = scmp.lt.s32.totalorder %s5603, 15
        %s5605 = scalar_select %p5604, %s5603, 15
        %s5606 = smul.addr %s5605, 8
        %s5607 = scalar_lea.vmem %s5, %s5606
      $region52: #{textcnn_forward.1} parent=47 // pred_fallthru
        _
    $region48: #{textcnn_forward.1} parent=5 // pred_fallthru
      _
  $region6: #{textcnn_forward.1} parent=0 // loop_footer
    %s15 = sadd.s32 1, %s11
  $region7: #{textcnn_forward.1} parent=0 // loop_footer_branch
    %10 = sbr.rel target = $region3
  $region8: #{textcnn_forward.1} parent=0 // loop_exit
    _

</llo_original>
